<compile_context>
chip_gen: v7x
topology: tpu7x:2x2x1
jax: 0.10.0
libtpu: 0.0.40
codegen_flags: <defaults>
</compile_context>

<pallas_src>
import numpy as np
import jax
import jax.numpy as jnp
from jax.experimental import pallas as pl
from jax.experimental.pallas import tpu as pltpu

DEPTH = [4, 8]
IMAGE_SIZE = 16          # original module uses 224; kept small per instructions
NUM_CLASSES = 10         # TODO(synk): original module has num_classes=0 (degenerate Linear(512, 0)); using 10.
OUT_LANES = 128          # fc2 output padded to a lane-dense 128-wide slab
KSIZE = 5
PAD = 2
POOL_OFFSETS = ((0, 0), (0, 1), (1, 0), (1, 1))


# ----------------------------------------------------------------------------
# Static weight preparation (host-side, once at init)
# ----------------------------------------------------------------------------
def _conv_pool_dense_weight(w_oihw, H, W, input_chw_order):
    """Unroll a 5x5/pad=2 conv into a dense matmul.

    Output columns are ordered (pool_quadrant, pooled_h, pooled_w, cout) so that a
    2x2 max-pool becomes an elementwise max over four contiguous, 128-aligned
    column blocks.  Rows follow the caller's flatten order of the input
    ((c,h,w) for the NCHW network input, (h,w,c) for internal activations).
    Zero-padding of the conv is encoded by simply omitting out-of-range taps.
    """
    Cout, Cin, KH, KW = w_oihw.shape
    Ho, Wo = H // 2, W // 2
    D = np.zeros((Cin * H * W, 4 * Ho * Wo * Cout), np.float32)
    for q, (di, dj) in enumerate(POOL_OFFSETS):
        for i in range(Ho):
            for j in range(Wo):
                ho, wo = 2 * i + di, 2 * j + dj
                col = ((q * Ho + i) * Wo + j) * Cout
                for kh in range(KH):
                    hi = ho + kh - PAD
                    if not 0 <= hi < H:
                        continue
                    for kw in range(KW):
                        wi = wo + kw - PAD
                        if not 0 <= wi < W:
                            continue
                        for ci in range(Cin):
                            if input_chw_order:
                                row = (ci * H + hi) * W + wi
                            else:
                                row = (hi * W + wi) * Cin + ci
                            D[row, col:col + Cout] = w_oihw[:, ci, kh, kw]
    return D


def _fc1_row_permutation(Hf, Wf, C):
    # Kernel features are flattened (h, w, c); PyTorch's x.view flattens (c, h, w).
    perm = np.empty(Hf * Wf * C, np.int64)
    for h in range(Hf):
        for w in range(Wf):
            for c in range(C):
                perm[(h * Wf + w) * C + c] = (c * Hf + h) * Wf + w
    return perm


def init_torch_params(key):
    """Parameters in PyTorch convention (conv OIHW, linear (out, in))."""
    ks = jax.random.split(key, 8)

    def u(k, shape, fan_in):
        bound = 1.0 / np.sqrt(fan_in)
        return jax.random.uniform(k, shape, jnp.float32, -bound, bound)

    F1 = (IMAGE_SIZE // 4) * (IMAGE_SIZE // 4) * DEPTH[1]
    return {
        "conv1_w": u(ks[0], (DEPTH[0], 3, KSIZE, KSIZE), 3 * KSIZE * KSIZE),
        "conv1_b": u(ks[1], (DEPTH[0],), 3 * KSIZE * KSIZE),
        "conv2_w": u(ks[2], (DEPTH[1], DEPTH[0], KSIZE, KSIZE),
                     DEPTH[0] * KSIZE * KSIZE),
        "conv2_b": u(ks[3], (DEPTH[1],), DEPTH[0] * KSIZE * KSIZE),
        "fc1_w": u(ks[4], (512, F1), F1),
        "fc1_b": u(ks[5], (512,), F1),
        "fc2_w": u(ks[6], (NUM_CLASSES, 512), 512),
        "fc2_b": u(ks[7], (NUM_CLASSES,), 512),
    }


def build_kernel_params(tp):
    """Fold conv taps, pooling layout, the fc1 flatten permutation and the fc2
    lane padding into static matrices consumed by the fused kernel.  Matmul
    operands are stored in bf16 (f32 accumulation in-kernel); biases stay f32
    because the epilogues are f32 elementwise."""
    H1 = W1 = IMAGE_SIZE
    H2 = W2 = IMAGE_SIZE // 2
    Hf = Wf = IMAGE_SIZE // 4
    C2 = DEPTH[1]

    w1d = _conv_pool_dense_weight(np.asarray(tp["conv1_w"]), H1, W1,
                                  input_chw_order=True)      # (768, 1024)
    w2d = _conv_pool_dense_weight(np.asarray(tp["conv2_w"]), H2, W2,
                                  input_chw_order=False)     # (256, 512)
    b1f = np.tile(np.asarray(tp["conv1_b"]), 4 * (H1 // 2) * (W1 // 2)).reshape(1, -1)
    b2f = np.tile(np.asarray(tp["conv2_b"]), 4 * (H2 // 2) * (W2 // 2)).reshape(1, -1)

    perm = _fc1_row_permutation(Hf, Wf, C2)
    fw1 = np.asarray(tp["fc1_w"])[:, perm].T                 # (128, 512), rows in (h,w,c) order

    # fc2 padded to a lane-dense 128-wide output: zero weight columns and -1e30
    # bias on lanes NUM_CLASSES..127 (they never win the max and add exp(.)=0 to
    # the softmax sum), so log_softmax over all 128 lanes stays exact.
    fw2 = np.zeros((512, OUT_LANES), np.float32)
    fw2[:, :NUM_CLASSES] = np.asarray(tp["fc2_w"]).T
    fb2 = np.full((1, OUT_LANES), -1e30, np.float32)
    fb2[0, :NUM_CLASSES] = np.asarray(tp["fc2_b"])

    # NOTE: on v6e one could additionally int8-quantize w1d/w2d (MXU has a native
    # int path there); not done because v7x's MXU is fp8-only (no int).
    return {
        "w1d": jnp.asarray(w1d, jnp.bfloat16), "b1f": jnp.asarray(b1f, jnp.float32),
        "w2d": jnp.asarray(w2d, jnp.bfloat16), "b2f": jnp.asarray(b2f, jnp.float32),
        "fw1": jnp.asarray(fw1, jnp.bfloat16),
        "fb1": jnp.asarray(np.asarray(tp["fc1_b"]).reshape(1, -1), jnp.float32),
        "fw2": jnp.asarray(fw2, jnp.bfloat16), "fb2": jnp.asarray(fb2, jnp.float32),
    }


# ----------------------------------------------------------------------------
# Fused forward kernel
# ----------------------------------------------------------------------------
def _pool_quadrant_max(y):
    # 2x2 max-pool: columns are (quadrant, pooled_h, pooled_w, c), so pooling is a
    # max over four contiguous, 128-aligned lane blocks (pure VPU, no relayout).
    q = y.shape[1] // 4
    return jnp.maximum(jnp.maximum(y[:, :q], y[:, q:2 * q]),
                       jnp.maximum(y[:, 2 * q:3 * q], y[:, 3 * q:]))


def convnet_kernel(x_ref, w1_ref, b1_ref, w2_ref, b2_ref,
                   fw1_ref, fb1_ref, fw2_ref, fb2_ref, out_ref):
    bf16 = jnp.bfloat16

    # conv1 (5x5, pad=2) + bias + ReLU as a single K=768 bf16 MXU contraction.
    y1 = jnp.dot(x_ref[...], w1_ref[...], preferred_element_type=jnp.float32)
    y1 = jnp.maximum(y1 + b1_ref[...], 0.0)
    p1 = _pool_quadrant_max(y1)                      # (bm, 8*8*4) f32, (h,w,c) order

    # conv2 + bias + ReLU as a single K=256 bf16 contraction.
    y2 = jnp.dot(p1.astype(bf16), w2_ref[...], preferred_element_type=jnp.float32)
    y2 = jnp.maximum(y2 + b2_ref[...], 0.0)
    p2 = _pool_quadrant_max(y2)                      # (bm, 4*4*8) f32, (h,w,c) order

    # fc1 + ReLU (flatten permutation already folded into fw1 rows).
    h = jnp.dot(p2.astype(bf16), fw1_ref[...], preferred_element_type=jnp.float32)
    h = jnp.maximum(h + fb1_ref[...], 0.0)
    # TODO(synk): F.dropout(training=True) would randomly zero/scale units;
    # implemented as eval-mode identity for determinism.

    # fc2, padded to 128 lane-dense output columns (padded bias lanes = -1e30).
    logits = jnp.dot(h.astype(bf16), fw2_ref[...],
                     preferred_element_type=jnp.float32) + fb2_ref[...]

    # log_softmax over all 128 lanes (padded lanes contribute exp ~ 0, never max).
    m = jnp.max(logits, axis=-1, keepdims=True)
    s = jnp.sum(jnp.exp(logits - m), axis=-1, keepdims=True)
    out_ref[...] = (logits - m) - jnp.log(s)         # full (bm, 128) unmasked store


# ----------------------------------------------------------------------------
# Wrapper
# ----------------------------------------------------------------------------
def _pick_batch_tile(n):
    # >= 128 rows so the MXU M dimension is filled (never M=2); <= 256 so that the
    # grid has >= 2 steps once N > 256, letting the "parallel" axis shard across
    # v7x's two TensorCores.  On v5e a caller can pass batch_tile=128 explicitly.
    return int(min(256, max(128, -(-n // 128) * 128)))


def convnet_forward(x_nchw, kparams, *, batch_tile=None):
    N, C, H, W = x_nchw.shape
    F0 = C * H * W
    bm = _pick_batch_tile(N) if batch_tile is None else int(batch_tile)
    assert bm % 8 == 0, "batch tile must be a multiple of 8 sublanes"

    # Coarse VMEM budget: double-buffered bf16 input block + f32 output block +
    # ~2x weights (~4.5 MiB) + ~10 KiB/sample of f32 intermediates.  Keeps large
    # user-supplied tiles under the 48 MiB limit (v7x-safe).
    est = 2 * bm * F0 * 2 + 2 * bm * OUT_LANES * 4 + 5 * (1 << 20) + bm * 2560 * 4
    assert est < 48 * 1024 * 1024, f"batch_tile={bm} overflows the VMEM budget"

    n_pad = pl.cdiv(N, bm) * bm          # ragged batch -> zero-padded final tile

    # NCHW flatten is (c,h,w) order — a zero-copy reshape; that ordering is folded
    # into w1d's rows.  Cast to bf16 here: the input tile is the only per-grid-step
    # HBM operand, so this halves the streamed DMA bytes.
    x_flat = x_nchw.reshape(N, F0).astype(jnp.bfloat16)
    if n_pad != N:
        x_flat = jnp.pad(x_flat, ((0, n_pad - N), (0, 0)))

    def const(a):  # whole-array block, replicated across the batch grid
        return pl.BlockSpec(a.shape, lambda i: (0, 0))
    # NOTE: on v7x, pipeline_mode=pl.Buffered(1) on these grid-invariant specs
    # would drop their second pipeline buffer (~2 MiB of VMEM back); omitted to
    # stay portable across jax versions.

    kp = kparams
    out = pl.pallas_call(
        convnet_kernel,
        out_shape=jax.ShapeDtypeStruct((n_pad, OUT_LANES), jnp.float32),
        grid=(n_pad // bm,),
        in_specs=[
            pl.BlockSpec((bm, F0), lambda i: (i, 0)),
            const(kp["w1d"]), const(kp["b1f"]),
            const(kp["w2d"]), const(kp["b2f"]),
            const(kp["fw1"]), const(kp["fb1"]),
            const(kp["fw2"]), const(kp["fb2"]),
        ],
        out_specs=pl.BlockSpec((bm, OUT_LANES), lambda i: (i, 0)),
        compiler_params=pltpu.CompilerParams(
            dimension_semantics=("parallel",),       # megacore-shardable batch axis
            vmem_limit_bytes=48 * 1024 * 1024),      # > v5e 16 MiB scoped default,
                                                     # < v7x 64 MiB physical VMEM
    )(x_flat, kp["w1d"], kp["b1f"], kp["w2d"], kp["b2f"],
      kp["fw1"], kp["fb1"], kp["fw2"], kp["fb2"])

    return out[:N, :NUM_CLASSES]


# ----------------------------------------------------------------------------
# Pure-JAX reference of the PyTorch module (eval mode), for a sanity check
# ----------------------------------------------------------------------------
def reference_forward(x_nchw, tp):
    def conv(x, w, b):
        y = jax.lax.conv_general_dilated(
            x, w, window_strides=(1, 1), padding=((PAD, PAD), (PAD, PAD)),
            dimension_numbers=("NCHW", "OIHW", "NCHW"))
        return y + b[None, :, None, None]

    def pool(x):
        n, c, h, w = x.shape
        return x.reshape(n, c, h // 2, 2, w // 2, 2).max(axis=(3, 5))

    x = pool(jax.nn.relu(conv(x_nchw, tp["conv1_w"], tp["conv1_b"])))
    x = pool(jax.nn.relu(conv(x, tp["conv2_w"], tp["conv2_b"])))
    x = x.reshape(x.shape[0], -1)                   # PyTorch (C, H, W) flatten
    x = jax.nn.relu(x @ tp["fc1_w"].T + tp["fc1_b"])
    logits = x @ tp["fc2_w"].T + tp["fc2_b"]
    return jax.nn.log_softmax(logits, axis=-1)


if __name__ == "__main__":
    key = jax.random.PRNGKey(0)
    pkey, xkey = jax.random.split(key)
    torch_params = init_torch_params(pkey)
    kernel_params = build_kernel_params(torch_params)
    x = jax.random.normal(xkey, (2, 3, IMAGE_SIZE, IMAGE_SIZE), jnp.float32)

    out = jax.jit(convnet_forward)(x, kernel_params)
    jax.block_until_ready(out)
    assert out.shape == (2, NUM_CLASSES)
    assert bool(jnp.all(jnp.isfinite(out)))

    # Tolerance reflects bf16 MXU operands (f32 accumulation) vs. the f32 reference.
    ref = reference_forward(x, torch_params)
    assert float(jnp.max(jnp.abs(out - ref))) < 7.5e-2, "mismatch vs reference"
    print("KERNEL_OK")
</pallas_src>

<mosaic_0001>
module attributes {stable_mosaic.version = 11 : i64} {
  func.func @convnet_kernel(%arg0: i32, %arg1: memref<128x768xbf16, #tpu.memory_space<vmem>>, %arg2: memref<768x1024xbf16, #tpu.memory_space<vmem>>, %arg3: memref<1x1024xf32, #tpu.memory_space<vmem>>, %arg4: memref<256x512xbf16, #tpu.memory_space<vmem>>, %arg5: memref<1x512xf32, #tpu.memory_space<vmem>>, %arg6: memref<128x512xbf16, #tpu.memory_space<vmem>>, %arg7: memref<1x512xf32, #tpu.memory_space<vmem>>, %arg8: memref<512x128xbf16, #tpu.memory_space<vmem>>, %arg9: memref<1x128xf32, #tpu.memory_space<vmem>>, %arg10: memref<128x128xf32, #tpu.memory_space<vmem>>) attributes {dimension_semantics = [#tpu.dimension_semantics<parallel>], iteration_bounds = array<i64: 1>, scalar_prefetch = 0 : i64, scratch_operands = 0 : i64, tpu.core_type = #tpu.core_type<tc>, window_params = [{transform_indices = @transform_0, window_bounds = array<i64: 128, 768>}, {pipeline_mode = #tpu.pipeline_mode<synchronous>, transform_indices = @transform_1, window_bounds = array<i64: 768, 1024>}, {pipeline_mode = #tpu.pipeline_mode<synchronous>, transform_indices = @transform_2, window_bounds = array<i64: 1, 1024>}, {pipeline_mode = #tpu.pipeline_mode<synchronous>, transform_indices = @transform_3, window_bounds = array<i64: 256, 512>}, {pipeline_mode = #tpu.pipeline_mode<synchronous>, transform_indices = @transform_4, window_bounds = array<i64: 1, 512>}, {pipeline_mode = #tpu.pipeline_mode<synchronous>, transform_indices = @transform_5, window_bounds = array<i64: 128, 512>}, {pipeline_mode = #tpu.pipeline_mode<synchronous>, transform_indices = @transform_6, window_bounds = array<i64: 1, 512>}, {pipeline_mode = #tpu.pipeline_mode<synchronous>, transform_indices = @transform_7, window_bounds = array<i64: 512, 128>}, {pipeline_mode = #tpu.pipeline_mode<synchronous>, transform_indices = @transform_8, window_bounds = array<i64: 1, 128>}, {transform_indices = @transform_9, window_bounds = array<i64: 128, 128>}]} {
    %c0 = arith.constant 0 : index
    %c0_0 = arith.constant 0 : index
    %0 = vector.load %arg1[%c0, %c0_0] : memref<128x768xbf16, #tpu.memory_space<vmem>>, vector<128x768xbf16>
    %c0_1 = arith.constant 0 : index
    %c0_2 = arith.constant 0 : index
    %1 = vector.load %arg2[%c0_1, %c0_2] : memref<768x1024xbf16, #tpu.memory_space<vmem>>, vector<768x1024xbf16>
    %cst = arith.constant dense<0.000000e+00> : vector<128x1024xf32>
    %2 = tpu.matmul %0, %1, %cst {dimension_numbers = #tpu.dot_dimension_numbers<[1], [0], [0], [1], [0, 0, 1, 1], [], []>} : vector<128x768xbf16>, vector<768x1024xbf16>, vector<128x1024xf32> -> vector<128x1024xf32>
    %c0_3 = arith.constant 0 : index
    %c0_4 = arith.constant 0 : index
    %3 = vector.load %arg3[%c0_3, %c0_4] : memref<1x1024xf32, #tpu.memory_space<vmem>>, vector<1x1024xf32>
    %4 = vector.broadcast %3 : vector<1x1024xf32> to vector<128x1024xf32>
    %5 = arith.addf %2, %4 : vector<128x1024xf32>
    %cst_5 = arith.constant 0.000000e+00 : f32
    %6 = vector.broadcast %cst_5 : f32 to vector<128x1024xf32>
    %7 = arith.maximumf %5, %6 : vector<128x1024xf32>
    %8 = vector.extract_strided_slice %7 {offsets = [0, 0], sizes = [128, 256], strides = [1, 1]} : vector<128x1024xf32> to vector<128x256xf32>
    %9 = vector.extract_strided_slice %7 {offsets = [0, 256], sizes = [128, 256], strides = [1, 1]} : vector<128x1024xf32> to vector<128x256xf32>
    %10 = arith.maximumf %8, %9 : vector<128x256xf32>
    %11 = vector.extract_strided_slice %7 {offsets = [0, 512], sizes = [128, 256], strides = [1, 1]} : vector<128x1024xf32> to vector<128x256xf32>
    %12 = vector.extract_strided_slice %7 {offsets = [0, 768], sizes = [128, 256], strides = [1, 1]} : vector<128x1024xf32> to vector<128x256xf32>
    %13 = arith.maximumf %11, %12 : vector<128x256xf32>
    %14 = arith.maximumf %10, %13 : vector<128x256xf32>
    %15 = arith.truncf %14 : vector<128x256xf32> to vector<128x256xbf16>
    %c0_6 = arith.constant 0 : index
    %c0_7 = arith.constant 0 : index
    %16 = vector.load %arg4[%c0_6, %c0_7] : memref<256x512xbf16, #tpu.memory_space<vmem>>, vector<256x512xbf16>
    %cst_8 = arith.constant dense<0.000000e+00> : vector<128x512xf32>
    %17 = tpu.matmul %15, %16, %cst_8 {dimension_numbers = #tpu.dot_dimension_numbers<[1], [0], [0], [1], [0, 0, 1, 1], [], []>} : vector<128x256xbf16>, vector<256x512xbf16>, vector<128x512xf32> -> vector<128x512xf32>
    %c0_9 = arith.constant 0 : index
    %c0_10 = arith.constant 0 : index
    %18 = vector.load %arg5[%c0_9, %c0_10] : memref<1x512xf32, #tpu.memory_space<vmem>>, vector<1x512xf32>
    %19 = vector.broadcast %18 : vector<1x512xf32> to vector<128x512xf32>
    %20 = arith.addf %17, %19 : vector<128x512xf32>
    %cst_11 = arith.constant 0.000000e+00 : f32
    %21 = vector.broadcast %cst_11 : f32 to vector<128x512xf32>
    %22 = arith.maximumf %20, %21 : vector<128x512xf32>
    %23 = vector.extract_strided_slice %22 {offsets = [0, 0], sizes = [128, 128], strides = [1, 1]} : vector<128x512xf32> to vector<128x128xf32>
    %24 = vector.extract_strided_slice %22 {offsets = [0, 128], sizes = [128, 128], strides = [1, 1]} : vector<128x512xf32> to vector<128x128xf32>
    %25 = arith.maximumf %23, %24 : vector<128x128xf32>
    %26 = vector.extract_strided_slice %22 {offsets = [0, 256], sizes = [128, 128], strides = [1, 1]} : vector<128x512xf32> to vector<128x128xf32>
    %27 = vector.extract_strided_slice %22 {offsets = [0, 384], sizes = [128, 128], strides = [1, 1]} : vector<128x512xf32> to vector<128x128xf32>
    %28 = arith.maximumf %26, %27 : vector<128x128xf32>
    %29 = arith.maximumf %25, %28 : vector<128x128xf32>
    %30 = arith.truncf %29 : vector<128x128xf32> to vector<128x128xbf16>
    %c0_12 = arith.constant 0 : index
    %c0_13 = arith.constant 0 : index
    %31 = vector.load %arg6[%c0_12, %c0_13] : memref<128x512xbf16, #tpu.memory_space<vmem>>, vector<128x512xbf16>
    %cst_14 = arith.constant dense<0.000000e+00> : vector<128x512xf32>
    %32 = tpu.matmul %30, %31, %cst_14 {dimension_numbers = #tpu.dot_dimension_numbers<[1], [0], [0], [1], [0, 0, 1, 1], [], []>} : vector<128x128xbf16>, vector<128x512xbf16>, vector<128x512xf32> -> vector<128x512xf32>
    %c0_15 = arith.constant 0 : index
    %c0_16 = arith.constant 0 : index
    %33 = vector.load %arg7[%c0_15, %c0_16] : memref<1x512xf32, #tpu.memory_space<vmem>>, vector<1x512xf32>
    %34 = vector.broadcast %33 : vector<1x512xf32> to vector<128x512xf32>
    %35 = arith.addf %32, %34 : vector<128x512xf32>
    %cst_17 = arith.constant 0.000000e+00 : f32
    %36 = vector.broadcast %cst_17 : f32 to vector<128x512xf32>
    %37 = arith.maximumf %35, %36 : vector<128x512xf32>
    %38 = arith.truncf %37 : vector<128x512xf32> to vector<128x512xbf16>
    %c0_18 = arith.constant 0 : index
    %c0_19 = arith.constant 0 : index
    %39 = vector.load %arg8[%c0_18, %c0_19] : memref<512x128xbf16, #tpu.memory_space<vmem>>, vector<512x128xbf16>
    %cst_20 = arith.constant dense<0.000000e+00> : vector<128x128xf32>
    %40 = tpu.matmul %38, %39, %cst_20 {dimension_numbers = #tpu.dot_dimension_numbers<[1], [0], [0], [1], [0, 0, 1, 1], [], []>} : vector<128x512xbf16>, vector<512x128xbf16>, vector<128x128xf32> -> vector<128x128xf32>
    %c0_21 = arith.constant 0 : index
    %c0_22 = arith.constant 0 : index
    %41 = vector.load %arg9[%c0_21, %c0_22] : memref<1x128xf32, #tpu.memory_space<vmem>>, vector<1x128xf32>
    %42 = vector.broadcast %41 : vector<1x128xf32> to vector<128x128xf32>
    %43 = arith.addf %40, %42 : vector<128x128xf32>
    %cst_23 = arith.constant dense<0xFF800000> : vector<128xf32>
    %44 = vector.multi_reduction <maximumf>, %43, %cst_23 [1] : vector<128x128xf32> to vector<128xf32>
    %45 = vector.shape_cast %44 : vector<128xf32> to vector<128x1xf32>
    %46 = vector.broadcast %45 : vector<128x1xf32> to vector<128x128xf32>
    %47 = arith.subf %43, %46 : vector<128x128xf32>
    %48 = math.exp %47 : vector<128x128xf32>
    %cst_24 = arith.constant dense<0.000000e+00> : vector<128xf32>
    %49 = vector.multi_reduction <add>, %48, %cst_24 [1] : vector<128x128xf32> to vector<128xf32>
    %50 = vector.shape_cast %49 : vector<128xf32> to vector<128x1xf32>
    %51 = vector.broadcast %45 : vector<128x1xf32> to vector<128x128xf32>
    %52 = arith.subf %43, %51 : vector<128x128xf32>
    %53 = math.log %50 : vector<128x1xf32>
    %54 = vector.broadcast %53 : vector<128x1xf32> to vector<128x128xf32>
    %55 = arith.subf %52, %54 : vector<128x128xf32>
    %c0_25 = arith.constant 0 : index
    %c0_26 = arith.constant 0 : index
    %56 = vector.load %arg10[%c0_25, %c0_26] : memref<128x128xf32, #tpu.memory_space<vmem>>, vector<128x128xf32>
    tpu.vector_store %arg10[%c0_25, %c0_26], %55 {strides = array<i32>} : memref<128x128xf32, #tpu.memory_space<vmem>>, vector<128x128xf32>,
    return
  }
  func.func @transform_0(%arg0: i32) -> (i32, i32) {
    %c0_i32 = arith.constant 0 : i32
    %c0_i32_0 = arith.constant 0 : i32
    return %arg0, %c0_i32 : i32, i32
  }
  func.func @transform_1(%arg0: i32) -> (i32, i32) {
    %c0_i32 = arith.constant 0 : i32
    %c0_i32_0 = arith.constant 0 : i32
    %c0_i32_1 = arith.constant 0 : i32
    return %c0_i32, %c0_i32_0 : i32, i32
  }
  func.func @transform_2(%arg0: i32) -> (i32, i32) {
    %c0_i32 = arith.constant 0 : i32
    %c0_i32_0 = arith.constant 0 : i32
    %c0_i32_1 = arith.constant 0 : i32
    return %c0_i32, %c0_i32_0 : i32, i32
  }
  func.func @transform_3(%arg0: i32) -> (i32, i32) {
    %c0_i32 = arith.constant 0 : i32
    %c0_i32_0 = arith.constant 0 : i32
    %c0_i32_1 = arith.constant 0 : i32
    return %c0_i32, %c0_i32_0 : i32, i32
  }
  func.func @transform_4(%arg0: i32) -> (i32, i32) {
    %c0_i32 = arith.constant 0 : i32
    %c0_i32_0 = arith.constant 0 : i32
    %c0_i32_1 = arith.constant 0 : i32
    return %c0_i32, %c0_i32_0 : i32, i32
  }
  func.func @transform_5(%arg0: i32) -> (i32, i32) {
    %c0_i32 = arith.constant 0 : i32
    %c0_i32_0 = arith.constant 0 : i32
    %c0_i32_1 = arith.constant 0 : i32
    return %c0_i32, %c0_i32_0 : i32, i32
  }
  func.func @transform_6(%arg0: i32) -> (i32, i32) {
    %c0_i32 = arith.constant 0 : i32
    %c0_i32_0 = arith.constant 0 : i32
    %c0_i32_1 = arith.constant 0 : i32
    return %c0_i32, %c0_i32_0 : i32, i32
  }
  func.func @transform_7(%arg0: i32) -> (i32, i32) {
    %c0_i32 = arith.constant 0 : i32
    %c0_i32_0 = arith.constant 0 : i32
    %c0_i32_1 = arith.constant 0 : i32
    return %c0_i32, %c0_i32_0 : i32, i32
  }
  func.func @transform_8(%arg0: i32) -> (i32, i32) {
    %c0_i32 = arith.constant 0 : i32
    %c0_i32_0 = arith.constant 0 : i32
    %c0_i32_1 = arith.constant 0 : i32
    return %c0_i32, %c0_i32_0 : i32, i32
  }
  func.func @transform_9(%arg0: i32) -> (i32, i32) {
    %c0_i32 = arith.constant 0 : i32
    %c0_i32_0 = arith.constant 0 : i32
    return %arg0, %c0_i32 : i32, i32
  }
}

</mosaic_0001>

<llo_original>
// kernel: convnet_forward.1
$region0: #{convnet_forward.1}
  #allocation0 [shape = 'u32[]', space=smem, size = 0x4, offset = 0x4, fixed_abs, tag = 'smem constant byte address 0x4 - core index']
  #allocation1 [shape = 'u32[144,128]{1,0:T(1,128)}', space=vmem, size = 0x12000, scoped, tag = 'internal scratch']
  %s0 = inlined_call_operand.vmem [shape: bf16[128,768], index: 0, kind: input, shape index: {}]
  %s1 = inlined_call_operand.hbm [shape: bf16[768,1024], index: 1, kind: input, shape index: {}]
  %s2 = inlined_call_operand.hbm [shape: f32[1,1024], index: 2, kind: input, shape index: {}]
  %s3 = inlined_call_operand.hbm [shape: bf16[256,512], index: 3, kind: input, shape index: {}]
  %s4 = inlined_call_operand.hbm [shape: f32[1,512], index: 4, kind: input, shape index: {}]
  %s5 = inlined_call_operand.hbm [shape: bf16[128,512], index: 5, kind: input, shape index: {}]
  %s6 = inlined_call_operand.hbm [shape: f32[1,512], index: 6, kind: input, shape index: {}]
  %s7 = inlined_call_operand.hbm [shape: bf16[512,128], index: 7, kind: input, shape index: {}]
  %s8 = inlined_call_operand.hbm [shape: f32[1,128], index: 8, kind: input, shape index: {}]
  %s9 = inlined_call_operand.vmem [shape: f32[128,128], index: 9, kind: output, shape index: {}]
  %s10 = sld [smem:[#allocation0]]
  $region78: #{convnet_forward.1} parent=0
    _
  %s12 = ssub.s32 1, %s10
  %s13 = scalar_select 0, %s12, %s10
  $region1: #{convnet_forward.1} parent=0
    #allocation2 [shape = 'u8[1572864]{0}', space=vmem, size = 0x180000, scoped, tag = 'input window, operand 1, single buffered']
    #allocation3 [shape = 's32[1]{0}', space=sflag, size = 0x4, scoped, tag = 'scoped memory for convnet_forward.1']
    #allocation4 [shape = 'u8[4096]{0}', space=vmem, size = 0x1000, scoped, tag = 'input window, operand 2, single buffered']
    #allocation5 [shape = 's32[1]{0}', space=sflag, size = 0x4, scoped, tag = 'scoped memory for convnet_forward.1']
    #allocation6 [shape = 'u8[262144]{0}', space=vmem, size = 0x40000, scoped, tag = 'input window, operand 3, single buffered']
    #allocation7 [shape = 'u8[2048]{0}', space=vmem, size = 0x800, scoped, tag = 'input window, operand 4, single buffered']
    #allocation8 [shape = 's32[1]{0}', space=sflag, size = 0x4, scoped, tag = 'scoped memory for convnet_forward.1']
    #allocation9 [shape = 'u8[131072]{0}', space=vmem, size = 0x20000, scoped, tag = 'input window, operand 5, single buffered']
    #allocation10 [shape = 'u8[2048]{0}', space=vmem, size = 0x800, scoped, tag = 'input window, operand 6, single buffered']
    #allocation11 [shape = 's32[1]{0}', space=sflag, size = 0x4, scoped, tag = 'scoped memory for convnet_forward.1']
    #allocation12 [shape = 'u8[131072]{0}', space=vmem, size = 0x20000, scoped, tag = 'input window, operand 7, single buffered']
    #allocation13 [shape = 'u8[512]{0}', space=vmem, size = 0x400, scoped, tag = 'input window, operand 8, single buffered']
    #allocation14 [shape = 's32[1]{0}', space=sflag, size = 0x4, scoped, tag = 'scoped memory for convnet_forward.1']
    %14 = vsyncpa [#allocation3], 0
    %15 = vsyncpa [#allocation5], 0
    %16 = vsyncpa [#allocation8], 0
    %17 = vsyncpa [#allocation11], 0
    %18 = vsyncpa [#allocation14], 0
    // Predicated region
    $region2: #{convnet_forward.1} parent=1 // pred_check
      _
    $region3: #{convnet_forward.1} parent=1 // pred_check_branch
      %20 = sbr.rel (0) target = $region5
    $region4: #{convnet_forward.1} parent=1 // pred_region
      _
    $region5: #{convnet_forward.1} parent=1 // pred_fallthru
      _
    // Predicated region
    $region6: #{convnet_forward.1} parent=1 // pred_check
      _
    $region7: #{convnet_forward.1} parent=1 // pred_check_branch
      %22 = sbr.rel (0) target = $region9
    $region8: #{convnet_forward.1} parent=1 // pred_region
      %s24 = ssub.s32 49152, 49152
      %25 = vsyncadd [#allocation3], %s24
      %s26 = sshll.u32 [#allocation2], 4
      %s27 = int_to_ptr.vmem [resolvable:$true] %s26
      %32 = dma.hbm_to_vmem [thread:$0]  %s1, 49152, %s27, [#allocation3], 512, 512, 32
    $region9: #{convnet_forward.1} parent=1 // pred_fallthru
      _
    // Predicated region
    $region10: #{convnet_forward.1} parent=1 // pred_check
      _
    $region11: #{convnet_forward.1} parent=1 // pred_check_branch
      %34 = sbr.rel (0) target = $region13
    $region12: #{convnet_forward.1} parent=1 // pred_region
      %s36 = ssub.s32 128, 128
      %37 = vsyncadd [#allocation5], %s36
      %s39 = sshll.u32 [#allocation4], 4
      %s40 = int_to_ptr.vmem [resolvable:$true] %s39
      %42 = dma.hbm_to_vmem [thread:$0]  %s2, 128, %s40, [#allocation5]
    $region13: #{convnet_forward.1} parent=1 // pred_fallthru
      _
    // Predicated region
    $region14: #{convnet_forward.1} parent=1 // pred_check
      _
    $region15: #{convnet_forward.1} parent=1 // pred_check_branch
      %44 = sbr.rel (0) target = $region17
    $region16: #{convnet_forward.1} parent=1 // pred_region
      %s46 = ssub.s32 8192, 8192
      %47 = vsyncadd [#allocation5], %s46
      %s48 = sshll.u32 [#allocation6], 4
      %s49 = int_to_ptr.vmem [resolvable:$true] %s48
      %54 = dma.hbm_to_vmem [thread:$0]  %s3, 8192, %s49, [#allocation5], 256, 256, 16
    $region17: #{convnet_forward.1} parent=1 // pred_fallthru
      _
    // Predicated region
    $region18: #{convnet_forward.1} parent=1 // pred_check
      _
    $region19: #{convnet_forward.1} parent=1 // pred_check_branch
      %56 = sbr.rel (0) target = $region21
    $region20: #{convnet_forward.1} parent=1 // pred_region
      %s58 = ssub.s32 64, 64
      %59 = vsyncadd [#allocation8], %s58
      %s61 = sshll.u32 [#allocation7], 4
      %s62 = int_to_ptr.vmem [resolvable:$true] %s61
      %64 = dma.hbm_to_vmem [thread:$0]  %s4, 64, %s62, [#allocation8]
    $region21: #{convnet_forward.1} parent=1 // pred_fallthru
      _
    // Predicated region
    $region22: #{convnet_forward.1} parent=1 // pred_check
      _
    $region23: #{convnet_forward.1} parent=1 // pred_check_branch
      %66 = sbr.rel (0) target = $region25
    $region24: #{convnet_forward.1} parent=1 // pred_region
      %s68 = ssub.s32 4096, 4096
      %69 = vsyncadd [#allocation8], %s68
      %s70 = sshll.u32 [#allocation9], 4
      %s71 = int_to_ptr.vmem [resolvable:$true] %s70
      %76 = dma.hbm_to_vmem [thread:$0]  %s5, 4096, %s71, [#allocation8], 256, 256, 16
    $region25: #{convnet_forward.1} parent=1 // pred_fallthru
      _
    // Predicated region
    $region26: #{convnet_forward.1} parent=1 // pred_check
      _
    $region27: #{convnet_forward.1} parent=1 // pred_check_branch
      %78 = sbr.rel (0) target = $region29
    $region28: #{convnet_forward.1} parent=1 // pred_region
      %s80 = ssub.s32 64, 64
      %81 = vsyncadd [#allocation11], %s80
      %s83 = sshll.u32 [#allocation10], 4
      %s84 = int_to_ptr.vmem [resolvable:$true] %s83
      %86 = dma.hbm_to_vmem [thread:$0]  %s6, 64, %s84, [#allocation11]
    $region29: #{convnet_forward.1} parent=1 // pred_fallthru
      _
    // Predicated region
    $region30: #{convnet_forward.1} parent=1 // pred_check
      _
    $region31: #{convnet_forward.1} parent=1 // pred_check_branch
      %88 = sbr.rel (0) target = $region33
    $region32: #{convnet_forward.1} parent=1 // pred_region
      %s90 = ssub.s32 4096, 4096
      %91 = vsyncadd [#allocation11], %s90
      %s92 = sshll.u32 [#allocation12], 4
      %s93 = int_to_ptr.vmem [resolvable:$true] %s92
      %98 = dma.hbm_to_vmem [thread:$0]  %s7, 4096, %s93, [#allocation11], 64, 64, 4
    $region33: #{convnet_forward.1} parent=1 // pred_fallthru
      _
    // Predicated region
    $region34: #{convnet_forward.1} parent=1 // pred_check
      _
    $region35: #{convnet_forward.1} parent=1 // pred_check_branch
      %100 = sbr.rel (0) target = $region37
    $region36: #{convnet_forward.1} parent=1 // pred_region
      %s102 = ssub.s32 16, 16
      %103 = vsyncadd [#allocation14], %s102
      %s105 = sshll.u32 [#allocation13], 4
      %s106 = int_to_ptr.vmem [resolvable:$true] %s105
      %108 = dma.hbm_to_vmem [thread:$0]  %s8, 16, %s106, [#allocation14]
    $region37: #{convnet_forward.1} parent=1 // pred_fallthru
      _
    // Predicated region
    $region38: #{convnet_forward.1} parent=1 // pred_check
      _
    $region39: #{convnet_forward.1} parent=1 // pred_check_branch
      %110 = sbr.rel (0) target = $region41
    $region40: #{convnet_forward.1} parent=1 // pred_region
      %111 = dma.done [#allocation3], 49152
    $region41: #{convnet_forward.1} parent=1 // pred_fallthru
      _
    // Predicated region
    $region42: #{convnet_forward.1} parent=1 // pred_check
      _
    $region43: #{convnet_forward.1} parent=1 // pred_check_branch
      %113 = sbr.rel (0) target = $region45
    $region44: #{convnet_forward.1} parent=1 // pred_region
      %114 = dma.done [#allocation5], 128
    $region45: #{convnet_forward.1} parent=1 // pred_fallthru
      _
    // Predicated region
    $region46: #{convnet_forward.1} parent=1 // pred_check
      _
    $region47: #{convnet_forward.1} parent=1 // pred_check_branch
      %116 = sbr.rel (0) target = $region49
    $region48: #{convnet_forward.1} parent=1 // pred_region
      %117 = dma.done [#allocation5], 8192
    $region49: #{convnet_forward.1} parent=1 // pred_fallthru
      _
    // Predicated region
    $region50: #{convnet_forward.1} parent=1 // pred_check
      _
    $region51: #{convnet_forward.1} parent=1 // pred_check_branch
      %119 = sbr.rel (0) target = $region53
    $region52: #{convnet_forward.1} parent=1 // pred_region
      %120 = dma.done [#allocation8], 64
    $region53: #{convnet_forward.1} parent=1 // pred_fallthru
      _
    // Predicated region
    $region54: #{convnet_forward.1} parent=1 // pred_check
      _
    $region55: #{convnet_forward.1} parent=1 // pred_check_branch
      %122 = sbr.rel (0) target = $region57
    $region56: #{convnet_forward.1} parent=1 // pred_region
      %123 = dma.done [#allocation8], 4096
    $region57: #{convnet_forward.1} parent=1 // pred_fallthru
      _
    // Predicated region
    $region58: #{convnet_forward.1} parent=1 // pred_check
      _
    $region59: #{convnet_forward.1} parent=1 // pred_check_branch
      %125 = sbr.rel (0) target = $region61
    $region60: #{convnet_forward.1} parent=1 // pred_region
      %126 = dma.done [#allocation11], 64
    $region61: #{convnet_forward.1} parent=1 // pred_fallthru
      _
    // Predicated region
    $region62: #{convnet_forward.1} parent=1 // pred_check
      _
    $region63: #{convnet_forward.1} parent=1 // pred_check_branch
      %128 = sbr.rel (0) target = $region65
    $region64: #{convnet_forward.1} parent=1 // pred_region
      %129 = dma.done [#allocation11], 4096
    $region65: #{convnet_forward.1} parent=1 // pred_fallthru
      _
    // Predicated region
    $region66: #{convnet_forward.1} parent=1 // pred_check
      _
    $region67: #{convnet_forward.1} parent=1 // pred_check_branch
      %131 = sbr.rel (0) target = $region69
    $region68: #{convnet_forward.1} parent=1 // pred_region
      %132 = dma.done [#allocation14], 16
    $region69: #{convnet_forward.1} parent=1 // pred_fallthru
      _
    %v134 = vld [vmem:[%s0] sm:$0xff]
    %v135 = vld [vmem:[%s0 + $0x8] sm:$0xff]
    %v136 = vld [vmem:[%s0 + $0x10] sm:$0xff]
    %v137 = vld [vmem:[%s0 + $0x18] sm:$0xff]
    %v138 = vld [vmem:[%s0 + $0x20] sm:$0xff]
    %v139 = vld [vmem:[%s0 + $0x28] sm:$0xff]
    %v140 = vld [vmem:[%s0 + $0x30] sm:$0xff]
    %v141 = vld [vmem:[%s0 + $0x38] sm:$0xff]
    %v142 = vld [vmem:[%s0 + $0x40] sm:$0xff]
    %v143 = vld [vmem:[%s0 + $0x48] sm:$0xff]
    %v144 = vld [vmem:[%s0 + $0x50] sm:$0xff]
    %v145 = vld [vmem:[%s0 + $0x58] sm:$0xff]
    %v146 = vld [vmem:[%s0 + $0x60] sm:$0xff]
    %v147 = vld [vmem:[%s0 + $0x68] sm:$0xff]
    %v148 = vld [vmem:[%s0 + $0x70] sm:$0xff]
    %v149 = vld [vmem:[%s0 + $0x78] sm:$0xff]
    %v150 = vld [vmem:[%s0 + $0x80] sm:$0xff]
    %v151 = vld [vmem:[%s0 + $0x88] sm:$0xff]
    %v152 = vld [vmem:[%s0 + $0x90] sm:$0xff]
    %v153 = vld [vmem:[%s0 + $0x98] sm:$0xff]
    %v154 = vld [vmem:[%s0 + $0xa0] sm:$0xff]
    %v155 = vld [vmem:[%s0 + $0xa8] sm:$0xff]
    %v156 = vld [vmem:[%s0 + $0xb0] sm:$0xff]
    %v157 = vld [vmem:[%s0 + $0xb8] sm:$0xff]
    %v158 = vld [vmem:[%s0 + $0xc0] sm:$0xff]
    %v159 = vld [vmem:[%s0 + $0xc8] sm:$0xff]
    %v160 = vld [vmem:[%s0 + $0xd0] sm:$0xff]
    %v161 = vld [vmem:[%s0 + $0xd8] sm:$0xff]
    %v162 = vld [vmem:[%s0 + $0xe0] sm:$0xff]
    %v163 = vld [vmem:[%s0 + $0xe8] sm:$0xff]
    %v164 = vld [vmem:[%s0 + $0xf0] sm:$0xff]
    %v165 = vld [vmem:[%s0 + $0xf8] sm:$0xff]
    %v166 = vld [vmem:[%s0 + $0x100] sm:$0xff]
    %v167 = vld [vmem:[%s0 + $0x108] sm:$0xff]
    %v168 = vld [vmem:[%s0 + $0x110] sm:$0xff]
    %v169 = vld [vmem:[%s0 + $0x118] sm:$0xff]
    %v170 = vld [vmem:[%s0 + $0x120] sm:$0xff]
    %v171 = vld [vmem:[%s0 + $0x128] sm:$0xff]
    %v172 = vld [vmem:[%s0 + $0x130] sm:$0xff]
    %v173 = vld [vmem:[%s0 + $0x138] sm:$0xff]
    %v174 = vld [vmem:[%s0 + $0x140] sm:$0xff]
    %v175 = vld [vmem:[%s0 + $0x148] sm:$0xff]
    %v176 = vld [vmem:[%s0 + $0x150] sm:$0xff]
    %v177 = vld [vmem:[%s0 + $0x158] sm:$0xff]
    %v178 = vld [vmem:[%s0 + $0x160] sm:$0xff]
    %v179 = vld [vmem:[%s0 + $0x168] sm:$0xff]
    %v180 = vld [vmem:[%s0 + $0x170] sm:$0xff]
    %v181 = vld [vmem:[%s0 + $0x178] sm:$0xff]
    %v182 = vld [vmem:[#allocation2] sm:$0xff]
    %v183 = vld [vmem:[#allocation2 + $0x8] sm:$0xff]
    %v184 = vld [vmem:[#allocation2 + $0x10] sm:$0xff]
    %v185 = vld [vmem:[#allocation2 + $0x18] sm:$0xff]
    %v186 = vld [vmem:[#allocation2 + $0x20] sm:$0xff]
    %v187 = vld [vmem:[#allocation2 + $0x28] sm:$0xff]
    %v188 = vld [vmem:[#allocation2 + $0x30] sm:$0xff]
    %v189 = vld [vmem:[#allocation2 + $0x38] sm:$0xff]
    %v190 = vld [vmem:[#allocation2 + $0x40] sm:$0xff]
    %v191 = vld [vmem:[#allocation2 + $0x48] sm:$0xff]
    %v192 = vld [vmem:[#allocation2 + $0x50] sm:$0xff]
    %v193 = vld [vmem:[#allocation2 + $0x58] sm:$0xff]
    %v194 = vld [vmem:[#allocation2 + $0x60] sm:$0xff]
    %v195 = vld [vmem:[#allocation2 + $0x68] sm:$0xff]
    %v196 = vld [vmem:[#allocation2 + $0x70] sm:$0xff]
    %v197 = vld [vmem:[#allocation2 + $0x78] sm:$0xff]
    %v198 = vld [vmem:[#allocation2 + $0x80] sm:$0xff]
    %v199 = vld [vmem:[#allocation2 + $0x88] sm:$0xff]
    %v200 = vld [vmem:[#allocation2 + $0x90] sm:$0xff]
    %v201 = vld [vmem:[#allocation2 + $0x98] sm:$0xff]
    %v202 = vld [vmem:[#allocation2 + $0xa0] sm:$0xff]
    %v203 = vld [vmem:[#allocation2 + $0xa8] sm:$0xff]
    %v204 = vld [vmem:[#allocation2 + $0xb0] sm:$0xff]
    %v205 = vld [vmem:[#allocation2 + $0xb8] sm:$0xff]
    %v206 = vld [vmem:[#allocation2 + $0xc0] sm:$0xff]
    %v207 = vld [vmem:[#allocation2 + $0xc8] sm:$0xff]
    %v208 = vld [vmem:[#allocation2 + $0xd0] sm:$0xff]
    %v209 = vld [vmem:[#allocation2 + $0xd8] sm:$0xff]
    %v210 = vld [vmem:[#allocation2 + $0xe0] sm:$0xff]
    %v211 = vld [vmem:[#allocation2 + $0xe8] sm:$0xff]
    %v212 = vld [vmem:[#allocation2 + $0xf0] sm:$0xff]
    %v213 = vld [vmem:[#allocation2 + $0xf8] sm:$0xff]
    %v214 = vld [vmem:[#allocation2 + $0x100] sm:$0xff]
    %v215 = vld [vmem:[#allocation2 + $0x108] sm:$0xff]
    %v216 = vld [vmem:[#allocation2 + $0x110] sm:$0xff]
    %v217 = vld [vmem:[#allocation2 + $0x118] sm:$0xff]
    %v218 = vld [vmem:[#allocation2 + $0x120] sm:$0xff]
    %v219 = vld [vmem:[#allocation2 + $0x128] sm:$0xff]
    %v220 = vld [vmem:[#allocation2 + $0x130] sm:$0xff]
    %v221 = vld [vmem:[#allocation2 + $0x138] sm:$0xff]
    %v222 = vld [vmem:[#allocation2 + $0x140] sm:$0xff]
    %v223 = vld [vmem:[#allocation2 + $0x148] sm:$0xff]
    %v224 = vld [vmem:[#allocation2 + $0x150] sm:$0xff]
    %v225 = vld [vmem:[#allocation2 + $0x158] sm:$0xff]
    %v226 = vld [vmem:[#allocation2 + $0x160] sm:$0xff]
    %v227 = vld [vmem:[#allocation2 + $0x168] sm:$0xff]
    %v228 = vld [vmem:[#allocation2 + $0x170] sm:$0xff]
    %v229 = vld [vmem:[#allocation2 + $0x178] sm:$0xff]
    %v230 = vld [vmem:[#allocation2 + $0x180] sm:$0xff]
    %v231 = vld [vmem:[#allocation2 + $0x188] sm:$0xff]
    %v232 = vld [vmem:[#allocation2 + $0x190] sm:$0xff]
    %v233 = vld [vmem:[#allocation2 + $0x198] sm:$0xff]
    %v234 = vld [vmem:[#allocation2 + $0x1a0] sm:$0xff]
    %v235 = vld [vmem:[#allocation2 + $0x1a8] sm:$0xff]
    %v236 = vld [vmem:[#allocation2 + $0x1b0] sm:$0xff]
    %v237 = vld [vmem:[#allocation2 + $0x1b8] sm:$0xff]
    %v238 = vld [vmem:[#allocation2 + $0x1c0] sm:$0xff]
    %v239 = vld [vmem:[#allocation2 + $0x1c8] sm:$0xff]
    %v240 = vld [vmem:[#allocation2 + $0x1d0] sm:$0xff]
    %v241 = vld [vmem:[#allocation2 + $0x1d8] sm:$0xff]
    %v242 = vld [vmem:[#allocation2 + $0x1e0] sm:$0xff]
    %v243 = vld [vmem:[#allocation2 + $0x1e8] sm:$0xff]
    %v244 = vld [vmem:[#allocation2 + $0x1f0] sm:$0xff]
    %v245 = vld [vmem:[#allocation2 + $0x1f8] sm:$0xff]
    %v246 = vld [vmem:[#allocation2 + $0x200] sm:$0xff]
    %v247 = vld [vmem:[#allocation2 + $0x208] sm:$0xff]
    %v248 = vld [vmem:[#allocation2 + $0x210] sm:$0xff]
    %v249 = vld [vmem:[#allocation2 + $0x218] sm:$0xff]
    %v250 = vld [vmem:[#allocation2 + $0x220] sm:$0xff]
    %v251 = vld [vmem:[#allocation2 + $0x228] sm:$0xff]
    %v252 = vld [vmem:[#allocation2 + $0x230] sm:$0xff]
    %v253 = vld [vmem:[#allocation2 + $0x238] sm:$0xff]
    %v254 = vld [vmem:[#allocation2 + $0x240] sm:$0xff]
    %v255 = vld [vmem:[#allocation2 + $0x248] sm:$0xff]
    %v256 = vld [vmem:[#allocation2 + $0x250] sm:$0xff]
    %v257 = vld [vmem:[#allocation2 + $0x258] sm:$0xff]
    %v258 = vld [vmem:[#allocation2 + $0x260] sm:$0xff]
    %v259 = vld [vmem:[#allocation2 + $0x268] sm:$0xff]
    %v260 = vld [vmem:[#allocation2 + $0x270] sm:$0xff]
    %v261 = vld [vmem:[#allocation2 + $0x278] sm:$0xff]
    %v262 = vld [vmem:[#allocation2 + $0x280] sm:$0xff]
    %v263 = vld [vmem:[#allocation2 + $0x288] sm:$0xff]
    %v264 = vld [vmem:[#allocation2 + $0x290] sm:$0xff]
    %v265 = vld [vmem:[#allocation2 + $0x298] sm:$0xff]
    %v266 = vld [vmem:[#allocation2 + $0x2a0] sm:$0xff]
    %v267 = vld [vmem:[#allocation2 + $0x2a8] sm:$0xff]
    %v268 = vld [vmem:[#allocation2 + $0x2b0] sm:$0xff]
    %v269 = vld [vmem:[#allocation2 + $0x2b8] sm:$0xff]
    %v270 = vld [vmem:[#allocation2 + $0x2c0] sm:$0xff]
    %v271 = vld [vmem:[#allocation2 + $0x2c8] sm:$0xff]
    %v272 = vld [vmem:[#allocation2 + $0x2d0] sm:$0xff]
    %v273 = vld [vmem:[#allocation2 + $0x2d8] sm:$0xff]
    %v274 = vld [vmem:[#allocation2 + $0x2e0] sm:$0xff]
    %v275 = vld [vmem:[#allocation2 + $0x2e8] sm:$0xff]
    %v276 = vld [vmem:[#allocation2 + $0x2f0] sm:$0xff]
    %v277 = vld [vmem:[#allocation2 + $0x2f8] sm:$0xff]
    %v278 = vld [vmem:[#allocation2 + $0x300] sm:$0xff]
    %v279 = vld [vmem:[#allocation2 + $0x308] sm:$0xff]
    %v280 = vld [vmem:[#allocation2 + $0x310] sm:$0xff]
    %v281 = vld [vmem:[#allocation2 + $0x318] sm:$0xff]
    %v282 = vld [vmem:[#allocation2 + $0x320] sm:$0xff]
    %v283 = vld [vmem:[#allocation2 + $0x328] sm:$0xff]
    %v284 = vld [vmem:[#allocation2 + $0x330] sm:$0xff]
    %v285 = vld [vmem:[#allocation2 + $0x338] sm:$0xff]
    %v286 = vld [vmem:[#allocation2 + $0x340] sm:$0xff]
    %v287 = vld [vmem:[#allocation2 + $0x348] sm:$0xff]
    %v288 = vld [vmem:[#allocation2 + $0x350] sm:$0xff]
    %v289 = vld [vmem:[#allocation2 + $0x358] sm:$0xff]
    %v290 = vld [vmem:[#allocation2 + $0x360] sm:$0xff]
    %v291 = vld [vmem:[#allocation2 + $0x368] sm:$0xff]
    %v292 = vld [vmem:[#allocation2 + $0x370] sm:$0xff]
    %v293 = vld [vmem:[#allocation2 + $0x378] sm:$0xff]
    %v294 = vld [vmem:[#allocation2 + $0x380] sm:$0xff]
    %v295 = vld [vmem:[#allocation2 + $0x388] sm:$0xff]
    %v296 = vld [vmem:[#allocation2 + $0x390] sm:$0xff]
    %v297 = vld [vmem:[#allocation2 + $0x398] sm:$0xff]
    %v298 = vld [vmem:[#allocation2 + $0x3a0] sm:$0xff]
    %v299 = vld [vmem:[#allocation2 + $0x3a8] sm:$0xff]
    %v300 = vld [vmem:[#allocation2 + $0x3b0] sm:$0xff]
    %v301 = vld [vmem:[#allocation2 + $0x3b8] sm:$0xff]
    %v302 = vld [vmem:[#allocation2 + $0x3c0] sm:$0xff]
    %v303 = vld [vmem:[#allocation2 + $0x3c8] sm:$0xff]
    %v304 = vld [vmem:[#allocation2 + $0x3d0] sm:$0xff]
    %v305 = vld [vmem:[#allocation2 + $0x3d8] sm:$0xff]
    %v306 = vld [vmem:[#allocation2 + $0x3e0] sm:$0xff]
    %v307 = vld [vmem:[#allocation2 + $0x3e8] sm:$0xff]
    %v308 = vld [vmem:[#allocation2 + $0x3f0] sm:$0xff]
    %v309 = vld [vmem:[#allocation2 + $0x3f8] sm:$0xff]
    %v310 = vld [vmem:[#allocation2 + $0x400] sm:$0xff]
    %v311 = vld [vmem:[#allocation2 + $0x408] sm:$0xff]
    %v312 = vld [vmem:[#allocation2 + $0x410] sm:$0xff]
    %v313 = vld [vmem:[#allocation2 + $0x418] sm:$0xff]
    %v314 = vld [vmem:[#allocation2 + $0x420] sm:$0xff]
    %v315 = vld [vmem:[#allocation2 + $0x428] sm:$0xff]
    %v316 = vld [vmem:[#allocation2 + $0x430] sm:$0xff]
    %v317 = vld [vmem:[#allocation2 + $0x438] sm:$0xff]
    %v318 = vld [vmem:[#allocation2 + $0x440] sm:$0xff]
    %v319 = vld [vmem:[#allocation2 + $0x448] sm:$0xff]
    %v320 = vld [vmem:[#allocation2 + $0x450] sm:$0xff]
    %v321 = vld [vmem:[#allocation2 + $0x458] sm:$0xff]
    %v322 = vld [vmem:[#allocation2 + $0x460] sm:$0xff]
    %v323 = vld [vmem:[#allocation2 + $0x468] sm:$0xff]
    %v324 = vld [vmem:[#allocation2 + $0x470] sm:$0xff]
    %v325 = vld [vmem:[#allocation2 + $0x478] sm:$0xff]
    %v326 = vld [vmem:[#allocation2 + $0x480] sm:$0xff]
    %v327 = vld [vmem:[#allocation2 + $0x488] sm:$0xff]
    %v328 = vld [vmem:[#allocation2 + $0x490] sm:$0xff]
    %v329 = vld [vmem:[#allocation2 + $0x498] sm:$0xff]
    %v330 = vld [vmem:[#allocation2 + $0x4a0] sm:$0xff]
    %v331 = vld [vmem:[#allocation2 + $0x4a8] sm:$0xff]
    %v332 = vld [vmem:[#allocation2 + $0x4b0] sm:$0xff]
    %v333 = vld [vmem:[#allocation2 + $0x4b8] sm:$0xff]
    %v334 = vld [vmem:[#allocation2 + $0x4c0] sm:$0xff]
    %v335 = vld [vmem:[#allocation2 + $0x4c8] sm:$0xff]
    %v336 = vld [vmem:[#allocation2 + $0x4d0] sm:$0xff]
    %v337 = vld [vmem:[#allocation2 + $0x4d8] sm:$0xff]
    %v338 = vld [vmem:[#allocation2 + $0x4e0] sm:$0xff]
    %v339 = vld [vmem:[#allocation2 + $0x4e8] sm:$0xff]
    %v340 = vld [vmem:[#allocation2 + $0x4f0] sm:$0xff]
    %v341 = vld [vmem:[#allocation2 + $0x4f8] sm:$0xff]
    %v342 = vld [vmem:[#allocation2 + $0x500] sm:$0xff]
    %v343 = vld [vmem:[#allocation2 + $0x508] sm:$0xff]
    %v344 = vld [vmem:[#allocation2 + $0x510] sm:$0xff]
    %v345 = vld [vmem:[#allocation2 + $0x518] sm:$0xff]
    %v346 = vld [vmem:[#allocation2 + $0x520] sm:$0xff]
    %v347 = vld [vmem:[#allocation2 + $0x528] sm:$0xff]
    %v348 = vld [vmem:[#allocation2 + $0x530] sm:$0xff]
    %v349 = vld [vmem:[#allocation2 + $0x538] sm:$0xff]
    %v350 = vld [vmem:[#allocation2 + $0x540] sm:$0xff]
    %v351 = vld [vmem:[#allocation2 + $0x548] sm:$0xff]
    %v352 = vld [vmem:[#allocation2 + $0x550] sm:$0xff]
    %v353 = vld [vmem:[#allocation2 + $0x558] sm:$0xff]
    %v354 = vld [vmem:[#allocation2 + $0x560] sm:$0xff]
    %v355 = vld [vmem:[#allocation2 + $0x568] sm:$0xff]
    %v356 = vld [vmem:[#allocation2 + $0x570] sm:$0xff]
    %v357 = vld [vmem:[#allocation2 + $0x578] sm:$0xff]
    %v358 = vld [vmem:[#allocation2 + $0x580] sm:$0xff]
    %v359 = vld [vmem:[#allocation2 + $0x588] sm:$0xff]
    %v360 = vld [vmem:[#allocation2 + $0x590] sm:$0xff]
    %v361 = vld [vmem:[#allocation2 + $0x598] sm:$0xff]
    %v362 = vld [vmem:[#allocation2 + $0x5a0] sm:$0xff]
    %v363 = vld [vmem:[#allocation2 + $0x5a8] sm:$0xff]
    %v364 = vld [vmem:[#allocation2 + $0x5b0] sm:$0xff]
    %v365 = vld [vmem:[#allocation2 + $0x5b8] sm:$0xff]
    %v366 = vld [vmem:[#allocation2 + $0x5c0] sm:$0xff]
    %v367 = vld [vmem:[#allocation2 + $0x5c8] sm:$0xff]
    %v368 = vld [vmem:[#allocation2 + $0x5d0] sm:$0xff]
    %v369 = vld [vmem:[#allocation2 + $0x5d8] sm:$0xff]
    %v370 = vld [vmem:[#allocation2 + $0x5e0] sm:$0xff]
    %v371 = vld [vmem:[#allocation2 + $0x5e8] sm:$0xff]
    %v372 = vld [vmem:[#allocation2 + $0x5f0] sm:$0xff]
    %v373 = vld [vmem:[#allocation2 + $0x5f8] sm:$0xff]
    %v374 = vld [vmem:[#allocation2 + $0x600] sm:$0xff]
    %v375 = vld [vmem:[#allocation2 + $0x608] sm:$0xff]
    %v376 = vld [vmem:[#allocation2 + $0x610] sm:$0xff]
    %v377 = vld [vmem:[#allocation2 + $0x618] sm:$0xff]
    %v378 = vld [vmem:[#allocation2 + $0x620] sm:$0xff]
    %v379 = vld [vmem:[#allocation2 + $0x628] sm:$0xff]
    %v380 = vld [vmem:[#allocation2 + $0x630] sm:$0xff]
    %v381 = vld [vmem:[#allocation2 + $0x638] sm:$0xff]
    %v382 = vld [vmem:[#allocation2 + $0x640] sm:$0xff]
    %v383 = vld [vmem:[#allocation2 + $0x648] sm:$0xff]
    %v384 = vld [vmem:[#allocation2 + $0x650] sm:$0xff]
    %v385 = vld [vmem:[#allocation2 + $0x658] sm:$0xff]
    %v386 = vld [vmem:[#allocation2 + $0x660] sm:$0xff]
    %v387 = vld [vmem:[#allocation2 + $0x668] sm:$0xff]
    %v388 = vld [vmem:[#allocation2 + $0x670] sm:$0xff]
    %v389 = vld [vmem:[#allocation2 + $0x678] sm:$0xff]
    %v390 = vld [vmem:[#allocation2 + $0x680] sm:$0xff]
    %v391 = vld [vmem:[#allocation2 + $0x688] sm:$0xff]
    %v392 = vld [vmem:[#allocation2 + $0x690] sm:$0xff]
    %v393 = vld [vmem:[#allocation2 + $0x698] sm:$0xff]
    %v394 = vld [vmem:[#allocation2 + $0x6a0] sm:$0xff]
    %v395 = vld [vmem:[#allocation2 + $0x6a8] sm:$0xff]
    %v396 = vld [vmem:[#allocation2 + $0x6b0] sm:$0xff]
    %v397 = vld [vmem:[#allocation2 + $0x6b8] sm:$0xff]
    %v398 = vld [vmem:[#allocation2 + $0x6c0] sm:$0xff]
    %v399 = vld [vmem:[#allocation2 + $0x6c8] sm:$0xff]
    %v400 = vld [vmem:[#allocation2 + $0x6d0] sm:$0xff]
    %v401 = vld [vmem:[#allocation2 + $0x6d8] sm:$0xff]
    %v402 = vld [vmem:[#allocation2 + $0x6e0] sm:$0xff]
    %v403 = vld [vmem:[#allocation2 + $0x6e8] sm:$0xff]
    %v404 = vld [vmem:[#allocation2 + $0x6f0] sm:$0xff]
    %v405 = vld [vmem:[#allocation2 + $0x6f8] sm:$0xff]
    %v406 = vld [vmem:[#allocation2 + $0x700] sm:$0xff]
    %v407 = vld [vmem:[#allocation2 + $0x708] sm:$0xff]
    %v408 = vld [vmem:[#allocation2 + $0x710] sm:$0xff]
    %v409 = vld [vmem:[#allocation2 + $0x718] sm:$0xff]
    %v410 = vld [vmem:[#allocation2 + $0x720] sm:$0xff]
    %v411 = vld [vmem:[#allocation2 + $0x728] sm:$0xff]
    %v412 = vld [vmem:[#allocation2 + $0x730] sm:$0xff]
    %v413 = vld [vmem:[#allocation2 + $0x738] sm:$0xff]
    %v414 = vld [vmem:[#allocation2 + $0x740] sm:$0xff]
    %v415 = vld [vmem:[#allocation2 + $0x748] sm:$0xff]
    %v416 = vld [vmem:[#allocation2 + $0x750] sm:$0xff]
    %v417 = vld [vmem:[#allocation2 + $0x758] sm:$0xff]
    %v418 = vld [vmem:[#allocation2 + $0x760] sm:$0xff]
    %v419 = vld [vmem:[#allocation2 + $0x768] sm:$0xff]
    %v420 = vld [vmem:[#allocation2 + $0x770] sm:$0xff]
    %v421 = vld [vmem:[#allocation2 + $0x778] sm:$0xff]
    %v422 = vld [vmem:[#allocation2 + $0x780] sm:$0xff]
    %v423 = vld [vmem:[#allocation2 + $0x788] sm:$0xff]
    %v424 = vld [vmem:[#allocation2 + $0x790] sm:$0xff]
    %v425 = vld [vmem:[#allocation2 + $0x798] sm:$0xff]
    %v426 = vld [vmem:[#allocation2 + $0x7a0] sm:$0xff]
    %v427 = vld [vmem:[#allocation2 + $0x7a8] sm:$0xff]
    %v428 = vld [vmem:[#allocation2 + $0x7b0] sm:$0xff]
    %v429 = vld [vmem:[#allocation2 + $0x7b8] sm:$0xff]
    %v430 = vld [vmem:[#allocation2 + $0x7c0] sm:$0xff]
    %v431 = vld [vmem:[#allocation2 + $0x7c8] sm:$0xff]
    %v432 = vld [vmem:[#allocation2 + $0x7d0] sm:$0xff]
    %v433 = vld [vmem:[#allocation2 + $0x7d8] sm:$0xff]
    %v434 = vld [vmem:[#allocation2 + $0x7e0] sm:$0xff]
    %v435 = vld [vmem:[#allocation2 + $0x7e8] sm:$0xff]
    %v436 = vld [vmem:[#allocation2 + $0x7f0] sm:$0xff]
    %v437 = vld [vmem:[#allocation2 + $0x7f8] sm:$0xff]
    %v438 = vld [vmem:[#allocation2 + $0x800] sm:$0xff]
    %v439 = vld [vmem:[#allocation2 + $0x808] sm:$0xff]
    %v440 = vld [vmem:[#allocation2 + $0x810] sm:$0xff]
    %v441 = vld [vmem:[#allocation2 + $0x818] sm:$0xff]
    %v442 = vld [vmem:[#allocation2 + $0x820] sm:$0xff]
    %v443 = vld [vmem:[#allocation2 + $0x828] sm:$0xff]
    %v444 = vld [vmem:[#allocation2 + $0x830] sm:$0xff]
    %v445 = vld [vmem:[#allocation2 + $0x838] sm:$0xff]
    %v446 = vld [vmem:[#allocation2 + $0x840] sm:$0xff]
    %v447 = vld [vmem:[#allocation2 + $0x848] sm:$0xff]
    %v448 = vld [vmem:[#allocation2 + $0x850] sm:$0xff]
    %v449 = vld [vmem:[#allocation2 + $0x858] sm:$0xff]
    %v450 = vld [vmem:[#allocation2 + $0x860] sm:$0xff]
    %v451 = vld [vmem:[#allocation2 + $0x868] sm:$0xff]
    %v452 = vld [vmem:[#allocation2 + $0x870] sm:$0xff]
    %v453 = vld [vmem:[#allocation2 + $0x878] sm:$0xff]
    %v454 = vld [vmem:[#allocation2 + $0x880] sm:$0xff]
    %v455 = vld [vmem:[#allocation2 + $0x888] sm:$0xff]
    %v456 = vld [vmem:[#allocation2 + $0x890] sm:$0xff]
    %v457 = vld [vmem:[#allocation2 + $0x898] sm:$0xff]
    %v458 = vld [vmem:[#allocation2 + $0x8a0] sm:$0xff]
    %v459 = vld [vmem:[#allocation2 + $0x8a8] sm:$0xff]
    %v460 = vld [vmem:[#allocation2 + $0x8b0] sm:$0xff]
    %v461 = vld [vmem:[#allocation2 + $0x8b8] sm:$0xff]
    %v462 = vld [vmem:[#allocation2 + $0x8c0] sm:$0xff]
    %v463 = vld [vmem:[#allocation2 + $0x8c8] sm:$0xff]
    %v464 = vld [vmem:[#allocation2 + $0x8d0] sm:$0xff]
    %v465 = vld [vmem:[#allocation2 + $0x8d8] sm:$0xff]
    %v466 = vld [vmem:[#allocation2 + $0x8e0] sm:$0xff]
    %v467 = vld [vmem:[#allocation2 + $0x8e8] sm:$0xff]
    %v468 = vld [vmem:[#allocation2 + $0x8f0] sm:$0xff]
    %v469 = vld [vmem:[#allocation2 + $0x8f8] sm:$0xff]
    %v470 = vld [vmem:[#allocation2 + $0x900] sm:$0xff]
    %v471 = vld [vmem:[#allocation2 + $0x908] sm:$0xff]
    %v472 = vld [vmem:[#allocation2 + $0x910] sm:$0xff]
    %v473 = vld [vmem:[#allocation2 + $0x918] sm:$0xff]
    %v474 = vld [vmem:[#allocation2 + $0x920] sm:$0xff]
    %v475 = vld [vmem:[#allocation2 + $0x928] sm:$0xff]
    %v476 = vld [vmem:[#allocation2 + $0x930] sm:$0xff]
    %v477 = vld [vmem:[#allocation2 + $0x938] sm:$0xff]
    %v478 = vld [vmem:[#allocation2 + $0x940] sm:$0xff]
    %v479 = vld [vmem:[#allocation2 + $0x948] sm:$0xff]
    %v480 = vld [vmem:[#allocation2 + $0x950] sm:$0xff]
    %v481 = vld [vmem:[#allocation2 + $0x958] sm:$0xff]
    %v482 = vld [vmem:[#allocation2 + $0x960] sm:$0xff]
    %v483 = vld [vmem:[#allocation2 + $0x968] sm:$0xff]
    %v484 = vld [vmem:[#allocation2 + $0x970] sm:$0xff]
    %v485 = vld [vmem:[#allocation2 + $0x978] sm:$0xff]
    %v486 = vld [vmem:[#allocation2 + $0x980] sm:$0xff]
    %v487 = vld [vmem:[#allocation2 + $0x988] sm:$0xff]
    %v488 = vld [vmem:[#allocation2 + $0x990] sm:$0xff]
    %v489 = vld [vmem:[#allocation2 + $0x998] sm:$0xff]
    %v490 = vld [vmem:[#allocation2 + $0x9a0] sm:$0xff]
    %v491 = vld [vmem:[#allocation2 + $0x9a8] sm:$0xff]
    %v492 = vld [vmem:[#allocation2 + $0x9b0] sm:$0xff]
    %v493 = vld [vmem:[#allocation2 + $0x9b8] sm:$0xff]
    %v494 = vld [vmem:[#allocation2 + $0x9c0] sm:$0xff]
    %v495 = vld [vmem:[#allocation2 + $0x9c8] sm:$0xff]
    %v496 = vld [vmem:[#allocation2 + $0x9d0] sm:$0xff]
    %v497 = vld [vmem:[#allocation2 + $0x9d8] sm:$0xff]
    %v498 = vld [vmem:[#allocation2 + $0x9e0] sm:$0xff]
    %v499 = vld [vmem:[#allocation2 + $0x9e8] sm:$0xff]
    %v500 = vld [vmem:[#allocation2 + $0x9f0] sm:$0xff]
    %v501 = vld [vmem:[#allocation2 + $0x9f8] sm:$0xff]
    %v502 = vld [vmem:[#allocation2 + $0xa00] sm:$0xff]
    %v503 = vld [vmem:[#allocation2 + $0xa08] sm:$0xff]
    %v504 = vld [vmem:[#allocation2 + $0xa10] sm:$0xff]
    %v505 = vld [vmem:[#allocation2 + $0xa18] sm:$0xff]
    %v506 = vld [vmem:[#allocation2 + $0xa20] sm:$0xff]
    %v507 = vld [vmem:[#allocation2 + $0xa28] sm:$0xff]
    %v508 = vld [vmem:[#allocation2 + $0xa30] sm:$0xff]
    %v509 = vld [vmem:[#allocation2 + $0xa38] sm:$0xff]
    %v510 = vld [vmem:[#allocation2 + $0xa40] sm:$0xff]
    %v511 = vld [vmem:[#allocation2 + $0xa48] sm:$0xff]
    %v512 = vld [vmem:[#allocation2 + $0xa50] sm:$0xff]
    %v513 = vld [vmem:[#allocation2 + $0xa58] sm:$0xff]
    %v514 = vld [vmem:[#allocation2 + $0xa60] sm:$0xff]
    %v515 = vld [vmem:[#allocation2 + $0xa68] sm:$0xff]
    %v516 = vld [vmem:[#allocation2 + $0xa70] sm:$0xff]
    %v517 = vld [vmem:[#allocation2 + $0xa78] sm:$0xff]
    %v518 = vld [vmem:[#allocation2 + $0xa80] sm:$0xff]
    %v519 = vld [vmem:[#allocation2 + $0xa88] sm:$0xff]
    %v520 = vld [vmem:[#allocation2 + $0xa90] sm:$0xff]
    %v521 = vld [vmem:[#allocation2 + $0xa98] sm:$0xff]
    %v522 = vld [vmem:[#allocation2 + $0xaa0] sm:$0xff]
    %v523 = vld [vmem:[#allocation2 + $0xaa8] sm:$0xff]
    %v524 = vld [vmem:[#allocation2 + $0xab0] sm:$0xff]
    %v525 = vld [vmem:[#allocation2 + $0xab8] sm:$0xff]
    %v526 = vld [vmem:[#allocation2 + $0xac0] sm:$0xff]
    %v527 = vld [vmem:[#allocation2 + $0xac8] sm:$0xff]
    %v528 = vld [vmem:[#allocation2 + $0xad0] sm:$0xff]
    %v529 = vld [vmem:[#allocation2 + $0xad8] sm:$0xff]
    %v530 = vld [vmem:[#allocation2 + $0xae0] sm:$0xff]
    %v531 = vld [vmem:[#allocation2 + $0xae8] sm:$0xff]
    %v532 = vld [vmem:[#allocation2 + $0xaf0] sm:$0xff]
    %v533 = vld [vmem:[#allocation2 + $0xaf8] sm:$0xff]
    %v534 = vld [vmem:[#allocation2 + $0xb00] sm:$0xff]
    %v535 = vld [vmem:[#allocation2 + $0xb08] sm:$0xff]
    %v536 = vld [vmem:[#allocation2 + $0xb10] sm:$0xff]
    %v537 = vld [vmem:[#allocation2 + $0xb18] sm:$0xff]
    %v538 = vld [vmem:[#allocation2 + $0xb20] sm:$0xff]
    %v539 = vld [vmem:[#allocation2 + $0xb28] sm:$0xff]
    %v540 = vld [vmem:[#allocation2 + $0xb30] sm:$0xff]
    %v541 = vld [vmem:[#allocation2 + $0xb38] sm:$0xff]
    %v542 = vld [vmem:[#allocation2 + $0xb40] sm:$0xff]
    %v543 = vld [vmem:[#allocation2 + $0xb48] sm:$0xff]
    %v544 = vld [vmem:[#allocation2 + $0xb50] sm:$0xff]
    %v545 = vld [vmem:[#allocation2 + $0xb58] sm:$0xff]
    %v546 = vld [vmem:[#allocation2 + $0xb60] sm:$0xff]
    %v547 = vld [vmem:[#allocation2 + $0xb68] sm:$0xff]
    %v548 = vld [vmem:[#allocation2 + $0xb70] sm:$0xff]
    %v549 = vld [vmem:[#allocation2 + $0xb78] sm:$0xff]
    %v550 = vld [vmem:[#allocation2 + $0xb80] sm:$0xff]
    %v551 = vld [vmem:[#allocation2 + $0xb88] sm:$0xff]
    %v552 = vld [vmem:[#allocation2 + $0xb90] sm:$0xff]
    %v553 = vld [vmem:[#allocation2 + $0xb98] sm:$0xff]
    %v554 = vld [vmem:[#allocation2 + $0xba0] sm:$0xff]
    %v555 = vld [vmem:[#allocation2 + $0xba8] sm:$0xff]
    %v556 = vld [vmem:[#allocation2 + $0xbb0] sm:$0xff]
    %v557 = vld [vmem:[#allocation2 + $0xbb8] sm:$0xff]
    %v558 = vld [vmem:[#allocation2 + $0xbc0] sm:$0xff]
    %v559 = vld [vmem:[#allocation2 + $0xbc8] sm:$0xff]
    %v560 = vld [vmem:[#allocation2 + $0xbd0] sm:$0xff]
    %v561 = vld [vmem:[#allocation2 + $0xbd8] sm:$0xff]
    %v562 = vld [vmem:[#allocation2 + $0xbe0] sm:$0xff]
    %v563 = vld [vmem:[#allocation2 + $0xbe8] sm:$0xff]
    %v564 = vld [vmem:[#allocation2 + $0xbf0] sm:$0xff]
    %v565 = vld [vmem:[#allocation2 + $0xbf8] sm:$0xff]
    %v566 = vld [vmem:[#allocation4] sm:$0xff]
    %v568 = vlaneseq
    %v569 = vshrl.u32 %v568, 7
    %v570 = vsub.s32 0, %v569
    %v571 = vrot.slane %v566, %v570
    %v572 = vlaneseq
    %v573 = vshrl.u32 %v572, 7
    %v574 = vsub.s32 1, %v573
    %v575 = vrot.slane %v566, %v574
    %v576 = vlaneseq
    %v577 = vshrl.u32 %v576, 7
    %v578 = vsub.s32 2, %v577
    %v579 = vrot.slane %v566, %v578
    %v580 = vlaneseq
    %v581 = vshrl.u32 %v580, 7
    %v582 = vsub.s32 3, %v581
    %v583 = vrot.slane %v566, %v582
    %v584 = vlaneseq
    %v585 = vshrl.u32 %v584, 7
    %v586 = vsub.s32 4, %v585
    %v587 = vrot.slane %v566, %v586
    %v588 = vlaneseq
    %v589 = vshrl.u32 %v588, 7
    %v590 = vsub.s32 5, %v589
    %v591 = vrot.slane %v566, %v590
    %v592 = vlaneseq
    %v593 = vshrl.u32 %v592, 7
    %v594 = vsub.s32 6, %v593
    %v595 = vrot.slane %v566, %v594
    %v596 = vlaneseq
    %v597 = vshrl.u32 %v596, 7
    %v598 = vsub.s32 7, %v597
    %v599 = vrot.slane %v566, %v598
    %v656 = vunpack.c.l.b16 %v134
    %v657 = vunpack.c.h.b16 %v134
    %v658 = vunpack.c.l.b16 %v135
    %v659 = vunpack.c.h.b16 %v135
    %v660 = vunpack.c.l.b16 %v136
    %v661 = vunpack.c.h.b16 %v136
    %v662 = vunpack.c.l.b16 %v137
    %v663 = vunpack.c.h.b16 %v137
    %v664 = vunpack.c.l.b16 %v138
    %v665 = vunpack.c.h.b16 %v138
    %v666 = vunpack.c.l.b16 %v139
    %v667 = vunpack.c.h.b16 %v139
    %v668 = vunpack.c.l.b16 %v140
    %v669 = vunpack.c.h.b16 %v140
    %v670 = vunpack.c.l.b16 %v141
    %v671 = vunpack.c.h.b16 %v141
    %v672 = vunpack.c.l.b16 %v142
    %v673 = vunpack.c.h.b16 %v142
    %v674 = vunpack.c.l.b16 %v143
    %v675 = vunpack.c.h.b16 %v143
    %v676 = vunpack.c.l.b16 %v144
    %v677 = vunpack.c.h.b16 %v144
    %v678 = vunpack.c.l.b16 %v145
    %v679 = vunpack.c.h.b16 %v145
    %v680 = vunpack.c.l.b16 %v146
    %v681 = vunpack.c.h.b16 %v146
    %v682 = vunpack.c.l.b16 %v147
    %v683 = vunpack.c.h.b16 %v147
    %v684 = vunpack.c.l.b16 %v148
    %v685 = vunpack.c.h.b16 %v148
    %v686 = vunpack.c.l.b16 %v149
    %v687 = vunpack.c.h.b16 %v149
    %v688 = vunpack.c.l.b16 %v150
    %v689 = vunpack.c.h.b16 %v150
    %v690 = vunpack.c.l.b16 %v151
    %v691 = vunpack.c.h.b16 %v151
    %v692 = vunpack.c.l.b16 %v152
    %v693 = vunpack.c.h.b16 %v152
    %v694 = vunpack.c.l.b16 %v153
    %v695 = vunpack.c.h.b16 %v153
    %v696 = vunpack.c.l.b16 %v154
    %v697 = vunpack.c.h.b16 %v154
    %v698 = vunpack.c.l.b16 %v155
    %v699 = vunpack.c.h.b16 %v155
    %v700 = vunpack.c.l.b16 %v156
    %v701 = vunpack.c.h.b16 %v156
    %v702 = vunpack.c.l.b16 %v157
    %v703 = vunpack.c.h.b16 %v157
    %v704 = vunpack.c.l.b16 %v158
    %v705 = vunpack.c.h.b16 %v158
    %v706 = vunpack.c.l.b16 %v159
    %v707 = vunpack.c.h.b16 %v159
    %v708 = vunpack.c.l.b16 %v160
    %v709 = vunpack.c.h.b16 %v160
    %v710 = vunpack.c.l.b16 %v161
    %v711 = vunpack.c.h.b16 %v161
    %v712 = vunpack.c.l.b16 %v162
    %v713 = vunpack.c.h.b16 %v162
    %v714 = vunpack.c.l.b16 %v163
    %v715 = vunpack.c.h.b16 %v163
    %v716 = vunpack.c.l.b16 %v164
    %v717 = vunpack.c.h.b16 %v164
    %v718 = vunpack.c.l.b16 %v165
    %v719 = vunpack.c.h.b16 %v165
    %v720 = vunpack.c.l.b16 %v166
    %v721 = vunpack.c.h.b16 %v166
    %v722 = vunpack.c.l.b16 %v167
    %v723 = vunpack.c.h.b16 %v167
    %v724 = vunpack.c.l.b16 %v168
    %v725 = vunpack.c.h.b16 %v168
    %v726 = vunpack.c.l.b16 %v169
    %v727 = vunpack.c.h.b16 %v169
    %v728 = vunpack.c.l.b16 %v170
    %v729 = vunpack.c.h.b16 %v170
    %v730 = vunpack.c.l.b16 %v171
    %v731 = vunpack.c.h.b16 %v171
    %v732 = vunpack.c.l.b16 %v172
    %v733 = vunpack.c.h.b16 %v172
    %v734 = vunpack.c.l.b16 %v173
    %v735 = vunpack.c.h.b16 %v173
    %v736 = vunpack.c.l.b16 %v174
    %v737 = vunpack.c.h.b16 %v174
    %v738 = vunpack.c.l.b16 %v175
    %v739 = vunpack.c.h.b16 %v175
    %v740 = vunpack.c.l.b16 %v176
    %v741 = vunpack.c.h.b16 %v176
    %v742 = vunpack.c.l.b16 %v177
    %v743 = vunpack.c.h.b16 %v177
    %v744 = vunpack.c.l.b16 %v178
    %v745 = vunpack.c.h.b16 %v178
    %v746 = vunpack.c.l.b16 %v179
    %v747 = vunpack.c.h.b16 %v179
    %v748 = vunpack.c.l.b16 %v180
    %v749 = vunpack.c.h.b16 %v180
    %v750 = vunpack.c.l.b16 %v181
    %v751 = vunpack.c.h.b16 %v181
    %v752 = vpack.c.b16 %v662, %v656
    %v753 = vpack.c.b16 %v663, %v657
    %v754 = vpack.c.b16 %v664, %v658
    %v755 = vpack.c.b16 %v665, %v659
    %v756 = vpack.c.b16 %v666, %v660
    %v757 = vpack.c.b16 %v667, %v661
    %v758 = vpack.c.b16 %v674, %v668
    %v759 = vpack.c.b16 %v675, %v669
    %v760 = vpack.c.b16 %v676, %v670
    %v761 = vpack.c.b16 %v677, %v671
    %v762 = vpack.c.b16 %v678, %v672
    %v763 = vpack.c.b16 %v679, %v673
    %v764 = vpack.c.b16 %v686, %v680
    %v765 = vpack.c.b16 %v687, %v681
    %v766 = vpack.c.b16 %v688, %v682
    %v767 = vpack.c.b16 %v689, %v683
    %v768 = vpack.c.b16 %v690, %v684
    %v769 = vpack.c.b16 %v691, %v685
    %v770 = vpack.c.b16 %v698, %v692
    %v771 = vpack.c.b16 %v699, %v693
    %v772 = vpack.c.b16 %v700, %v694
    %v773 = vpack.c.b16 %v701, %v695
    %v774 = vpack.c.b16 %v702, %v696
    %v775 = vpack.c.b16 %v703, %v697
    %v776 = vpack.c.b16 %v710, %v704
    %v777 = vpack.c.b16 %v711, %v705
    %v778 = vpack.c.b16 %v712, %v706
    %v779 = vpack.c.b16 %v713, %v707
    %v780 = vpack.c.b16 %v714, %v708
    %v781 = vpack.c.b16 %v715, %v709
    %v782 = vpack.c.b16 %v722, %v716
    %v783 = vpack.c.b16 %v723, %v717
    %v784 = vpack.c.b16 %v724, %v718
    %v785 = vpack.c.b16 %v725, %v719
    %v786 = vpack.c.b16 %v726, %v720
    %v787 = vpack.c.b16 %v727, %v721
    %v788 = vpack.c.b16 %v734, %v728
    %v789 = vpack.c.b16 %v735, %v729
    %v790 = vpack.c.b16 %v736, %v730
    %v791 = vpack.c.b16 %v737, %v731
    %v792 = vpack.c.b16 %v738, %v732
    %v793 = vpack.c.b16 %v739, %v733
    %v794 = vpack.c.b16 %v746, %v740
    %v795 = vpack.c.b16 %v747, %v741
    %v796 = vpack.c.b16 %v748, %v742
    %v797 = vpack.c.b16 %v749, %v743
    %v798 = vpack.c.b16 %v750, %v744
    %v799 = vpack.c.b16 %v751, %v745
    %v1232 = vunpack.c.l.b16 %v182
    %v1233 = vunpack.c.h.b16 %v182
    %v1234 = vunpack.c.l.b16 %v183
    %v1235 = vunpack.c.h.b16 %v183
    %v1236 = vunpack.c.l.b16 %v184
    %v1237 = vunpack.c.h.b16 %v184
    %v1238 = vunpack.c.l.b16 %v185
    %v1239 = vunpack.c.h.b16 %v185
    %v1240 = vunpack.c.l.b16 %v186
    %v1241 = vunpack.c.h.b16 %v186
    %v1242 = vunpack.c.l.b16 %v187
    %v1243 = vunpack.c.h.b16 %v187
    %v1244 = vunpack.c.l.b16 %v188
    %v1245 = vunpack.c.h.b16 %v188
    %v1246 = vunpack.c.l.b16 %v189
    %v1247 = vunpack.c.h.b16 %v189
    %v1248 = vunpack.c.l.b16 %v190
    %v1249 = vunpack.c.h.b16 %v190
    %v1250 = vunpack.c.l.b16 %v191
    %v1251 = vunpack.c.h.b16 %v191
    %v1252 = vunpack.c.l.b16 %v192
    %v1253 = vunpack.c.h.b16 %v192
    %v1254 = vunpack.c.l.b16 %v193
    %v1255 = vunpack.c.h.b16 %v193
    %v1256 = vunpack.c.l.b16 %v194
    %v1257 = vunpack.c.h.b16 %v194
    %v1258 = vunpack.c.l.b16 %v195
    %v1259 = vunpack.c.h.b16 %v195
    %v1260 = vunpack.c.l.b16 %v196
    %v1261 = vunpack.c.h.b16 %v196
    %v1262 = vunpack.c.l.b16 %v197
    %v1263 = vunpack.c.h.b16 %v197
    %v1264 = vunpack.c.l.b16 %v198
    %v1265 = vunpack.c.h.b16 %v198
    %v1266 = vunpack.c.l.b16 %v199
    %v1267 = vunpack.c.h.b16 %v199
    %v1268 = vunpack.c.l.b16 %v200
    %v1269 = vunpack.c.h.b16 %v200
    %v1270 = vunpack.c.l.b16 %v201
    %v1271 = vunpack.c.h.b16 %v201
    %v1272 = vunpack.c.l.b16 %v202
    %v1273 = vunpack.c.h.b16 %v202
    %v1274 = vunpack.c.l.b16 %v203
    %v1275 = vunpack.c.h.b16 %v203
    %v1276 = vunpack.c.l.b16 %v204
    %v1277 = vunpack.c.h.b16 %v204
    %v1278 = vunpack.c.l.b16 %v205
    %v1279 = vunpack.c.h.b16 %v205
    %v1280 = vunpack.c.l.b16 %v206
    %v1281 = vunpack.c.h.b16 %v206
    %v1282 = vunpack.c.l.b16 %v207
    %v1283 = vunpack.c.h.b16 %v207
    %v1284 = vunpack.c.l.b16 %v208
    %v1285 = vunpack.c.h.b16 %v208
    %v1286 = vunpack.c.l.b16 %v209
    %v1287 = vunpack.c.h.b16 %v209
    %v1288 = vunpack.c.l.b16 %v210
    %v1289 = vunpack.c.h.b16 %v210
    %v1290 = vunpack.c.l.b16 %v211
    %v1291 = vunpack.c.h.b16 %v211
    %v1292 = vunpack.c.l.b16 %v212
    %v1293 = vunpack.c.h.b16 %v212
    %v1294 = vunpack.c.l.b16 %v213
    %v1295 = vunpack.c.h.b16 %v213
    %v1296 = vunpack.c.l.b16 %v214
    %v1297 = vunpack.c.h.b16 %v214
    %v1298 = vunpack.c.l.b16 %v215
    %v1299 = vunpack.c.h.b16 %v215
    %v1300 = vunpack.c.l.b16 %v216
    %v1301 = vunpack.c.h.b16 %v216
    %v1302 = vunpack.c.l.b16 %v217
    %v1303 = vunpack.c.h.b16 %v217
    %v1304 = vunpack.c.l.b16 %v218
    %v1305 = vunpack.c.h.b16 %v218
    %v1306 = vunpack.c.l.b16 %v219
    %v1307 = vunpack.c.h.b16 %v219
    %v1308 = vunpack.c.l.b16 %v220
    %v1309 = vunpack.c.h.b16 %v220
    %v1310 = vunpack.c.l.b16 %v221
    %v1311 = vunpack.c.h.b16 %v221
    %v1312 = vunpack.c.l.b16 %v222
    %v1313 = vunpack.c.h.b16 %v222
    %v1314 = vunpack.c.l.b16 %v223
    %v1315 = vunpack.c.h.b16 %v223
    %v1316 = vunpack.c.l.b16 %v224
    %v1317 = vunpack.c.h.b16 %v224
    %v1318 = vunpack.c.l.b16 %v225
    %v1319 = vunpack.c.h.b16 %v225
    %v1320 = vunpack.c.l.b16 %v226
    %v1321 = vunpack.c.h.b16 %v226
    %v1322 = vunpack.c.l.b16 %v227
    %v1323 = vunpack.c.h.b16 %v227
    %v1324 = vunpack.c.l.b16 %v228
    %v1325 = vunpack.c.h.b16 %v228
    %v1326 = vunpack.c.l.b16 %v229
    %v1327 = vunpack.c.h.b16 %v229
    %v1328 = vunpack.c.l.b16 %v230
    %v1329 = vunpack.c.h.b16 %v230
    %v1330 = vunpack.c.l.b16 %v231
    %v1331 = vunpack.c.h.b16 %v231
    %v1332 = vunpack.c.l.b16 %v232
    %v1333 = vunpack.c.h.b16 %v232
    %v1334 = vunpack.c.l.b16 %v233
    %v1335 = vunpack.c.h.b16 %v233
    %v1336 = vunpack.c.l.b16 %v234
    %v1337 = vunpack.c.h.b16 %v234
    %v1338 = vunpack.c.l.b16 %v235
    %v1339 = vunpack.c.h.b16 %v235
    %v1340 = vunpack.c.l.b16 %v236
    %v1341 = vunpack.c.h.b16 %v236
    %v1342 = vunpack.c.l.b16 %v237
    %v1343 = vunpack.c.h.b16 %v237
    %v1344 = vunpack.c.l.b16 %v238
    %v1345 = vunpack.c.h.b16 %v238
    %v1346 = vunpack.c.l.b16 %v239
    %v1347 = vunpack.c.h.b16 %v239
    %v1348 = vunpack.c.l.b16 %v240
    %v1349 = vunpack.c.h.b16 %v240
    %v1350 = vunpack.c.l.b16 %v241
    %v1351 = vunpack.c.h.b16 %v241
    %v1352 = vunpack.c.l.b16 %v242
    %v1353 = vunpack.c.h.b16 %v242
    %v1354 = vunpack.c.l.b16 %v243
    %v1355 = vunpack.c.h.b16 %v243
    %v1356 = vunpack.c.l.b16 %v244
    %v1357 = vunpack.c.h.b16 %v244
    %v1358 = vunpack.c.l.b16 %v245
    %v1359 = vunpack.c.h.b16 %v245
    %v1360 = vunpack.c.l.b16 %v246
    %v1361 = vunpack.c.h.b16 %v246
    %v1362 = vunpack.c.l.b16 %v247
    %v1363 = vunpack.c.h.b16 %v247
    %v1364 = vunpack.c.l.b16 %v248
    %v1365 = vunpack.c.h.b16 %v248
    %v1366 = vunpack.c.l.b16 %v249
    %v1367 = vunpack.c.h.b16 %v249
    %v1368 = vunpack.c.l.b16 %v250
    %v1369 = vunpack.c.h.b16 %v250
    %v1370 = vunpack.c.l.b16 %v251
    %v1371 = vunpack.c.h.b16 %v251
    %v1372 = vunpack.c.l.b16 %v252
    %v1373 = vunpack.c.h.b16 %v252
    %v1374 = vunpack.c.l.b16 %v253
    %v1375 = vunpack.c.h.b16 %v253
    %v1376 = vunpack.c.l.b16 %v254
    %v1377 = vunpack.c.h.b16 %v254
    %v1378 = vunpack.c.l.b16 %v255
    %v1379 = vunpack.c.h.b16 %v255
    %v1380 = vunpack.c.l.b16 %v256
    %v1381 = vunpack.c.h.b16 %v256
    %v1382 = vunpack.c.l.b16 %v257
    %v1383 = vunpack.c.h.b16 %v257
    %v1384 = vunpack.c.l.b16 %v258
    %v1385 = vunpack.c.h.b16 %v258
    %v1386 = vunpack.c.l.b16 %v259
    %v1387 = vunpack.c.h.b16 %v259
    %v1388 = vunpack.c.l.b16 %v260
    %v1389 = vunpack.c.h.b16 %v260
    %v1390 = vunpack.c.l.b16 %v261
    %v1391 = vunpack.c.h.b16 %v261
    %v1392 = vunpack.c.l.b16 %v262
    %v1393 = vunpack.c.h.b16 %v262
    %v1394 = vunpack.c.l.b16 %v263
    %v1395 = vunpack.c.h.b16 %v263
    %v1396 = vunpack.c.l.b16 %v264
    %v1397 = vunpack.c.h.b16 %v264
    %v1398 = vunpack.c.l.b16 %v265
    %v1399 = vunpack.c.h.b16 %v265
    %v1400 = vunpack.c.l.b16 %v266
    %v1401 = vunpack.c.h.b16 %v266
    %v1402 = vunpack.c.l.b16 %v267
    %v1403 = vunpack.c.h.b16 %v267
    %v1404 = vunpack.c.l.b16 %v268
    %v1405 = vunpack.c.h.b16 %v268
    %v1406 = vunpack.c.l.b16 %v269
    %v1407 = vunpack.c.h.b16 %v269
    %v1408 = vunpack.c.l.b16 %v270
    %v1409 = vunpack.c.h.b16 %v270
    %v1410 = vunpack.c.l.b16 %v271
    %v1411 = vunpack.c.h.b16 %v271
    %v1412 = vunpack.c.l.b16 %v272
    %v1413 = vunpack.c.h.b16 %v272
    %v1414 = vunpack.c.l.b16 %v273
    %v1415 = vunpack.c.h.b16 %v273
    %v1416 = vunpack.c.l.b16 %v274
    %v1417 = vunpack.c.h.b16 %v274
    %v1418 = vunpack.c.l.b16 %v275
    %v1419 = vunpack.c.h.b16 %v275
    %v1420 = vunpack.c.l.b16 %v276
    %v1421 = vunpack.c.h.b16 %v276
    %v1422 = vunpack.c.l.b16 %v277
    %v1423 = vunpack.c.h.b16 %v277
    %v1424 = vunpack.c.l.b16 %v278
    %v1425 = vunpack.c.h.b16 %v278
    %v1426 = vunpack.c.l.b16 %v279
    %v1427 = vunpack.c.h.b16 %v279
    %v1428 = vunpack.c.l.b16 %v280
    %v1429 = vunpack.c.h.b16 %v280
    %v1430 = vunpack.c.l.b16 %v281
    %v1431 = vunpack.c.h.b16 %v281
    %v1432 = vunpack.c.l.b16 %v282
    %v1433 = vunpack.c.h.b16 %v282
    %v1434 = vunpack.c.l.b16 %v283
    %v1435 = vunpack.c.h.b16 %v283
    %v1436 = vunpack.c.l.b16 %v284
    %v1437 = vunpack.c.h.b16 %v284
    %v1438 = vunpack.c.l.b16 %v285
    %v1439 = vunpack.c.h.b16 %v285
    %v1440 = vunpack.c.l.b16 %v286
    %v1441 = vunpack.c.h.b16 %v286
    %v1442 = vunpack.c.l.b16 %v287
    %v1443 = vunpack.c.h.b16 %v287
    %v1444 = vunpack.c.l.b16 %v288
    %v1445 = vunpack.c.h.b16 %v288
    %v1446 = vunpack.c.l.b16 %v289
    %v1447 = vunpack.c.h.b16 %v289
    %v1448 = vunpack.c.l.b16 %v290
    %v1449 = vunpack.c.h.b16 %v290
    %v1450 = vunpack.c.l.b16 %v291
    %v1451 = vunpack.c.h.b16 %v291
    %v1452 = vunpack.c.l.b16 %v292
    %v1453 = vunpack.c.h.b16 %v292
    %v1454 = vunpack.c.l.b16 %v293
    %v1455 = vunpack.c.h.b16 %v293
    %v1456 = vunpack.c.l.b16 %v294
    %v1457 = vunpack.c.h.b16 %v294
    %v1458 = vunpack.c.l.b16 %v295
    %v1459 = vunpack.c.h.b16 %v295
    %v1460 = vunpack.c.l.b16 %v296
    %v1461 = vunpack.c.h.b16 %v296
    %v1462 = vunpack.c.l.b16 %v297
    %v1463 = vunpack.c.h.b16 %v297
    %v1464 = vunpack.c.l.b16 %v298
    %v1465 = vunpack.c.h.b16 %v298
    %v1466 = vunpack.c.l.b16 %v299
    %v1467 = vunpack.c.h.b16 %v299
    %v1468 = vunpack.c.l.b16 %v300
    %v1469 = vunpack.c.h.b16 %v300
    %v1470 = vunpack.c.l.b16 %v301
    %v1471 = vunpack.c.h.b16 %v301
    %v1472 = vunpack.c.l.b16 %v302
    %v1473 = vunpack.c.h.b16 %v302
    %v1474 = vunpack.c.l.b16 %v303
    %v1475 = vunpack.c.h.b16 %v303
    %v1476 = vunpack.c.l.b16 %v304
    %v1477 = vunpack.c.h.b16 %v304
    %v1478 = vunpack.c.l.b16 %v305
    %v1479 = vunpack.c.h.b16 %v305
    %v1480 = vunpack.c.l.b16 %v306
    %v1481 = vunpack.c.h.b16 %v306
    %v1482 = vunpack.c.l.b16 %v307
    %v1483 = vunpack.c.h.b16 %v307
    %v1484 = vunpack.c.l.b16 %v308
    %v1485 = vunpack.c.h.b16 %v308
    %v1486 = vunpack.c.l.b16 %v309
    %v1487 = vunpack.c.h.b16 %v309
    %v1488 = vunpack.c.l.b16 %v310
    %v1489 = vunpack.c.h.b16 %v310
    %v1490 = vunpack.c.l.b16 %v311
    %v1491 = vunpack.c.h.b16 %v311
    %v1492 = vunpack.c.l.b16 %v312
    %v1493 = vunpack.c.h.b16 %v312
    %v1494 = vunpack.c.l.b16 %v313
    %v1495 = vunpack.c.h.b16 %v313
    %v1496 = vunpack.c.l.b16 %v314
    %v1497 = vunpack.c.h.b16 %v314
    %v1498 = vunpack.c.l.b16 %v315
    %v1499 = vunpack.c.h.b16 %v315
    %v1500 = vunpack.c.l.b16 %v316
    %v1501 = vunpack.c.h.b16 %v316
    %v1502 = vunpack.c.l.b16 %v317
    %v1503 = vunpack.c.h.b16 %v317
    %v1504 = vunpack.c.l.b16 %v318
    %v1505 = vunpack.c.h.b16 %v318
    %v1506 = vunpack.c.l.b16 %v319
    %v1507 = vunpack.c.h.b16 %v319
    %v1508 = vunpack.c.l.b16 %v320
    %v1509 = vunpack.c.h.b16 %v320
    %v1510 = vunpack.c.l.b16 %v321
    %v1511 = vunpack.c.h.b16 %v321
    %v1512 = vunpack.c.l.b16 %v322
    %v1513 = vunpack.c.h.b16 %v322
    %v1514 = vunpack.c.l.b16 %v323
    %v1515 = vunpack.c.h.b16 %v323
    %v1516 = vunpack.c.l.b16 %v324
    %v1517 = vunpack.c.h.b16 %v324
    %v1518 = vunpack.c.l.b16 %v325
    %v1519 = vunpack.c.h.b16 %v325
    %v1520 = vunpack.c.l.b16 %v326
    %v1521 = vunpack.c.h.b16 %v326
    %v1522 = vunpack.c.l.b16 %v327
    %v1523 = vunpack.c.h.b16 %v327
    %v1524 = vunpack.c.l.b16 %v328
    %v1525 = vunpack.c.h.b16 %v328
    %v1526 = vunpack.c.l.b16 %v329
    %v1527 = vunpack.c.h.b16 %v329
    %v1528 = vunpack.c.l.b16 %v330
    %v1529 = vunpack.c.h.b16 %v330
    %v1530 = vunpack.c.l.b16 %v331
    %v1531 = vunpack.c.h.b16 %v331
    %v1532 = vunpack.c.l.b16 %v332
    %v1533 = vunpack.c.h.b16 %v332
    %v1534 = vunpack.c.l.b16 %v333
    %v1535 = vunpack.c.h.b16 %v333
    %v1536 = vunpack.c.l.b16 %v334
    %v1537 = vunpack.c.h.b16 %v334
    %v1538 = vunpack.c.l.b16 %v335
    %v1539 = vunpack.c.h.b16 %v335
    %v1540 = vunpack.c.l.b16 %v336
    %v1541 = vunpack.c.h.b16 %v336
    %v1542 = vunpack.c.l.b16 %v337
    %v1543 = vunpack.c.h.b16 %v337
    %v1544 = vunpack.c.l.b16 %v338
    %v1545 = vunpack.c.h.b16 %v338
    %v1546 = vunpack.c.l.b16 %v339
    %v1547 = vunpack.c.h.b16 %v339
    %v1548 = vunpack.c.l.b16 %v340
    %v1549 = vunpack.c.h.b16 %v340
    %v1550 = vunpack.c.l.b16 %v341
    %v1551 = vunpack.c.h.b16 %v341
    %v1552 = vunpack.c.l.b16 %v342
    %v1553 = vunpack.c.h.b16 %v342
    %v1554 = vunpack.c.l.b16 %v343
    %v1555 = vunpack.c.h.b16 %v343
    %v1556 = vunpack.c.l.b16 %v344
    %v1557 = vunpack.c.h.b16 %v344
    %v1558 = vunpack.c.l.b16 %v345
    %v1559 = vunpack.c.h.b16 %v345
    %v1560 = vunpack.c.l.b16 %v346
    %v1561 = vunpack.c.h.b16 %v346
    %v1562 = vunpack.c.l.b16 %v347
    %v1563 = vunpack.c.h.b16 %v347
    %v1564 = vunpack.c.l.b16 %v348
    %v1565 = vunpack.c.h.b16 %v348
    %v1566 = vunpack.c.l.b16 %v349
    %v1567 = vunpack.c.h.b16 %v349
    %v1568 = vunpack.c.l.b16 %v350
    %v1569 = vunpack.c.h.b16 %v350
    %v1570 = vunpack.c.l.b16 %v351
    %v1571 = vunpack.c.h.b16 %v351
    %v1572 = vunpack.c.l.b16 %v352
    %v1573 = vunpack.c.h.b16 %v352
    %v1574 = vunpack.c.l.b16 %v353
    %v1575 = vunpack.c.h.b16 %v353
    %v1576 = vunpack.c.l.b16 %v354
    %v1577 = vunpack.c.h.b16 %v354
    %v1578 = vunpack.c.l.b16 %v355
    %v1579 = vunpack.c.h.b16 %v355
    %v1580 = vunpack.c.l.b16 %v356
    %v1581 = vunpack.c.h.b16 %v356
    %v1582 = vunpack.c.l.b16 %v357
    %v1583 = vunpack.c.h.b16 %v357
    %v1584 = vunpack.c.l.b16 %v358
    %v1585 = vunpack.c.h.b16 %v358
    %v1586 = vunpack.c.l.b16 %v359
    %v1587 = vunpack.c.h.b16 %v359
    %v1588 = vunpack.c.l.b16 %v360
    %v1589 = vunpack.c.h.b16 %v360
    %v1590 = vunpack.c.l.b16 %v361
    %v1591 = vunpack.c.h.b16 %v361
    %v1592 = vunpack.c.l.b16 %v362
    %v1593 = vunpack.c.h.b16 %v362
    %v1594 = vunpack.c.l.b16 %v363
    %v1595 = vunpack.c.h.b16 %v363
    %v1596 = vunpack.c.l.b16 %v364
    %v1597 = vunpack.c.h.b16 %v364
    %v1598 = vunpack.c.l.b16 %v365
    %v1599 = vunpack.c.h.b16 %v365
    %v1600 = vunpack.c.l.b16 %v366
    %v1601 = vunpack.c.h.b16 %v366
    %v1602 = vunpack.c.l.b16 %v367
    %v1603 = vunpack.c.h.b16 %v367
    %v1604 = vunpack.c.l.b16 %v368
    %v1605 = vunpack.c.h.b16 %v368
    %v1606 = vunpack.c.l.b16 %v369
    %v1607 = vunpack.c.h.b16 %v369
    %v1608 = vunpack.c.l.b16 %v370
    %v1609 = vunpack.c.h.b16 %v370
    %v1610 = vunpack.c.l.b16 %v371
    %v1611 = vunpack.c.h.b16 %v371
    %v1612 = vunpack.c.l.b16 %v372
    %v1613 = vunpack.c.h.b16 %v372
    %v1614 = vunpack.c.l.b16 %v373
    %v1615 = vunpack.c.h.b16 %v373
    %v1616 = vunpack.c.l.b16 %v374
    %v1617 = vunpack.c.h.b16 %v374
    %v1618 = vunpack.c.l.b16 %v375
    %v1619 = vunpack.c.h.b16 %v375
    %v1620 = vunpack.c.l.b16 %v376
    %v1621 = vunpack.c.h.b16 %v376
    %v1622 = vunpack.c.l.b16 %v377
    %v1623 = vunpack.c.h.b16 %v377
    %v1624 = vunpack.c.l.b16 %v378
    %v1625 = vunpack.c.h.b16 %v378
    %v1626 = vunpack.c.l.b16 %v379
    %v1627 = vunpack.c.h.b16 %v379
    %v1628 = vunpack.c.l.b16 %v380
    %v1629 = vunpack.c.h.b16 %v380
    %v1630 = vunpack.c.l.b16 %v381
    %v1631 = vunpack.c.h.b16 %v381
    %v1632 = vunpack.c.l.b16 %v382
    %v1633 = vunpack.c.h.b16 %v382
    %v1634 = vunpack.c.l.b16 %v383
    %v1635 = vunpack.c.h.b16 %v383
    %v1636 = vunpack.c.l.b16 %v384
    %v1637 = vunpack.c.h.b16 %v384
    %v1638 = vunpack.c.l.b16 %v385
    %v1639 = vunpack.c.h.b16 %v385
    %v1640 = vunpack.c.l.b16 %v386
    %v1641 = vunpack.c.h.b16 %v386
    %v1642 = vunpack.c.l.b16 %v387
    %v1643 = vunpack.c.h.b16 %v387
    %v1644 = vunpack.c.l.b16 %v388
    %v1645 = vunpack.c.h.b16 %v388
    %v1646 = vunpack.c.l.b16 %v389
    %v1647 = vunpack.c.h.b16 %v389
    %v1648 = vunpack.c.l.b16 %v390
    %v1649 = vunpack.c.h.b16 %v390
    %v1650 = vunpack.c.l.b16 %v391
    %v1651 = vunpack.c.h.b16 %v391
    %v1652 = vunpack.c.l.b16 %v392
    %v1653 = vunpack.c.h.b16 %v392
    %v1654 = vunpack.c.l.b16 %v393
    %v1655 = vunpack.c.h.b16 %v393
    %v1656 = vunpack.c.l.b16 %v394
    %v1657 = vunpack.c.h.b16 %v394
    %v1658 = vunpack.c.l.b16 %v395
    %v1659 = vunpack.c.h.b16 %v395
    %v1660 = vunpack.c.l.b16 %v396
    %v1661 = vunpack.c.h.b16 %v396
    %v1662 = vunpack.c.l.b16 %v397
    %v1663 = vunpack.c.h.b16 %v397
    %v1664 = vunpack.c.l.b16 %v398
    %v1665 = vunpack.c.h.b16 %v398
    %v1666 = vunpack.c.l.b16 %v399
    %v1667 = vunpack.c.h.b16 %v399
    %v1668 = vunpack.c.l.b16 %v400
    %v1669 = vunpack.c.h.b16 %v400
    %v1670 = vunpack.c.l.b16 %v401
    %v1671 = vunpack.c.h.b16 %v401
    %v1672 = vunpack.c.l.b16 %v402
    %v1673 = vunpack.c.h.b16 %v402
    %v1674 = vunpack.c.l.b16 %v403
    %v1675 = vunpack.c.h.b16 %v403
    %v1676 = vunpack.c.l.b16 %v404
    %v1677 = vunpack.c.h.b16 %v404
    %v1678 = vunpack.c.l.b16 %v405
    %v1679 = vunpack.c.h.b16 %v405
    %v1680 = vunpack.c.l.b16 %v406
    %v1681 = vunpack.c.h.b16 %v406
    %v1682 = vunpack.c.l.b16 %v407
    %v1683 = vunpack.c.h.b16 %v407
    %v1684 = vunpack.c.l.b16 %v408
    %v1685 = vunpack.c.h.b16 %v408
    %v1686 = vunpack.c.l.b16 %v409
    %v1687 = vunpack.c.h.b16 %v409
    %v1688 = vunpack.c.l.b16 %v410
    %v1689 = vunpack.c.h.b16 %v410
    %v1690 = vunpack.c.l.b16 %v411
    %v1691 = vunpack.c.h.b16 %v411
    %v1692 = vunpack.c.l.b16 %v412
    %v1693 = vunpack.c.h.b16 %v412
    %v1694 = vunpack.c.l.b16 %v413
    %v1695 = vunpack.c.h.b16 %v413
    %v1696 = vunpack.c.l.b16 %v414
    %v1697 = vunpack.c.h.b16 %v414
    %v1698 = vunpack.c.l.b16 %v415
    %v1699 = vunpack.c.h.b16 %v415
    %v1700 = vunpack.c.l.b16 %v416
    %v1701 = vunpack.c.h.b16 %v416
    %v1702 = vunpack.c.l.b16 %v417
    %v1703 = vunpack.c.h.b16 %v417
    %v1704 = vunpack.c.l.b16 %v418
    %v1705 = vunpack.c.h.b16 %v418
    %v1706 = vunpack.c.l.b16 %v419
    %v1707 = vunpack.c.h.b16 %v419
    %v1708 = vunpack.c.l.b16 %v420
    %v1709 = vunpack.c.h.b16 %v420
    %v1710 = vunpack.c.l.b16 %v421
    %v1711 = vunpack.c.h.b16 %v421
    %v1712 = vunpack.c.l.b16 %v422
    %v1713 = vunpack.c.h.b16 %v422
    %v1714 = vunpack.c.l.b16 %v423
    %v1715 = vunpack.c.h.b16 %v423
    %v1716 = vunpack.c.l.b16 %v424
    %v1717 = vunpack.c.h.b16 %v424
    %v1718 = vunpack.c.l.b16 %v425
    %v1719 = vunpack.c.h.b16 %v425
    %v1720 = vunpack.c.l.b16 %v426
    %v1721 = vunpack.c.h.b16 %v426
    %v1722 = vunpack.c.l.b16 %v427
    %v1723 = vunpack.c.h.b16 %v427
    %v1724 = vunpack.c.l.b16 %v428
    %v1725 = vunpack.c.h.b16 %v428
    %v1726 = vunpack.c.l.b16 %v429
    %v1727 = vunpack.c.h.b16 %v429
    %v1728 = vunpack.c.l.b16 %v430
    %v1729 = vunpack.c.h.b16 %v430
    %v1730 = vunpack.c.l.b16 %v431
    %v1731 = vunpack.c.h.b16 %v431
    %v1732 = vunpack.c.l.b16 %v432
    %v1733 = vunpack.c.h.b16 %v432
    %v1734 = vunpack.c.l.b16 %v433
    %v1735 = vunpack.c.h.b16 %v433
    %v1736 = vunpack.c.l.b16 %v434
    %v1737 = vunpack.c.h.b16 %v434
    %v1738 = vunpack.c.l.b16 %v435
    %v1739 = vunpack.c.h.b16 %v435
    %v1740 = vunpack.c.l.b16 %v436
    %v1741 = vunpack.c.h.b16 %v436
    %v1742 = vunpack.c.l.b16 %v437
    %v1743 = vunpack.c.h.b16 %v437
    %v1744 = vunpack.c.l.b16 %v438
    %v1745 = vunpack.c.h.b16 %v438
    %v1746 = vunpack.c.l.b16 %v439
    %v1747 = vunpack.c.h.b16 %v439
    %v1748 = vunpack.c.l.b16 %v440
    %v1749 = vunpack.c.h.b16 %v440
    %v1750 = vunpack.c.l.b16 %v441
    %v1751 = vunpack.c.h.b16 %v441
    %v1752 = vunpack.c.l.b16 %v442
    %v1753 = vunpack.c.h.b16 %v442
    %v1754 = vunpack.c.l.b16 %v443
    %v1755 = vunpack.c.h.b16 %v443
    %v1756 = vunpack.c.l.b16 %v444
    %v1757 = vunpack.c.h.b16 %v444
    %v1758 = vunpack.c.l.b16 %v445
    %v1759 = vunpack.c.h.b16 %v445
    %v1760 = vunpack.c.l.b16 %v446
    %v1761 = vunpack.c.h.b16 %v446
    %v1762 = vunpack.c.l.b16 %v447
    %v1763 = vunpack.c.h.b16 %v447
    %v1764 = vunpack.c.l.b16 %v448
    %v1765 = vunpack.c.h.b16 %v448
    %v1766 = vunpack.c.l.b16 %v449
    %v1767 = vunpack.c.h.b16 %v449
    %v1768 = vunpack.c.l.b16 %v450
    %v1769 = vunpack.c.h.b16 %v450
    %v1770 = vunpack.c.l.b16 %v451
    %v1771 = vunpack.c.h.b16 %v451
    %v1772 = vunpack.c.l.b16 %v452
    %v1773 = vunpack.c.h.b16 %v452
    %v1774 = vunpack.c.l.b16 %v453
    %v1775 = vunpack.c.h.b16 %v453
    %v1776 = vunpack.c.l.b16 %v454
    %v1777 = vunpack.c.h.b16 %v454
    %v1778 = vunpack.c.l.b16 %v455
    %v1779 = vunpack.c.h.b16 %v455
    %v1780 = vunpack.c.l.b16 %v456
    %v1781 = vunpack.c.h.b16 %v456
    %v1782 = vunpack.c.l.b16 %v457
    %v1783 = vunpack.c.h.b16 %v457
    %v1784 = vunpack.c.l.b16 %v458
    %v1785 = vunpack.c.h.b16 %v458
    %v1786 = vunpack.c.l.b16 %v459
    %v1787 = vunpack.c.h.b16 %v459
    %v1788 = vunpack.c.l.b16 %v460
    %v1789 = vunpack.c.h.b16 %v460
    %v1790 = vunpack.c.l.b16 %v461
    %v1791 = vunpack.c.h.b16 %v461
    %v1792 = vunpack.c.l.b16 %v462
    %v1793 = vunpack.c.h.b16 %v462
    %v1794 = vunpack.c.l.b16 %v463
    %v1795 = vunpack.c.h.b16 %v463
    %v1796 = vunpack.c.l.b16 %v464
    %v1797 = vunpack.c.h.b16 %v464
    %v1798 = vunpack.c.l.b16 %v465
    %v1799 = vunpack.c.h.b16 %v465
    %v1800 = vunpack.c.l.b16 %v466
    %v1801 = vunpack.c.h.b16 %v466
    %v1802 = vunpack.c.l.b16 %v467
    %v1803 = vunpack.c.h.b16 %v467
    %v1804 = vunpack.c.l.b16 %v468
    %v1805 = vunpack.c.h.b16 %v468
    %v1806 = vunpack.c.l.b16 %v469
    %v1807 = vunpack.c.h.b16 %v469
    %v1808 = vunpack.c.l.b16 %v470
    %v1809 = vunpack.c.h.b16 %v470
    %v1810 = vunpack.c.l.b16 %v471
    %v1811 = vunpack.c.h.b16 %v471
    %v1812 = vunpack.c.l.b16 %v472
    %v1813 = vunpack.c.h.b16 %v472
    %v1814 = vunpack.c.l.b16 %v473
    %v1815 = vunpack.c.h.b16 %v473
    %v1816 = vunpack.c.l.b16 %v474
    %v1817 = vunpack.c.h.b16 %v474
    %v1818 = vunpack.c.l.b16 %v475
    %v1819 = vunpack.c.h.b16 %v475
    %v1820 = vunpack.c.l.b16 %v476
    %v1821 = vunpack.c.h.b16 %v476
    %v1822 = vunpack.c.l.b16 %v477
    %v1823 = vunpack.c.h.b16 %v477
    %v1824 = vunpack.c.l.b16 %v478
    %v1825 = vunpack.c.h.b16 %v478
    %v1826 = vunpack.c.l.b16 %v479
    %v1827 = vunpack.c.h.b16 %v479
    %v1828 = vunpack.c.l.b16 %v480
    %v1829 = vunpack.c.h.b16 %v480
    %v1830 = vunpack.c.l.b16 %v481
    %v1831 = vunpack.c.h.b16 %v481
    %v1832 = vunpack.c.l.b16 %v482
    %v1833 = vunpack.c.h.b16 %v482
    %v1834 = vunpack.c.l.b16 %v483
    %v1835 = vunpack.c.h.b16 %v483
    %v1836 = vunpack.c.l.b16 %v484
    %v1837 = vunpack.c.h.b16 %v484
    %v1838 = vunpack.c.l.b16 %v485
    %v1839 = vunpack.c.h.b16 %v485
    %v1840 = vunpack.c.l.b16 %v486
    %v1841 = vunpack.c.h.b16 %v486
    %v1842 = vunpack.c.l.b16 %v487
    %v1843 = vunpack.c.h.b16 %v487
    %v1844 = vunpack.c.l.b16 %v488
    %v1845 = vunpack.c.h.b16 %v488
    %v1846 = vunpack.c.l.b16 %v489
    %v1847 = vunpack.c.h.b16 %v489
    %v1848 = vunpack.c.l.b16 %v490
    %v1849 = vunpack.c.h.b16 %v490
    %v1850 = vunpack.c.l.b16 %v491
    %v1851 = vunpack.c.h.b16 %v491
    %v1852 = vunpack.c.l.b16 %v492
    %v1853 = vunpack.c.h.b16 %v492
    %v1854 = vunpack.c.l.b16 %v493
    %v1855 = vunpack.c.h.b16 %v493
    %v1856 = vunpack.c.l.b16 %v494
    %v1857 = vunpack.c.h.b16 %v494
    %v1858 = vunpack.c.l.b16 %v495
    %v1859 = vunpack.c.h.b16 %v495
    %v1860 = vunpack.c.l.b16 %v496
    %v1861 = vunpack.c.h.b16 %v496
    %v1862 = vunpack.c.l.b16 %v497
    %v1863 = vunpack.c.h.b16 %v497
    %v1864 = vunpack.c.l.b16 %v498
    %v1865 = vunpack.c.h.b16 %v498
    %v1866 = vunpack.c.l.b16 %v499
    %v1867 = vunpack.c.h.b16 %v499
    %v1868 = vunpack.c.l.b16 %v500
    %v1869 = vunpack.c.h.b16 %v500
    %v1870 = vunpack.c.l.b16 %v501
    %v1871 = vunpack.c.h.b16 %v501
    %v1872 = vunpack.c.l.b16 %v502
    %v1873 = vunpack.c.h.b16 %v502
    %v1874 = vunpack.c.l.b16 %v503
    %v1875 = vunpack.c.h.b16 %v503
    %v1876 = vunpack.c.l.b16 %v504
    %v1877 = vunpack.c.h.b16 %v504
    %v1878 = vunpack.c.l.b16 %v505
    %v1879 = vunpack.c.h.b16 %v505
    %v1880 = vunpack.c.l.b16 %v506
    %v1881 = vunpack.c.h.b16 %v506
    %v1882 = vunpack.c.l.b16 %v507
    %v1883 = vunpack.c.h.b16 %v507
    %v1884 = vunpack.c.l.b16 %v508
    %v1885 = vunpack.c.h.b16 %v508
    %v1886 = vunpack.c.l.b16 %v509
    %v1887 = vunpack.c.h.b16 %v509
    %v1888 = vunpack.c.l.b16 %v510
    %v1889 = vunpack.c.h.b16 %v510
    %v1890 = vunpack.c.l.b16 %v511
    %v1891 = vunpack.c.h.b16 %v511
    %v1892 = vunpack.c.l.b16 %v512
    %v1893 = vunpack.c.h.b16 %v512
    %v1894 = vunpack.c.l.b16 %v513
    %v1895 = vunpack.c.h.b16 %v513
    %v1896 = vunpack.c.l.b16 %v514
    %v1897 = vunpack.c.h.b16 %v514
    %v1898 = vunpack.c.l.b16 %v515
    %v1899 = vunpack.c.h.b16 %v515
    %v1900 = vunpack.c.l.b16 %v516
    %v1901 = vunpack.c.h.b16 %v516
    %v1902 = vunpack.c.l.b16 %v517
    %v1903 = vunpack.c.h.b16 %v517
    %v1904 = vunpack.c.l.b16 %v518
    %v1905 = vunpack.c.h.b16 %v518
    %v1906 = vunpack.c.l.b16 %v519
    %v1907 = vunpack.c.h.b16 %v519
    %v1908 = vunpack.c.l.b16 %v520
    %v1909 = vunpack.c.h.b16 %v520
    %v1910 = vunpack.c.l.b16 %v521
    %v1911 = vunpack.c.h.b16 %v521
    %v1912 = vunpack.c.l.b16 %v522
    %v1913 = vunpack.c.h.b16 %v522
    %v1914 = vunpack.c.l.b16 %v523
    %v1915 = vunpack.c.h.b16 %v523
    %v1916 = vunpack.c.l.b16 %v524
    %v1917 = vunpack.c.h.b16 %v524
    %v1918 = vunpack.c.l.b16 %v525
    %v1919 = vunpack.c.h.b16 %v525
    %v1920 = vunpack.c.l.b16 %v526
    %v1921 = vunpack.c.h.b16 %v526
    %v1922 = vunpack.c.l.b16 %v527
    %v1923 = vunpack.c.h.b16 %v527
    %v1924 = vunpack.c.l.b16 %v528
    %v1925 = vunpack.c.h.b16 %v528
    %v1926 = vunpack.c.l.b16 %v529
    %v1927 = vunpack.c.h.b16 %v529
    %v1928 = vunpack.c.l.b16 %v530
    %v1929 = vunpack.c.h.b16 %v530
    %v1930 = vunpack.c.l.b16 %v531
    %v1931 = vunpack.c.h.b16 %v531
    %v1932 = vunpack.c.l.b16 %v532
    %v1933 = vunpack.c.h.b16 %v532
    %v1934 = vunpack.c.l.b16 %v533
    %v1935 = vunpack.c.h.b16 %v533
    %v1936 = vunpack.c.l.b16 %v534
    %v1937 = vunpack.c.h.b16 %v534
    %v1938 = vunpack.c.l.b16 %v535
    %v1939 = vunpack.c.h.b16 %v535
    %v1940 = vunpack.c.l.b16 %v536
    %v1941 = vunpack.c.h.b16 %v536
    %v1942 = vunpack.c.l.b16 %v537
    %v1943 = vunpack.c.h.b16 %v537
    %v1944 = vunpack.c.l.b16 %v538
    %v1945 = vunpack.c.h.b16 %v538
    %v1946 = vunpack.c.l.b16 %v539
    %v1947 = vunpack.c.h.b16 %v539
    %v1948 = vunpack.c.l.b16 %v540
    %v1949 = vunpack.c.h.b16 %v540
    %v1950 = vunpack.c.l.b16 %v541
    %v1951 = vunpack.c.h.b16 %v541
    %v1952 = vunpack.c.l.b16 %v542
    %v1953 = vunpack.c.h.b16 %v542
    %v1954 = vunpack.c.l.b16 %v543
    %v1955 = vunpack.c.h.b16 %v543
    %v1956 = vunpack.c.l.b16 %v544
    %v1957 = vunpack.c.h.b16 %v544
    %v1958 = vunpack.c.l.b16 %v545
    %v1959 = vunpack.c.h.b16 %v545
    %v1960 = vunpack.c.l.b16 %v546
    %v1961 = vunpack.c.h.b16 %v546
    %v1962 = vunpack.c.l.b16 %v547
    %v1963 = vunpack.c.h.b16 %v547
    %v1964 = vunpack.c.l.b16 %v548
    %v1965 = vunpack.c.h.b16 %v548
    %v1966 = vunpack.c.l.b16 %v549
    %v1967 = vunpack.c.h.b16 %v549
    %v1968 = vunpack.c.l.b16 %v550
    %v1969 = vunpack.c.h.b16 %v550
    %v1970 = vunpack.c.l.b16 %v551
    %v1971 = vunpack.c.h.b16 %v551
    %v1972 = vunpack.c.l.b16 %v552
    %v1973 = vunpack.c.h.b16 %v552
    %v1974 = vunpack.c.l.b16 %v553
    %v1975 = vunpack.c.h.b16 %v553
    %v1976 = vunpack.c.l.b16 %v554
    %v1977 = vunpack.c.h.b16 %v554
    %v1978 = vunpack.c.l.b16 %v555
    %v1979 = vunpack.c.h.b16 %v555
    %v1980 = vunpack.c.l.b16 %v556
    %v1981 = vunpack.c.h.b16 %v556
    %v1982 = vunpack.c.l.b16 %v557
    %v1983 = vunpack.c.h.b16 %v557
    %v1984 = vunpack.c.l.b16 %v558
    %v1985 = vunpack.c.h.b16 %v558
    %v1986 = vunpack.c.l.b16 %v559
    %v1987 = vunpack.c.h.b16 %v559
    %v1988 = vunpack.c.l.b16 %v560
    %v1989 = vunpack.c.h.b16 %v560
    %v1990 = vunpack.c.l.b16 %v561
    %v1991 = vunpack.c.h.b16 %v561
    %v1992 = vunpack.c.l.b16 %v562
    %v1993 = vunpack.c.h.b16 %v562
    %v1994 = vunpack.c.l.b16 %v563
    %v1995 = vunpack.c.h.b16 %v563
    %v1996 = vunpack.c.l.b16 %v564
    %v1997 = vunpack.c.h.b16 %v564
    %v1998 = vunpack.c.l.b16 %v565
    %v1999 = vunpack.c.h.b16 %v565
    %v2000 = vpack.c.b16 %v1240, %v1232
    %v2001 = vpack.c.b16 %v1241, %v1233
    %v2002 = vpack.c.b16 %v1242, %v1234
    %v2003 = vpack.c.b16 %v1243, %v1235
    %v2004 = vpack.c.b16 %v1244, %v1236
    %v2005 = vpack.c.b16 %v1245, %v1237
    %v2006 = vpack.c.b16 %v1246, %v1238
    %v2007 = vpack.c.b16 %v1247, %v1239
    %v2008 = vpack.c.b16 %v1256, %v1248
    %v2009 = vpack.c.b16 %v1257, %v1249
    %v2010 = vpack.c.b16 %v1258, %v1250
    %v2011 = vpack.c.b16 %v1259, %v1251
    %v2012 = vpack.c.b16 %v1260, %v1252
    %v2013 = vpack.c.b16 %v1261, %v1253
    %v2014 = vpack.c.b16 %v1262, %v1254
    %v2015 = vpack.c.b16 %v1263, %v1255
    %v2016 = vpack.c.b16 %v1272, %v1264
    %v2017 = vpack.c.b16 %v1273, %v1265
    %v2018 = vpack.c.b16 %v1274, %v1266
    %v2019 = vpack.c.b16 %v1275, %v1267
    %v2020 = vpack.c.b16 %v1276, %v1268
    %v2021 = vpack.c.b16 %v1277, %v1269
    %v2022 = vpack.c.b16 %v1278, %v1270
    %v2023 = vpack.c.b16 %v1279, %v1271
    %v2024 = vpack.c.b16 %v1288, %v1280
    %v2025 = vpack.c.b16 %v1289, %v1281
    %v2026 = vpack.c.b16 %v1290, %v1282
    %v2027 = vpack.c.b16 %v1291, %v1283
    %v2028 = vpack.c.b16 %v1292, %v1284
    %v2029 = vpack.c.b16 %v1293, %v1285
    %v2030 = vpack.c.b16 %v1294, %v1286
    %v2031 = vpack.c.b16 %v1295, %v1287
    %v2032 = vpack.c.b16 %v1304, %v1296
    %v2033 = vpack.c.b16 %v1305, %v1297
    %v2034 = vpack.c.b16 %v1306, %v1298
    %v2035 = vpack.c.b16 %v1307, %v1299
    %v2036 = vpack.c.b16 %v1308, %v1300
    %v2037 = vpack.c.b16 %v1309, %v1301
    %v2038 = vpack.c.b16 %v1310, %v1302
    %v2039 = vpack.c.b16 %v1311, %v1303
    %v2040 = vpack.c.b16 %v1320, %v1312
    %v2041 = vpack.c.b16 %v1321, %v1313
    %v2042 = vpack.c.b16 %v1322, %v1314
    %v2043 = vpack.c.b16 %v1323, %v1315
    %v2044 = vpack.c.b16 %v1324, %v1316
    %v2045 = vpack.c.b16 %v1325, %v1317
    %v2046 = vpack.c.b16 %v1326, %v1318
    %v2047 = vpack.c.b16 %v1327, %v1319
    %v2048 = vpack.c.b16 %v1336, %v1328
    %v2049 = vpack.c.b16 %v1337, %v1329
    %v2050 = vpack.c.b16 %v1338, %v1330
    %v2051 = vpack.c.b16 %v1339, %v1331
    %v2052 = vpack.c.b16 %v1340, %v1332
    %v2053 = vpack.c.b16 %v1341, %v1333
    %v2054 = vpack.c.b16 %v1342, %v1334
    %v2055 = vpack.c.b16 %v1343, %v1335
    %v2056 = vpack.c.b16 %v1352, %v1344
    %v2057 = vpack.c.b16 %v1353, %v1345
    %v2058 = vpack.c.b16 %v1354, %v1346
    %v2059 = vpack.c.b16 %v1355, %v1347
    %v2060 = vpack.c.b16 %v1356, %v1348
    %v2061 = vpack.c.b16 %v1357, %v1349
    %v2062 = vpack.c.b16 %v1358, %v1350
    %v2063 = vpack.c.b16 %v1359, %v1351
    %v2064 = vpack.c.b16 %v1368, %v1360
    %v2065 = vpack.c.b16 %v1369, %v1361
    %v2066 = vpack.c.b16 %v1370, %v1362
    %v2067 = vpack.c.b16 %v1371, %v1363
    %v2068 = vpack.c.b16 %v1372, %v1364
    %v2069 = vpack.c.b16 %v1373, %v1365
    %v2070 = vpack.c.b16 %v1374, %v1366
    %v2071 = vpack.c.b16 %v1375, %v1367
    %v2072 = vpack.c.b16 %v1384, %v1376
    %v2073 = vpack.c.b16 %v1385, %v1377
    %v2074 = vpack.c.b16 %v1386, %v1378
    %v2075 = vpack.c.b16 %v1387, %v1379
    %v2076 = vpack.c.b16 %v1388, %v1380
    %v2077 = vpack.c.b16 %v1389, %v1381
    %v2078 = vpack.c.b16 %v1390, %v1382
    %v2079 = vpack.c.b16 %v1391, %v1383
    %v2080 = vpack.c.b16 %v1400, %v1392
    %v2081 = vpack.c.b16 %v1401, %v1393
    %v2082 = vpack.c.b16 %v1402, %v1394
    %v2083 = vpack.c.b16 %v1403, %v1395
    %v2084 = vpack.c.b16 %v1404, %v1396
    %v2085 = vpack.c.b16 %v1405, %v1397
    %v2086 = vpack.c.b16 %v1406, %v1398
    %v2087 = vpack.c.b16 %v1407, %v1399
    %v2088 = vpack.c.b16 %v1416, %v1408
    %v2089 = vpack.c.b16 %v1417, %v1409
    %v2090 = vpack.c.b16 %v1418, %v1410
    %v2091 = vpack.c.b16 %v1419, %v1411
    %v2092 = vpack.c.b16 %v1420, %v1412
    %v2093 = vpack.c.b16 %v1421, %v1413
    %v2094 = vpack.c.b16 %v1422, %v1414
    %v2095 = vpack.c.b16 %v1423, %v1415
    %v2096 = vpack.c.b16 %v1432, %v1424
    %v2097 = vpack.c.b16 %v1433, %v1425
    %v2098 = vpack.c.b16 %v1434, %v1426
    %v2099 = vpack.c.b16 %v1435, %v1427
    %v2100 = vpack.c.b16 %v1436, %v1428
    %v2101 = vpack.c.b16 %v1437, %v1429
    %v2102 = vpack.c.b16 %v1438, %v1430
    %v2103 = vpack.c.b16 %v1439, %v1431
    %v2104 = vpack.c.b16 %v1448, %v1440
    %v2105 = vpack.c.b16 %v1449, %v1441
    %v2106 = vpack.c.b16 %v1450, %v1442
    %v2107 = vpack.c.b16 %v1451, %v1443
    %v2108 = vpack.c.b16 %v1452, %v1444
    %v2109 = vpack.c.b16 %v1453, %v1445
    %v2110 = vpack.c.b16 %v1454, %v1446
    %v2111 = vpack.c.b16 %v1455, %v1447
    %v2112 = vpack.c.b16 %v1464, %v1456
    %v2113 = vpack.c.b16 %v1465, %v1457
    %v2114 = vpack.c.b16 %v1466, %v1458
    %v2115 = vpack.c.b16 %v1467, %v1459
    %v2116 = vpack.c.b16 %v1468, %v1460
    %v2117 = vpack.c.b16 %v1469, %v1461
    %v2118 = vpack.c.b16 %v1470, %v1462
    %v2119 = vpack.c.b16 %v1471, %v1463
    %v2120 = vpack.c.b16 %v1480, %v1472
    %v2121 = vpack.c.b16 %v1481, %v1473
    %v2122 = vpack.c.b16 %v1482, %v1474
    %v2123 = vpack.c.b16 %v1483, %v1475
    %v2124 = vpack.c.b16 %v1484, %v1476
    %v2125 = vpack.c.b16 %v1485, %v1477
    %v2126 = vpack.c.b16 %v1486, %v1478
    %v2127 = vpack.c.b16 %v1487, %v1479
    %v2128 = vpack.c.b16 %v1496, %v1488
    %v2129 = vpack.c.b16 %v1497, %v1489
    %v2130 = vpack.c.b16 %v1498, %v1490
    %v2131 = vpack.c.b16 %v1499, %v1491
    %v2132 = vpack.c.b16 %v1500, %v1492
    %v2133 = vpack.c.b16 %v1501, %v1493
    %v2134 = vpack.c.b16 %v1502, %v1494
    %v2135 = vpack.c.b16 %v1503, %v1495
    %v2136 = vpack.c.b16 %v1512, %v1504
    %v2137 = vpack.c.b16 %v1513, %v1505
    %v2138 = vpack.c.b16 %v1514, %v1506
    %v2139 = vpack.c.b16 %v1515, %v1507
    %v2140 = vpack.c.b16 %v1516, %v1508
    %v2141 = vpack.c.b16 %v1517, %v1509
    %v2142 = vpack.c.b16 %v1518, %v1510
    %v2143 = vpack.c.b16 %v1519, %v1511
    %v2144 = vpack.c.b16 %v1528, %v1520
    %v2145 = vpack.c.b16 %v1529, %v1521
    %v2146 = vpack.c.b16 %v1530, %v1522
    %v2147 = vpack.c.b16 %v1531, %v1523
    %v2148 = vpack.c.b16 %v1532, %v1524
    %v2149 = vpack.c.b16 %v1533, %v1525
    %v2150 = vpack.c.b16 %v1534, %v1526
    %v2151 = vpack.c.b16 %v1535, %v1527
    %v2152 = vpack.c.b16 %v1544, %v1536
    %v2153 = vpack.c.b16 %v1545, %v1537
    %v2154 = vpack.c.b16 %v1546, %v1538
    %v2155 = vpack.c.b16 %v1547, %v1539
    %v2156 = vpack.c.b16 %v1548, %v1540
    %v2157 = vpack.c.b16 %v1549, %v1541
    %v2158 = vpack.c.b16 %v1550, %v1542
    %v2159 = vpack.c.b16 %v1551, %v1543
    %v2160 = vpack.c.b16 %v1560, %v1552
    %v2161 = vpack.c.b16 %v1561, %v1553
    %v2162 = vpack.c.b16 %v1562, %v1554
    %v2163 = vpack.c.b16 %v1563, %v1555
    %v2164 = vpack.c.b16 %v1564, %v1556
    %v2165 = vpack.c.b16 %v1565, %v1557
    %v2166 = vpack.c.b16 %v1566, %v1558
    %v2167 = vpack.c.b16 %v1567, %v1559
    %v2168 = vpack.c.b16 %v1576, %v1568
    %v2169 = vpack.c.b16 %v1577, %v1569
    %v2170 = vpack.c.b16 %v1578, %v1570
    %v2171 = vpack.c.b16 %v1579, %v1571
    %v2172 = vpack.c.b16 %v1580, %v1572
    %v2173 = vpack.c.b16 %v1581, %v1573
    %v2174 = vpack.c.b16 %v1582, %v1574
    %v2175 = vpack.c.b16 %v1583, %v1575
    %v2176 = vpack.c.b16 %v1592, %v1584
    %v2177 = vpack.c.b16 %v1593, %v1585
    %v2178 = vpack.c.b16 %v1594, %v1586
    %v2179 = vpack.c.b16 %v1595, %v1587
    %v2180 = vpack.c.b16 %v1596, %v1588
    %v2181 = vpack.c.b16 %v1597, %v1589
    %v2182 = vpack.c.b16 %v1598, %v1590
    %v2183 = vpack.c.b16 %v1599, %v1591
    %v2184 = vpack.c.b16 %v1608, %v1600
    %v2185 = vpack.c.b16 %v1609, %v1601
    %v2186 = vpack.c.b16 %v1610, %v1602
    %v2187 = vpack.c.b16 %v1611, %v1603
    %v2188 = vpack.c.b16 %v1612, %v1604
    %v2189 = vpack.c.b16 %v1613, %v1605
    %v2190 = vpack.c.b16 %v1614, %v1606
    %v2191 = vpack.c.b16 %v1615, %v1607
    %v2192 = vpack.c.b16 %v1624, %v1616
    %v2193 = vpack.c.b16 %v1625, %v1617
    %v2194 = vpack.c.b16 %v1626, %v1618
    %v2195 = vpack.c.b16 %v1627, %v1619
    %v2196 = vpack.c.b16 %v1628, %v1620
    %v2197 = vpack.c.b16 %v1629, %v1621
    %v2198 = vpack.c.b16 %v1630, %v1622
    %v2199 = vpack.c.b16 %v1631, %v1623
    %v2200 = vpack.c.b16 %v1640, %v1632
    %v2201 = vpack.c.b16 %v1641, %v1633
    %v2202 = vpack.c.b16 %v1642, %v1634
    %v2203 = vpack.c.b16 %v1643, %v1635
    %v2204 = vpack.c.b16 %v1644, %v1636
    %v2205 = vpack.c.b16 %v1645, %v1637
    %v2206 = vpack.c.b16 %v1646, %v1638
    %v2207 = vpack.c.b16 %v1647, %v1639
    %v2208 = vpack.c.b16 %v1656, %v1648
    %v2209 = vpack.c.b16 %v1657, %v1649
    %v2210 = vpack.c.b16 %v1658, %v1650
    %v2211 = vpack.c.b16 %v1659, %v1651
    %v2212 = vpack.c.b16 %v1660, %v1652
    %v2213 = vpack.c.b16 %v1661, %v1653
    %v2214 = vpack.c.b16 %v1662, %v1654
    %v2215 = vpack.c.b16 %v1663, %v1655
    %v2216 = vpack.c.b16 %v1672, %v1664
    %v2217 = vpack.c.b16 %v1673, %v1665
    %v2218 = vpack.c.b16 %v1674, %v1666
    %v2219 = vpack.c.b16 %v1675, %v1667
    %v2220 = vpack.c.b16 %v1676, %v1668
    %v2221 = vpack.c.b16 %v1677, %v1669
    %v2222 = vpack.c.b16 %v1678, %v1670
    %v2223 = vpack.c.b16 %v1679, %v1671
    %v2224 = vpack.c.b16 %v1688, %v1680
    %v2225 = vpack.c.b16 %v1689, %v1681
    %v2226 = vpack.c.b16 %v1690, %v1682
    %v2227 = vpack.c.b16 %v1691, %v1683
    %v2228 = vpack.c.b16 %v1692, %v1684
    %v2229 = vpack.c.b16 %v1693, %v1685
    %v2230 = vpack.c.b16 %v1694, %v1686
    %v2231 = vpack.c.b16 %v1695, %v1687
    %v2232 = vpack.c.b16 %v1704, %v1696
    %v2233 = vpack.c.b16 %v1705, %v1697
    %v2234 = vpack.c.b16 %v1706, %v1698
    %v2235 = vpack.c.b16 %v1707, %v1699
    %v2236 = vpack.c.b16 %v1708, %v1700
    %v2237 = vpack.c.b16 %v1709, %v1701
    %v2238 = vpack.c.b16 %v1710, %v1702
    %v2239 = vpack.c.b16 %v1711, %v1703
    %v2240 = vpack.c.b16 %v1720, %v1712
    %v2241 = vpack.c.b16 %v1721, %v1713
    %v2242 = vpack.c.b16 %v1722, %v1714
    %v2243 = vpack.c.b16 %v1723, %v1715
    %v2244 = vpack.c.b16 %v1724, %v1716
    %v2245 = vpack.c.b16 %v1725, %v1717
    %v2246 = vpack.c.b16 %v1726, %v1718
    %v2247 = vpack.c.b16 %v1727, %v1719
    %v2248 = vpack.c.b16 %v1736, %v1728
    %v2249 = vpack.c.b16 %v1737, %v1729
    %v2250 = vpack.c.b16 %v1738, %v1730
    %v2251 = vpack.c.b16 %v1739, %v1731
    %v2252 = vpack.c.b16 %v1740, %v1732
    %v2253 = vpack.c.b16 %v1741, %v1733
    %v2254 = vpack.c.b16 %v1742, %v1734
    %v2255 = vpack.c.b16 %v1743, %v1735
    %v2256 = vpack.c.b16 %v1752, %v1744
    %v2257 = vpack.c.b16 %v1753, %v1745
    %v2258 = vpack.c.b16 %v1754, %v1746
    %v2259 = vpack.c.b16 %v1755, %v1747
    %v2260 = vpack.c.b16 %v1756, %v1748
    %v2261 = vpack.c.b16 %v1757, %v1749
    %v2262 = vpack.c.b16 %v1758, %v1750
    %v2263 = vpack.c.b16 %v1759, %v1751
    %v2264 = vpack.c.b16 %v1768, %v1760
    %v2265 = vpack.c.b16 %v1769, %v1761
    %v2266 = vpack.c.b16 %v1770, %v1762
    %v2267 = vpack.c.b16 %v1771, %v1763
    %v2268 = vpack.c.b16 %v1772, %v1764
    %v2269 = vpack.c.b16 %v1773, %v1765
    %v2270 = vpack.c.b16 %v1774, %v1766
    %v2271 = vpack.c.b16 %v1775, %v1767
    %v2272 = vpack.c.b16 %v1784, %v1776
    %v2273 = vpack.c.b16 %v1785, %v1777
    %v2274 = vpack.c.b16 %v1786, %v1778
    %v2275 = vpack.c.b16 %v1787, %v1779
    %v2276 = vpack.c.b16 %v1788, %v1780
    %v2277 = vpack.c.b16 %v1789, %v1781
    %v2278 = vpack.c.b16 %v1790, %v1782
    %v2279 = vpack.c.b16 %v1791, %v1783
    %v2280 = vpack.c.b16 %v1800, %v1792
    %v2281 = vpack.c.b16 %v1801, %v1793
    %v2282 = vpack.c.b16 %v1802, %v1794
    %v2283 = vpack.c.b16 %v1803, %v1795
    %v2284 = vpack.c.b16 %v1804, %v1796
    %v2285 = vpack.c.b16 %v1805, %v1797
    %v2286 = vpack.c.b16 %v1806, %v1798
    %v2287 = vpack.c.b16 %v1807, %v1799
    %v2288 = vpack.c.b16 %v1816, %v1808
    %v2289 = vpack.c.b16 %v1817, %v1809
    %v2290 = vpack.c.b16 %v1818, %v1810
    %v2291 = vpack.c.b16 %v1819, %v1811
    %v2292 = vpack.c.b16 %v1820, %v1812
    %v2293 = vpack.c.b16 %v1821, %v1813
    %v2294 = vpack.c.b16 %v1822, %v1814
    %v2295 = vpack.c.b16 %v1823, %v1815
    %v2296 = vpack.c.b16 %v1832, %v1824
    %v2297 = vpack.c.b16 %v1833, %v1825
    %v2298 = vpack.c.b16 %v1834, %v1826
    %v2299 = vpack.c.b16 %v1835, %v1827
    %v2300 = vpack.c.b16 %v1836, %v1828
    %v2301 = vpack.c.b16 %v1837, %v1829
    %v2302 = vpack.c.b16 %v1838, %v1830
    %v2303 = vpack.c.b16 %v1839, %v1831
    %v2304 = vpack.c.b16 %v1848, %v1840
    %v2305 = vpack.c.b16 %v1849, %v1841
    %v2306 = vpack.c.b16 %v1850, %v1842
    %v2307 = vpack.c.b16 %v1851, %v1843
    %v2308 = vpack.c.b16 %v1852, %v1844
    %v2309 = vpack.c.b16 %v1853, %v1845
    %v2310 = vpack.c.b16 %v1854, %v1846
    %v2311 = vpack.c.b16 %v1855, %v1847
    %v2312 = vpack.c.b16 %v1864, %v1856
    %v2313 = vpack.c.b16 %v1865, %v1857
    %v2314 = vpack.c.b16 %v1866, %v1858
    %v2315 = vpack.c.b16 %v1867, %v1859
    %v2316 = vpack.c.b16 %v1868, %v1860
    %v2317 = vpack.c.b16 %v1869, %v1861
    %v2318 = vpack.c.b16 %v1870, %v1862
    %v2319 = vpack.c.b16 %v1871, %v1863
    %v2320 = vpack.c.b16 %v1880, %v1872
    %v2321 = vpack.c.b16 %v1881, %v1873
    %v2322 = vpack.c.b16 %v1882, %v1874
    %v2323 = vpack.c.b16 %v1883, %v1875
    %v2324 = vpack.c.b16 %v1884, %v1876
    %v2325 = vpack.c.b16 %v1885, %v1877
    %v2326 = vpack.c.b16 %v1886, %v1878
    %v2327 = vpack.c.b16 %v1887, %v1879
    %v2328 = vpack.c.b16 %v1896, %v1888
    %v2329 = vpack.c.b16 %v1897, %v1889
    %v2330 = vpack.c.b16 %v1898, %v1890
    %v2331 = vpack.c.b16 %v1899, %v1891
    %v2332 = vpack.c.b16 %v1900, %v1892
    %v2333 = vpack.c.b16 %v1901, %v1893
    %v2334 = vpack.c.b16 %v1902, %v1894
    %v2335 = vpack.c.b16 %v1903, %v1895
    %v2336 = vpack.c.b16 %v1912, %v1904
    %v2337 = vpack.c.b16 %v1913, %v1905
    %v2338 = vpack.c.b16 %v1914, %v1906
    %v2339 = vpack.c.b16 %v1915, %v1907
    %v2340 = vpack.c.b16 %v1916, %v1908
    %v2341 = vpack.c.b16 %v1917, %v1909
    %v2342 = vpack.c.b16 %v1918, %v1910
    %v2343 = vpack.c.b16 %v1919, %v1911
    %v2344 = vpack.c.b16 %v1928, %v1920
    %v2345 = vpack.c.b16 %v1929, %v1921
    %v2346 = vpack.c.b16 %v1930, %v1922
    %v2347 = vpack.c.b16 %v1931, %v1923
    %v2348 = vpack.c.b16 %v1932, %v1924
    %v2349 = vpack.c.b16 %v1933, %v1925
    %v2350 = vpack.c.b16 %v1934, %v1926
    %v2351 = vpack.c.b16 %v1935, %v1927
    %v2352 = vpack.c.b16 %v1944, %v1936
    %v2353 = vpack.c.b16 %v1945, %v1937
    %v2354 = vpack.c.b16 %v1946, %v1938
    %v2355 = vpack.c.b16 %v1947, %v1939
    %v2356 = vpack.c.b16 %v1948, %v1940
    %v2357 = vpack.c.b16 %v1949, %v1941
    %v2358 = vpack.c.b16 %v1950, %v1942
    %v2359 = vpack.c.b16 %v1951, %v1943
    %v2360 = vpack.c.b16 %v1960, %v1952
    %v2361 = vpack.c.b16 %v1961, %v1953
    %v2362 = vpack.c.b16 %v1962, %v1954
    %v2363 = vpack.c.b16 %v1963, %v1955
    %v2364 = vpack.c.b16 %v1964, %v1956
    %v2365 = vpack.c.b16 %v1965, %v1957
    %v2366 = vpack.c.b16 %v1966, %v1958
    %v2367 = vpack.c.b16 %v1967, %v1959
    %v2368 = vpack.c.b16 %v1976, %v1968
    %v2369 = vpack.c.b16 %v1977, %v1969
    %v2370 = vpack.c.b16 %v1978, %v1970
    %v2371 = vpack.c.b16 %v1979, %v1971
    %v2372 = vpack.c.b16 %v1980, %v1972
    %v2373 = vpack.c.b16 %v1981, %v1973
    %v2374 = vpack.c.b16 %v1982, %v1974
    %v2375 = vpack.c.b16 %v1983, %v1975
    %v2376 = vpack.c.b16 %v1992, %v1984
    %v2377 = vpack.c.b16 %v1993, %v1985
    %v2378 = vpack.c.b16 %v1994, %v1986
    %v2379 = vpack.c.b16 %v1995, %v1987
    %v2380 = vpack.c.b16 %v1996, %v1988
    %v2381 = vpack.c.b16 %v1997, %v1989
    %v2382 = vpack.c.b16 %v1998, %v1990
    %v2383 = vpack.c.b16 %v1999, %v1991
    %2768 = vmatprep.subr.bf16.mxu0 %v2001
    %2769 = vmatpush1.bf16.msra.mxu0 %v2000
    %2770 = vmatprep.subr.bf16.mxu0 %v2009
    %2771 = vmatpush1.bf16.msra.mxu0 %v2008
    %2772 = vmatprep.subr.bf16.mxu0 %v2017
    %2773 = vmatpush1.bf16.msra.mxu0 %v2016
    %2774 = vmatprep.subr.bf16.mxu0 %v2025
    %2775 = vmatpush1.bf16.msra.mxu0 %v2024
    %2776 = vmatprep.subr.bf16.mxu0 %v2033
    %2777 = vmatpush1.bf16.msra.mxu0 %v2032
    %2778 = vmatprep.subr.bf16.mxu0 %v2041
    %2779 = vmatpush1.bf16.msra.mxu0 %v2040
    %2780 = vmatprep.subr.bf16.mxu0 %v2049
    %2781 = vmatpush1.bf16.msra.mxu0 %v2048
    %2782 = vmatprep.subr.bf16.mxu0 %v2057
    %2783 = vmatpush1.bf16.msra.mxu0 %v2056
    %2784 = vmatprep.subr.bf16.mxu0 %v2065
    %2785 = vmatpush1.bf16.msra.mxu0 %v2064
    %2786 = vmatprep.subr.bf16.mxu0 %v2073
    %2787 = vmatpush1.bf16.msra.mxu0 %v2072
    %2788 = vmatprep.subr.bf16.mxu0 %v2081
    %2789 = vmatpush1.bf16.msra.mxu0 %v2080
    %2790 = vmatprep.subr.bf16.mxu0 %v2089
    %2791 = vmatpush1.bf16.msra.mxu0 %v2088
    %2792 = vmatprep.subr.bf16.mxu0 %v2097
    %2793 = vmatpush1.bf16.msra.mxu0 %v2096
    %2794 = vmatprep.subr.bf16.mxu0 %v2105
    %2795 = vmatpush1.bf16.msra.mxu0 %v2104
    %2796 = vmatprep.subr.bf16.mxu0 %v2113
    %2797 = vmatpush1.bf16.msra.mxu0 %v2112
    %2798 = vmatprep.subr.bf16.mxu0 %v2121
    %2799 = vmatpush1.bf16.msra.mxu0 %v2120
    %2800 = vmatprep.mubr.bf16.mxu0 %v753
    %2801 = vmatmul.mubr.bf16.gmra.mrb[0].mxu0 %v752
    %v2802 = vpop.f32.mrb[0].mxu0
    %v2803 = vadd.f32 %v571, %v2802
    %v2804 = vpop.f32.mrb[0].mxu0
    %v2805 = vadd.f32 %v575, %v2804
    %v2806 = vpop.f32.mrb[0].mxu0
    %v2807 = vadd.f32 %v571, %v2806
    %v2808 = vpop.f32.mrb[0].mxu0
    %v2809 = vadd.f32 %v575, %v2808
    %2810 = vmatprep.mubr.bf16.mxu0 %v759
    %2811 = vmatmul.mubr.bf16.gmra.mrb[0].mxu0 %v758
    %v2812 = vpop.f32.mrb[0].mxu0
    %v2813 = vadd.f32 %v571, %v2812
    %v2814 = vpop.f32.mrb[0].mxu0
    %v2815 = vadd.f32 %v575, %v2814
    %v2816 = vpop.f32.mrb[0].mxu0
    %v2817 = vadd.f32 %v571, %v2816
    %v2818 = vpop.f32.mrb[0].mxu0
    %v2819 = vadd.f32 %v575, %v2818
    %2820 = vmatprep.mubr.bf16.mxu0 %v765
    %2821 = vmatmul.mubr.bf16.gmra.mrb[0].mxu0 %v764
    %v2822 = vpop.f32.mrb[0].mxu0
    %v2823 = vadd.f32 %v571, %v2822
    %v2824 = vpop.f32.mrb[0].mxu0
    %v2825 = vadd.f32 %v575, %v2824
    %v2826 = vpop.f32.mrb[0].mxu0
    %v2827 = vadd.f32 %v571, %v2826
    %v2828 = vpop.f32.mrb[0].mxu0
    %v2829 = vadd.f32 %v575, %v2828
    %2830 = vmatprep.mubr.bf16.mxu0 %v771
    %2831 = vmatmul.mubr.bf16.gmra.mrb[0].mxu0 %v770
    %v2832 = vpop.f32.mrb[0].mxu0
    %v2833 = vadd.f32 %v571, %v2832
    %v2834 = vpop.f32.mrb[0].mxu0
    %v2835 = vadd.f32 %v575, %v2834
    %v2836 = vpop.f32.mrb[0].mxu0
    %v2837 = vadd.f32 %v571, %v2836
    %v2838 = vpop.f32.mrb[0].mxu0
    %v2839 = vadd.f32 %v575, %v2838
    %2840 = vmatprep.mubr.bf16.mxu0 %v777
    %2841 = vmatmul.mubr.bf16.gmra.mrb[0].mxu0 %v776
    %v2842 = vpop.f32.mrb[0].mxu0
    %v2843 = vadd.f32 %v571, %v2842
    %v2844 = vpop.f32.mrb[0].mxu0
    %v2845 = vadd.f32 %v575, %v2844
    %v2846 = vpop.f32.mrb[0].mxu0
    %v2847 = vadd.f32 %v571, %v2846
    %v2848 = vpop.f32.mrb[0].mxu0
    %v2849 = vadd.f32 %v575, %v2848
    %2850 = vmatprep.mubr.bf16.mxu0 %v783
    %2851 = vmatmul.mubr.bf16.gmra.mrb[0].mxu0 %v782
    %v2852 = vpop.f32.mrb[0].mxu0
    %v2853 = vadd.f32 %v571, %v2852
    %v2854 = vpop.f32.mrb[0].mxu0
    %v2855 = vadd.f32 %v575, %v2854
    %v2856 = vpop.f32.mrb[0].mxu0
    %v2857 = vadd.f32 %v571, %v2856
    %v2858 = vpop.f32.mrb[0].mxu0
    %v2859 = vadd.f32 %v575, %v2858
    %2860 = vmatprep.mubr.bf16.mxu0 %v789
    %2861 = vmatmul.mubr.bf16.gmra.mrb[0].mxu0 %v788
    %v2862 = vpop.f32.mrb[0].mxu0
    %v2863 = vadd.f32 %v571, %v2862
    %v2864 = vpop.f32.mrb[0].mxu0
    %v2865 = vadd.f32 %v575, %v2864
    %v2866 = vpop.f32.mrb[0].mxu0
    %v2867 = vadd.f32 %v571, %v2866
    %v2868 = vpop.f32.mrb[0].mxu0
    %v2869 = vadd.f32 %v575, %v2868
    %2870 = vmatprep.mubr.bf16.mxu0 %v795
    %2871 = vmatmul.mubr.bf16.gmra.mrb[0].mxu0 %v794
    %v2872 = vpop.f32.mrb[0].mxu0
    %v2873 = vadd.f32 %v571, %v2872
    %v2874 = vpop.f32.mrb[0].mxu0
    %v2875 = vadd.f32 %v575, %v2874
    %v2876 = vpop.f32.mrb[0].mxu0
    %v2877 = vadd.f32 %v571, %v2876
    %v2878 = vpop.f32.mrb[0].mxu0
    %v2879 = vadd.f32 %v575, %v2878
    %2880 = vdwg.mxu0
    %2881 = vmatprep.subr.bf16.mxu0 %v2129
    %2882 = vmatpush1.bf16.msra.mxu0 %v2128
    %2883 = vmatprep.subr.bf16.mxu0 %v2137
    %2884 = vmatpush1.bf16.msra.mxu0 %v2136
    %2885 = vmatprep.subr.bf16.mxu0 %v2145
    %2886 = vmatpush1.bf16.msra.mxu0 %v2144
    %2887 = vmatprep.subr.bf16.mxu0 %v2153
    %2888 = vmatpush1.bf16.msra.mxu0 %v2152
    %2889 = vmatprep.subr.bf16.mxu0 %v2161
    %2890 = vmatpush1.bf16.msra.mxu0 %v2160
    %2891 = vmatprep.subr.bf16.mxu0 %v2169
    %2892 = vmatpush1.bf16.msra.mxu0 %v2168
    %2893 = vmatprep.subr.bf16.mxu0 %v2177
    %2894 = vmatpush1.bf16.msra.mxu0 %v2176
    %2895 = vmatprep.subr.bf16.mxu0 %v2185
    %2896 = vmatpush1.bf16.msra.mxu0 %v2184
    %2897 = vmatprep.subr.bf16.mxu0 %v2193
    %2898 = vmatpush1.bf16.msra.mxu0 %v2192
    %2899 = vmatprep.subr.bf16.mxu0 %v2201
    %2900 = vmatpush1.bf16.msra.mxu0 %v2200
    %2901 = vmatprep.subr.bf16.mxu0 %v2209
    %2902 = vmatpush1.bf16.msra.mxu0 %v2208
    %2903 = vmatprep.subr.bf16.mxu0 %v2217
    %2904 = vmatpush1.bf16.msra.mxu0 %v2216
    %2905 = vmatprep.subr.bf16.mxu0 %v2225
    %2906 = vmatpush1.bf16.msra.mxu0 %v2224
    %2907 = vmatprep.subr.bf16.mxu0 %v2233
    %2908 = vmatpush1.bf16.msra.mxu0 %v2232
    %2909 = vmatprep.subr.bf16.mxu0 %v2241
    %2910 = vmatpush1.bf16.msra.mxu0 %v2240
    %2911 = vmatprep.subr.bf16.mxu0 %v2249
    %2912 = vmatpush1.bf16.msra.mxu0 %v2248
    %2913 = vmatprep.mubr.bf16.mxu0 %v755
    %2914 = vmatmul.mubr.bf16.gmra.mrb[0].mxu0 %v754
    %v2915 = vpop.f32.mrb[0].mxu0
    %v2916 = vadd.f32 %v2803, %v2915
    %v2917 = vpop.f32.mrb[0].mxu0
    %v2918 = vadd.f32 %v2805, %v2917
    %v2919 = vpop.f32.mrb[0].mxu0
    %v2920 = vadd.f32 %v2807, %v2919
    %v2921 = vpop.f32.mrb[0].mxu0
    %v2922 = vadd.f32 %v2809, %v2921
    %2923 = vmatprep.mubr.bf16.mxu0 %v761
    %2924 = vmatmul.mubr.bf16.gmra.mrb[0].mxu0 %v760
    %v2925 = vpop.f32.mrb[0].mxu0
    %v2926 = vadd.f32 %v2813, %v2925
    %v2927 = vpop.f32.mrb[0].mxu0
    %v2928 = vadd.f32 %v2815, %v2927
    %v2929 = vpop.f32.mrb[0].mxu0
    %v2930 = vadd.f32 %v2817, %v2929
    %v2931 = vpop.f32.mrb[0].mxu0
    %v2932 = vadd.f32 %v2819, %v2931
    %2933 = vmatprep.mubr.bf16.mxu0 %v767
    %2934 = vmatmul.mubr.bf16.gmra.mrb[0].mxu0 %v766
    %v2935 = vpop.f32.mrb[0].mxu0
    %v2936 = vadd.f32 %v2823, %v2935
    %v2937 = vpop.f32.mrb[0].mxu0
    %v2938 = vadd.f32 %v2825, %v2937
    %v2939 = vpop.f32.mrb[0].mxu0
    %v2940 = vadd.f32 %v2827, %v2939
    %v2941 = vpop.f32.mrb[0].mxu0
    %v2942 = vadd.f32 %v2829, %v2941
    %2943 = vmatprep.mubr.bf16.mxu0 %v773
    %2944 = vmatmul.mubr.bf16.gmra.mrb[0].mxu0 %v772
    %v2945 = vpop.f32.mrb[0].mxu0
    %v2946 = vadd.f32 %v2833, %v2945
    %v2947 = vpop.f32.mrb[0].mxu0
    %v2948 = vadd.f32 %v2835, %v2947
    %v2949 = vpop.f32.mrb[0].mxu0
    %v2950 = vadd.f32 %v2837, %v2949
    %v2951 = vpop.f32.mrb[0].mxu0
    %v2952 = vadd.f32 %v2839, %v2951
    %2953 = vmatprep.mubr.bf16.mxu0 %v779
    %2954 = vmatmul.mubr.bf16.gmra.mrb[0].mxu0 %v778
    %v2955 = vpop.f32.mrb[0].mxu0
    %v2956 = vadd.f32 %v2843, %v2955
    %v2957 = vpop.f32.mrb[0].mxu0
    %v2958 = vadd.f32 %v2845, %v2957
    %v2959 = vpop.f32.mrb[0].mxu0
    %v2960 = vadd.f32 %v2847, %v2959
    %v2961 = vpop.f32.mrb[0].mxu0
    %v2962 = vadd.f32 %v2849, %v2961
    %2963 = vmatprep.mubr.bf16.mxu0 %v785
    %2964 = vmatmul.mubr.bf16.gmra.mrb[0].mxu0 %v784
    %v2965 = vpop.f32.mrb[0].mxu0
    %v2966 = vadd.f32 %v2853, %v2965
    %v2967 = vpop.f32.mrb[0].mxu0
    %v2968 = vadd.f32 %v2855, %v2967
    %v2969 = vpop.f32.mrb[0].mxu0
    %v2970 = vadd.f32 %v2857, %v2969
    %v2971 = vpop.f32.mrb[0].mxu0
    %v2972 = vadd.f32 %v2859, %v2971
    %2973 = vmatprep.mubr.bf16.mxu0 %v791
    %2974 = vmatmul.mubr.bf16.gmra.mrb[0].mxu0 %v790
    %v2975 = vpop.f32.mrb[0].mxu0
    %v2976 = vadd.f32 %v2863, %v2975
    %v2977 = vpop.f32.mrb[0].mxu0
    %v2978 = vadd.f32 %v2865, %v2977
    %v2979 = vpop.f32.mrb[0].mxu0
    %v2980 = vadd.f32 %v2867, %v2979
    %v2981 = vpop.f32.mrb[0].mxu0
    %v2982 = vadd.f32 %v2869, %v2981
    %2983 = vmatprep.mubr.bf16.mxu0 %v797
    %2984 = vmatmul.mubr.bf16.gmra.mrb[0].mxu0 %v796
    %v2985 = vpop.f32.mrb[0].mxu0
    %v2986 = vadd.f32 %v2873, %v2985
    %v2987 = vpop.f32.mrb[0].mxu0
    %v2988 = vadd.f32 %v2875, %v2987
    %v2989 = vpop.f32.mrb[0].mxu0
    %v2990 = vadd.f32 %v2877, %v2989
    %v2991 = vpop.f32.mrb[0].mxu0
    %v2992 = vadd.f32 %v2879, %v2991
    %2993 = vdwg.mxu0
    %2994 = vmatprep.subr.bf16.mxu0 %v2257
    %2995 = vmatpush1.bf16.msra.mxu0 %v2256
    %2996 = vmatprep.subr.bf16.mxu0 %v2265
    %2997 = vmatpush1.bf16.msra.mxu0 %v2264
    %2998 = vmatprep.subr.bf16.mxu0 %v2273
    %2999 = vmatpush1.bf16.msra.mxu0 %v2272
    %3000 = vmatprep.subr.bf16.mxu0 %v2281
    %3001 = vmatpush1.bf16.msra.mxu0 %v2280
    %3002 = vmatprep.subr.bf16.mxu0 %v2289
    %3003 = vmatpush1.bf16.msra.mxu0 %v2288
    %3004 = vmatprep.subr.bf16.mxu0 %v2297
    %3005 = vmatpush1.bf16.msra.mxu0 %v2296
    %3006 = vmatprep.subr.bf16.mxu0 %v2305
    %3007 = vmatpush1.bf16.msra.mxu0 %v2304
    %3008 = vmatprep.subr.bf16.mxu0 %v2313
    %3009 = vmatpush1.bf16.msra.mxu0 %v2312
    %3010 = vmatprep.subr.bf16.mxu0 %v2321
    %3011 = vmatpush1.bf16.msra.mxu0 %v2320
    %3012 = vmatprep.subr.bf16.mxu0 %v2329
    %3013 = vmatpush1.bf16.msra.mxu0 %v2328
    %3014 = vmatprep.subr.bf16.mxu0 %v2337
    %3015 = vmatpush1.bf16.msra.mxu0 %v2336
    %3016 = vmatprep.subr.bf16.mxu0 %v2345
    %3017 = vmatpush1.bf16.msra.mxu0 %v2344
    %3018 = vmatprep.subr.bf16.mxu0 %v2353
    %3019 = vmatpush1.bf16.msra.mxu0 %v2352
    %3020 = vmatprep.subr.bf16.mxu0 %v2361
    %3021 = vmatpush1.bf16.msra.mxu0 %v2360
    %3022 = vmatprep.subr.bf16.mxu0 %v2369
    %3023 = vmatpush1.bf16.msra.mxu0 %v2368
    %3024 = vmatprep.subr.bf16.mxu0 %v2377
    %3025 = vmatpush1.bf16.msra.mxu0 %v2376
    %3026 = vmatprep.mubr.bf16.mxu0 %v757
    %3027 = vmatmul.mubr.bf16.gmra.mrb[0].mxu0 %v756
    %v3028 = vpop.f32.mrb[0].mxu0
    %v3029 = vadd.f32 %v2916, %v3028
    %v3030 = vpop.f32.mrb[0].mxu0
    %v3031 = vadd.f32 %v2918, %v3030
    %v3032 = vpop.f32.mrb[0].mxu0
    %v3033 = vadd.f32 %v2920, %v3032
    %v3034 = vpop.f32.mrb[0].mxu0
    %v3035 = vadd.f32 %v2922, %v3034
    %3036 = vmatprep.mubr.bf16.mxu0 %v763
    %3037 = vmatmul.mubr.bf16.gmra.mrb[0].mxu0 %v762
    %v3038 = vpop.f32.mrb[0].mxu0
    %v3039 = vadd.f32 %v2926, %v3038
    %v3040 = vpop.f32.mrb[0].mxu0
    %v3041 = vadd.f32 %v2928, %v3040
    %v3042 = vpop.f32.mrb[0].mxu0
    %v3043 = vadd.f32 %v2930, %v3042
    %v3044 = vpop.f32.mrb[0].mxu0
    %v3045 = vadd.f32 %v2932, %v3044
    %3046 = vmatprep.mubr.bf16.mxu0 %v769
    %3047 = vmatmul.mubr.bf16.gmra.mrb[0].mxu0 %v768
    %v3048 = vpop.f32.mrb[0].mxu0
    %v3049 = vadd.f32 %v2936, %v3048
    %v3050 = vpop.f32.mrb[0].mxu0
    %v3051 = vadd.f32 %v2938, %v3050
    %v3052 = vpop.f32.mrb[0].mxu0
    %v3053 = vadd.f32 %v2940, %v3052
    %v3054 = vpop.f32.mrb[0].mxu0
    %v3055 = vadd.f32 %v2942, %v3054
    %3056 = vmatprep.mubr.bf16.mxu0 %v775
    %3057 = vmatmul.mubr.bf16.gmra.mrb[0].mxu0 %v774
    %v3058 = vpop.f32.mrb[0].mxu0
    %v3059 = vadd.f32 %v2946, %v3058
    %v3060 = vpop.f32.mrb[0].mxu0
    %v3061 = vadd.f32 %v2948, %v3060
    %v3062 = vpop.f32.mrb[0].mxu0
    %v3063 = vadd.f32 %v2950, %v3062
    %v3064 = vpop.f32.mrb[0].mxu0
    %v3065 = vadd.f32 %v2952, %v3064
    %3066 = vmatprep.mubr.bf16.mxu0 %v781
    %3067 = vmatmul.mubr.bf16.gmra.mrb[0].mxu0 %v780
    %v3068 = vpop.f32.mrb[0].mxu0
    %v3069 = vadd.f32 %v2956, %v3068
    %v3070 = vpop.f32.mrb[0].mxu0
    %v3071 = vadd.f32 %v2958, %v3070
    %v3072 = vpop.f32.mrb[0].mxu0
    %v3073 = vadd.f32 %v2960, %v3072
    %v3074 = vpop.f32.mrb[0].mxu0
    %v3075 = vadd.f32 %v2962, %v3074
    %3076 = vmatprep.mubr.bf16.mxu0 %v787
    %3077 = vmatmul.mubr.bf16.gmra.mrb[0].mxu0 %v786
    %v3078 = vpop.f32.mrb[0].mxu0
    %v3079 = vadd.f32 %v2966, %v3078
    %v3080 = vpop.f32.mrb[0].mxu0
    %v3081 = vadd.f32 %v2968, %v3080
    %v3082 = vpop.f32.mrb[0].mxu0
    %v3083 = vadd.f32 %v2970, %v3082
    %v3084 = vpop.f32.mrb[0].mxu0
    %v3085 = vadd.f32 %v2972, %v3084
    %3086 = vmatprep.mubr.bf16.mxu0 %v793
    %3087 = vmatmul.mubr.bf16.gmra.mrb[0].mxu0 %v792
    %v3088 = vpop.f32.mrb[0].mxu0
    %v3089 = vadd.f32 %v2976, %v3088
    %v3090 = vpop.f32.mrb[0].mxu0
    %v3091 = vadd.f32 %v2978, %v3090
    %v3092 = vpop.f32.mrb[0].mxu0
    %v3093 = vadd.f32 %v2980, %v3092
    %v3094 = vpop.f32.mrb[0].mxu0
    %v3095 = vadd.f32 %v2982, %v3094
    %3096 = vmatprep.mubr.bf16.mxu0 %v799
    %3097 = vmatmul.mubr.bf16.gmra.mrb[0].mxu0 %v798
    %v3098 = vpop.f32.mrb[0].mxu0
    %v3099 = vadd.f32 %v2986, %v3098
    %v3100 = vpop.f32.mrb[0].mxu0
    %v3101 = vadd.f32 %v2988, %v3100
    %v3102 = vpop.f32.mrb[0].mxu0
    %v3103 = vadd.f32 %v2990, %v3102
    %v3104 = vpop.f32.mrb[0].mxu0
    %v3105 = vadd.f32 %v2992, %v3104
    %3106 = vdwg.mxu0
    %3107 = vmatprep.subr.bf16.mxu0 %v2003
    %3108 = vmatpush1.bf16.msra.mxu0 %v2002
    %3109 = vmatprep.subr.bf16.mxu0 %v2011
    %3110 = vmatpush1.bf16.msra.mxu0 %v2010
    %3111 = vmatprep.subr.bf16.mxu0 %v2019
    %3112 = vmatpush1.bf16.msra.mxu0 %v2018
    %3113 = vmatprep.subr.bf16.mxu0 %v2027
    %3114 = vmatpush1.bf16.msra.mxu0 %v2026
    %3115 = vmatprep.subr.bf16.mxu0 %v2035
    %3116 = vmatpush1.bf16.msra.mxu0 %v2034
    %3117 = vmatprep.subr.bf16.mxu0 %v2043
    %3118 = vmatpush1.bf16.msra.mxu0 %v2042
    %3119 = vmatprep.subr.bf16.mxu0 %v2051
    %3120 = vmatpush1.bf16.msra.mxu0 %v2050
    %3121 = vmatprep.subr.bf16.mxu0 %v2059
    %3122 = vmatpush1.bf16.msra.mxu0 %v2058
    %3123 = vmatprep.subr.bf16.mxu0 %v2067
    %3124 = vmatpush1.bf16.msra.mxu0 %v2066
    %3125 = vmatprep.subr.bf16.mxu0 %v2075
    %3126 = vmatpush1.bf16.msra.mxu0 %v2074
    %3127 = vmatprep.subr.bf16.mxu0 %v2083
    %3128 = vmatpush1.bf16.msra.mxu0 %v2082
    %3129 = vmatprep.subr.bf16.mxu0 %v2091
    %3130 = vmatpush1.bf16.msra.mxu0 %v2090
    %3131 = vmatprep.subr.bf16.mxu0 %v2099
    %3132 = vmatpush1.bf16.msra.mxu0 %v2098
    %3133 = vmatprep.subr.bf16.mxu0 %v2107
    %3134 = vmatpush1.bf16.msra.mxu0 %v2106
    %3135 = vmatprep.subr.bf16.mxu0 %v2115
    %3136 = vmatpush1.bf16.msra.mxu0 %v2114
    %3137 = vmatprep.subr.bf16.mxu0 %v2123
    %3138 = vmatpush1.bf16.msra.mxu0 %v2122
    %3139 = vmatprep.mubr.bf16.mxu0 %v753
    %3140 = vmatmul.mubr.bf16.gmra.mrb[0].mxu0 %v752
    %v3141 = vpop.f32.mrb[0].mxu0
    %v3142 = vadd.f32 %v579, %v3141
    %v3143 = vpop.f32.mrb[0].mxu0
    %v3144 = vadd.f32 %v583, %v3143
    %v3145 = vpop.f32.mrb[0].mxu0
    %v3146 = vadd.f32 %v579, %v3145
    %v3147 = vpop.f32.mrb[0].mxu0
    %v3148 = vadd.f32 %v583, %v3147
    %3149 = vmatprep.mubr.bf16.mxu0 %v759
    %3150 = vmatmul.mubr.bf16.gmra.mrb[0].mxu0 %v758
    %v3151 = vpop.f32.mrb[0].mxu0
    %v3152 = vadd.f32 %v579, %v3151
    %v3153 = vpop.f32.mrb[0].mxu0
    %v3154 = vadd.f32 %v583, %v3153
    %v3155 = vpop.f32.mrb[0].mxu0
    %v3156 = vadd.f32 %v579, %v3155
    %v3157 = vpop.f32.mrb[0].mxu0
    %v3158 = vadd.f32 %v583, %v3157
    %3159 = vmatprep.mubr.bf16.mxu0 %v765
    %3160 = vmatmul.mubr.bf16.gmra.mrb[0].mxu0 %v764
    %v3161 = vpop.f32.mrb[0].mxu0
    %v3162 = vadd.f32 %v579, %v3161
    %v3163 = vpop.f32.mrb[0].mxu0
    %v3164 = vadd.f32 %v583, %v3163
    %v3165 = vpop.f32.mrb[0].mxu0
    %v3166 = vadd.f32 %v579, %v3165
    %v3167 = vpop.f32.mrb[0].mxu0
    %v3168 = vadd.f32 %v583, %v3167
    %3169 = vmatprep.mubr.bf16.mxu0 %v771
    %3170 = vmatmul.mubr.bf16.gmra.mrb[0].mxu0 %v770
    %v3171 = vpop.f32.mrb[0].mxu0
    %v3172 = vadd.f32 %v579, %v3171
    %v3173 = vpop.f32.mrb[0].mxu0
    %v3174 = vadd.f32 %v583, %v3173
    %v3175 = vpop.f32.mrb[0].mxu0
    %v3176 = vadd.f32 %v579, %v3175
    %v3177 = vpop.f32.mrb[0].mxu0
    %v3178 = vadd.f32 %v583, %v3177
    %3179 = vmatprep.mubr.bf16.mxu0 %v777
    %3180 = vmatmul.mubr.bf16.gmra.mrb[0].mxu0 %v776
    %v3181 = vpop.f32.mrb[0].mxu0
    %v3182 = vadd.f32 %v579, %v3181
    %v3183 = vpop.f32.mrb[0].mxu0
    %v3184 = vadd.f32 %v583, %v3183
    %v3185 = vpop.f32.mrb[0].mxu0
    %v3186 = vadd.f32 %v579, %v3185
    %v3187 = vpop.f32.mrb[0].mxu0
    %v3188 = vadd.f32 %v583, %v3187
    %3189 = vmatprep.mubr.bf16.mxu0 %v783
    %3190 = vmatmul.mubr.bf16.gmra.mrb[0].mxu0 %v782
    %v3191 = vpop.f32.mrb[0].mxu0
    %v3192 = vadd.f32 %v579, %v3191
    %v3193 = vpop.f32.mrb[0].mxu0
    %v3194 = vadd.f32 %v583, %v3193
    %v3195 = vpop.f32.mrb[0].mxu0
    %v3196 = vadd.f32 %v579, %v3195
    %v3197 = vpop.f32.mrb[0].mxu0
    %v3198 = vadd.f32 %v583, %v3197
    %3199 = vmatprep.mubr.bf16.mxu0 %v789
    %3200 = vmatmul.mubr.bf16.gmra.mrb[0].mxu0 %v788
    %v3201 = vpop.f32.mrb[0].mxu0
    %v3202 = vadd.f32 %v579, %v3201
    %v3203 = vpop.f32.mrb[0].mxu0
    %v3204 = vadd.f32 %v583, %v3203
    %v3205 = vpop.f32.mrb[0].mxu0
    %v3206 = vadd.f32 %v579, %v3205
    %v3207 = vpop.f32.mrb[0].mxu0
    %v3208 = vadd.f32 %v583, %v3207
    %3209 = vmatprep.mubr.bf16.mxu0 %v795
    %3210 = vmatmul.mubr.bf16.gmra.mrb[0].mxu0 %v794
    %v3211 = vpop.f32.mrb[0].mxu0
    %v3212 = vadd.f32 %v579, %v3211
    %v3213 = vpop.f32.mrb[0].mxu0
    %v3214 = vadd.f32 %v583, %v3213
    %v3215 = vpop.f32.mrb[0].mxu0
    %v3216 = vadd.f32 %v579, %v3215
    %v3217 = vpop.f32.mrb[0].mxu0
    %v3218 = vadd.f32 %v583, %v3217
    %3219 = vdwg.mxu0
    %3220 = vmatprep.subr.bf16.mxu0 %v2131
    %3221 = vmatpush1.bf16.msra.mxu0 %v2130
    %3222 = vmatprep.subr.bf16.mxu0 %v2139
    %3223 = vmatpush1.bf16.msra.mxu0 %v2138
    %3224 = vmatprep.subr.bf16.mxu0 %v2147
    %3225 = vmatpush1.bf16.msra.mxu0 %v2146
    %3226 = vmatprep.subr.bf16.mxu0 %v2155
    %3227 = vmatpush1.bf16.msra.mxu0 %v2154
    %3228 = vmatprep.subr.bf16.mxu0 %v2163
    %3229 = vmatpush1.bf16.msra.mxu0 %v2162
    %3230 = vmatprep.subr.bf16.mxu0 %v2171
    %3231 = vmatpush1.bf16.msra.mxu0 %v2170
    %3232 = vmatprep.subr.bf16.mxu0 %v2179
    %3233 = vmatpush1.bf16.msra.mxu0 %v2178
    %3234 = vmatprep.subr.bf16.mxu0 %v2187
    %3235 = vmatpush1.bf16.msra.mxu0 %v2186
    %3236 = vmatprep.subr.bf16.mxu0 %v2195
    %3237 = vmatpush1.bf16.msra.mxu0 %v2194
    %3238 = vmatprep.subr.bf16.mxu0 %v2203
    %3239 = vmatpush1.bf16.msra.mxu0 %v2202
    %3240 = vmatprep.subr.bf16.mxu0 %v2211
    %3241 = vmatpush1.bf16.msra.mxu0 %v2210
    %3242 = vmatprep.subr.bf16.mxu0 %v2219
    %3243 = vmatpush1.bf16.msra.mxu0 %v2218
    %3244 = vmatprep.subr.bf16.mxu0 %v2227
    %3245 = vmatpush1.bf16.msra.mxu0 %v2226
    %3246 = vmatprep.subr.bf16.mxu0 %v2235
    %3247 = vmatpush1.bf16.msra.mxu0 %v2234
    %3248 = vmatprep.subr.bf16.mxu0 %v2243
    %3249 = vmatpush1.bf16.msra.mxu0 %v2242
    %3250 = vmatprep.subr.bf16.mxu0 %v2251
    %3251 = vmatpush1.bf16.msra.mxu0 %v2250
    %3252 = vmatprep.mubr.bf16.mxu0 %v755
    %3253 = vmatmul.mubr.bf16.gmra.mrb[0].mxu0 %v754
    %v3254 = vpop.f32.mrb[0].mxu0
    %v3255 = vadd.f32 %v3142, %v3254
    %v3256 = vpop.f32.mrb[0].mxu0
    %v3257 = vadd.f32 %v3144, %v3256
    %v3258 = vpop.f32.mrb[0].mxu0
    %v3259 = vadd.f32 %v3146, %v3258
    %v3260 = vpop.f32.mrb[0].mxu0
    %v3261 = vadd.f32 %v3148, %v3260
    %3262 = vmatprep.mubr.bf16.mxu0 %v761
    %3263 = vmatmul.mubr.bf16.gmra.mrb[0].mxu0 %v760
    %v3264 = vpop.f32.mrb[0].mxu0
    %v3265 = vadd.f32 %v3152, %v3264
    %v3266 = vpop.f32.mrb[0].mxu0
    %v3267 = vadd.f32 %v3154, %v3266
    %v3268 = vpop.f32.mrb[0].mxu0
    %v3269 = vadd.f32 %v3156, %v3268
    %v3270 = vpop.f32.mrb[0].mxu0
    %v3271 = vadd.f32 %v3158, %v3270
    %3272 = vmatprep.mubr.bf16.mxu0 %v767
    %3273 = vmatmul.mubr.bf16.gmra.mrb[0].mxu0 %v766
    %v3274 = vpop.f32.mrb[0].mxu0
    %v3275 = vadd.f32 %v3162, %v3274
    %v3276 = vpop.f32.mrb[0].mxu0
    %v3277 = vadd.f32 %v3164, %v3276
    %v3278 = vpop.f32.mrb[0].mxu0
    %v3279 = vadd.f32 %v3166, %v3278
    %v3280 = vpop.f32.mrb[0].mxu0
    %v3281 = vadd.f32 %v3168, %v3280
    %3282 = vmatprep.mubr.bf16.mxu0 %v773
    %3283 = vmatmul.mubr.bf16.gmra.mrb[0].mxu0 %v772
    %v3284 = vpop.f32.mrb[0].mxu0
    %v3285 = vadd.f32 %v3172, %v3284
    %v3286 = vpop.f32.mrb[0].mxu0
    %v3287 = vadd.f32 %v3174, %v3286
    %v3288 = vpop.f32.mrb[0].mxu0
    %v3289 = vadd.f32 %v3176, %v3288
    %v3290 = vpop.f32.mrb[0].mxu0
    %v3291 = vadd.f32 %v3178, %v3290
    %3292 = vmatprep.mubr.bf16.mxu0 %v779
    %3293 = vmatmul.mubr.bf16.gmra.mrb[0].mxu0 %v778
    %v3294 = vpop.f32.mrb[0].mxu0
    %v3295 = vadd.f32 %v3182, %v3294
    %v3296 = vpop.f32.mrb[0].mxu0
    %v3297 = vadd.f32 %v3184, %v3296
    %v3298 = vpop.f32.mrb[0].mxu0
    %v3299 = vadd.f32 %v3186, %v3298
    %v3300 = vpop.f32.mrb[0].mxu0
    %v3301 = vadd.f32 %v3188, %v3300
    %3302 = vmatprep.mubr.bf16.mxu0 %v785
    %3303 = vmatmul.mubr.bf16.gmra.mrb[0].mxu0 %v784
    %v3304 = vpop.f32.mrb[0].mxu0
    %v3305 = vadd.f32 %v3192, %v3304
    %v3306 = vpop.f32.mrb[0].mxu0
    %v3307 = vadd.f32 %v3194, %v3306
    %v3308 = vpop.f32.mrb[0].mxu0
    %v3309 = vadd.f32 %v3196, %v3308
    %v3310 = vpop.f32.mrb[0].mxu0
    %v3311 = vadd.f32 %v3198, %v3310
    %3312 = vmatprep.mubr.bf16.mxu0 %v791
    %3313 = vmatmul.mubr.bf16.gmra.mrb[0].mxu0 %v790
    %v3314 = vpop.f32.mrb[0].mxu0
    %v3315 = vadd.f32 %v3202, %v3314
    %v3316 = vpop.f32.mrb[0].mxu0
    %v3317 = vadd.f32 %v3204, %v3316
    %v3318 = vpop.f32.mrb[0].mxu0
    %v3319 = vadd.f32 %v3206, %v3318
    %v3320 = vpop.f32.mrb[0].mxu0
    %v3321 = vadd.f32 %v3208, %v3320
    %3322 = vmatprep.mubr.bf16.mxu0 %v797
    %3323 = vmatmul.mubr.bf16.gmra.mrb[0].mxu0 %v796
    %v3324 = vpop.f32.mrb[0].mxu0
    %v3325 = vadd.f32 %v3212, %v3324
    %v3326 = vpop.f32.mrb[0].mxu0
    %v3327 = vadd.f32 %v3214, %v3326
    %v3328 = vpop.f32.mrb[0].mxu0
    %v3329 = vadd.f32 %v3216, %v3328
    %v3330 = vpop.f32.mrb[0].mxu0
    %v3331 = vadd.f32 %v3218, %v3330
    %3332 = vdwg.mxu0
    %3333 = vmatprep.subr.bf16.mxu0 %v2259
    %3334 = vmatpush1.bf16.msra.mxu0 %v2258
    %3335 = vmatprep.subr.bf16.mxu0 %v2267
    %3336 = vmatpush1.bf16.msra.mxu0 %v2266
    %3337 = vmatprep.subr.bf16.mxu0 %v2275
    %3338 = vmatpush1.bf16.msra.mxu0 %v2274
    %3339 = vmatprep.subr.bf16.mxu0 %v2283
    %3340 = vmatpush1.bf16.msra.mxu0 %v2282
    %3341 = vmatprep.subr.bf16.mxu0 %v2291
    %3342 = vmatpush1.bf16.msra.mxu0 %v2290
    %3343 = vmatprep.subr.bf16.mxu0 %v2299
    %3344 = vmatpush1.bf16.msra.mxu0 %v2298
    %3345 = vmatprep.subr.bf16.mxu0 %v2307
    %3346 = vmatpush1.bf16.msra.mxu0 %v2306
    %3347 = vmatprep.subr.bf16.mxu0 %v2315
    %3348 = vmatpush1.bf16.msra.mxu0 %v2314
    %3349 = vmatprep.subr.bf16.mxu0 %v2323
    %3350 = vmatpush1.bf16.msra.mxu0 %v2322
    %3351 = vmatprep.subr.bf16.mxu0 %v2331
    %3352 = vmatpush1.bf16.msra.mxu0 %v2330
    %3353 = vmatprep.subr.bf16.mxu0 %v2339
    %3354 = vmatpush1.bf16.msra.mxu0 %v2338
    %3355 = vmatprep.subr.bf16.mxu0 %v2347
    %3356 = vmatpush1.bf16.msra.mxu0 %v2346
    %3357 = vmatprep.subr.bf16.mxu0 %v2355
    %3358 = vmatpush1.bf16.msra.mxu0 %v2354
    %3359 = vmatprep.subr.bf16.mxu0 %v2363
    %3360 = vmatpush1.bf16.msra.mxu0 %v2362
    %3361 = vmatprep.subr.bf16.mxu0 %v2371
    %3362 = vmatpush1.bf16.msra.mxu0 %v2370
    %3363 = vmatprep.subr.bf16.mxu0 %v2379
    %3364 = vmatpush1.bf16.msra.mxu0 %v2378
    %3365 = vmatprep.mubr.bf16.mxu0 %v757
    %3366 = vmatmul.mubr.bf16.gmra.mrb[0].mxu0 %v756
    %v3367 = vpop.f32.mrb[0].mxu0
    %v3368 = vadd.f32 %v3255, %v3367
    %v3369 = vpop.f32.mrb[0].mxu0
    %v3370 = vadd.f32 %v3257, %v3369
    %v3371 = vpop.f32.mrb[0].mxu0
    %v3372 = vadd.f32 %v3259, %v3371
    %v3373 = vpop.f32.mrb[0].mxu0
    %v3374 = vadd.f32 %v3261, %v3373
    %3375 = vmatprep.mubr.bf16.mxu0 %v763
    %3376 = vmatmul.mubr.bf16.gmra.mrb[0].mxu0 %v762
    %v3377 = vpop.f32.mrb[0].mxu0
    %v3378 = vadd.f32 %v3265, %v3377
    %v3379 = vpop.f32.mrb[0].mxu0
    %v3380 = vadd.f32 %v3267, %v3379
    %v3381 = vpop.f32.mrb[0].mxu0
    %v3382 = vadd.f32 %v3269, %v3381
    %v3383 = vpop.f32.mrb[0].mxu0
    %v3384 = vadd.f32 %v3271, %v3383
    %3385 = vmatprep.mubr.bf16.mxu0 %v769
    %3386 = vmatmul.mubr.bf16.gmra.mrb[0].mxu0 %v768
    %v3387 = vpop.f32.mrb[0].mxu0
    %v3388 = vadd.f32 %v3275, %v3387
    %v3389 = vpop.f32.mrb[0].mxu0
    %v3390 = vadd.f32 %v3277, %v3389
    %v3391 = vpop.f32.mrb[0].mxu0
    %v3392 = vadd.f32 %v3279, %v3391
    %v3393 = vpop.f32.mrb[0].mxu0
    %v3394 = vadd.f32 %v3281, %v3393
    %3395 = vmatprep.mubr.bf16.mxu0 %v775
    %3396 = vmatmul.mubr.bf16.gmra.mrb[0].mxu0 %v774
    %v3397 = vpop.f32.mrb[0].mxu0
    %v3398 = vadd.f32 %v3285, %v3397
    %v3399 = vpop.f32.mrb[0].mxu0
    %v3400 = vadd.f32 %v3287, %v3399
    %v3401 = vpop.f32.mrb[0].mxu0
    %v3402 = vadd.f32 %v3289, %v3401
    %v3403 = vpop.f32.mrb[0].mxu0
    %v3404 = vadd.f32 %v3291, %v3403
    %3405 = vmatprep.mubr.bf16.mxu0 %v781
    %3406 = vmatmul.mubr.bf16.gmra.mrb[0].mxu0 %v780
    %v3407 = vpop.f32.mrb[0].mxu0
    %v3408 = vadd.f32 %v3295, %v3407
    %v3409 = vpop.f32.mrb[0].mxu0
    %v3410 = vadd.f32 %v3297, %v3409
    %v3411 = vpop.f32.mrb[0].mxu0
    %v3412 = vadd.f32 %v3299, %v3411
    %v3413 = vpop.f32.mrb[0].mxu0
    %v3414 = vadd.f32 %v3301, %v3413
    %3415 = vmatprep.mubr.bf16.mxu0 %v787
    %3416 = vmatmul.mubr.bf16.gmra.mrb[0].mxu0 %v786
    %v3417 = vpop.f32.mrb[0].mxu0
    %v3418 = vadd.f32 %v3305, %v3417
    %v3419 = vpop.f32.mrb[0].mxu0
    %v3420 = vadd.f32 %v3307, %v3419
    %v3421 = vpop.f32.mrb[0].mxu0
    %v3422 = vadd.f32 %v3309, %v3421
    %v3423 = vpop.f32.mrb[0].mxu0
    %v3424 = vadd.f32 %v3311, %v3423
    %3425 = vmatprep.mubr.bf16.mxu0 %v793
    %3426 = vmatmul.mubr.bf16.gmra.mrb[0].mxu0 %v792
    %v3427 = vpop.f32.mrb[0].mxu0
    %v3428 = vadd.f32 %v3315, %v3427
    %v3429 = vpop.f32.mrb[0].mxu0
    %v3430 = vadd.f32 %v3317, %v3429
    %v3431 = vpop.f32.mrb[0].mxu0
    %v3432 = vadd.f32 %v3319, %v3431
    %v3433 = vpop.f32.mrb[0].mxu0
    %v3434 = vadd.f32 %v3321, %v3433
    %3435 = vmatprep.mubr.bf16.mxu0 %v799
    %3436 = vmatmul.mubr.bf16.gmra.mrb[0].mxu0 %v798
    %v3437 = vpop.f32.mrb[0].mxu0
    %v3438 = vadd.f32 %v3325, %v3437
    %v3439 = vpop.f32.mrb[0].mxu0
    %v3440 = vadd.f32 %v3327, %v3439
    %v3441 = vpop.f32.mrb[0].mxu0
    %v3442 = vadd.f32 %v3329, %v3441
    %v3443 = vpop.f32.mrb[0].mxu0
    %v3444 = vadd.f32 %v3331, %v3443
    %3445 = vdwg.mxu0
    %3446 = vmatprep.subr.bf16.mxu0 %v2005
    %3447 = vmatpush1.bf16.msra.mxu0 %v2004
    %3448 = vmatprep.subr.bf16.mxu0 %v2013
    %3449 = vmatpush1.bf16.msra.mxu0 %v2012
    %3450 = vmatprep.subr.bf16.mxu0 %v2021
    %3451 = vmatpush1.bf16.msra.mxu0 %v2020
    %3452 = vmatprep.subr.bf16.mxu0 %v2029
    %3453 = vmatpush1.bf16.msra.mxu0 %v2028
    %3454 = vmatprep.subr.bf16.mxu0 %v2037
    %3455 = vmatpush1.bf16.msra.mxu0 %v2036
    %3456 = vmatprep.subr.bf16.mxu0 %v2045
    %3457 = vmatpush1.bf16.msra.mxu0 %v2044
    %3458 = vmatprep.subr.bf16.mxu0 %v2053
    %3459 = vmatpush1.bf16.msra.mxu0 %v2052
    %3460 = vmatprep.subr.bf16.mxu0 %v2061
    %3461 = vmatpush1.bf16.msra.mxu0 %v2060
    %3462 = vmatprep.subr.bf16.mxu0 %v2069
    %3463 = vmatpush1.bf16.msra.mxu0 %v2068
    %3464 = vmatprep.subr.bf16.mxu0 %v2077
    %3465 = vmatpush1.bf16.msra.mxu0 %v2076
    %3466 = vmatprep.subr.bf16.mxu0 %v2085
    %3467 = vmatpush1.bf16.msra.mxu0 %v2084
    %3468 = vmatprep.subr.bf16.mxu0 %v2093
    %3469 = vmatpush1.bf16.msra.mxu0 %v2092
    %3470 = vmatprep.subr.bf16.mxu0 %v2101
    %3471 = vmatpush1.bf16.msra.mxu0 %v2100
    %3472 = vmatprep.subr.bf16.mxu0 %v2109
    %3473 = vmatpush1.bf16.msra.mxu0 %v2108
    %3474 = vmatprep.subr.bf16.mxu0 %v2117
    %3475 = vmatpush1.bf16.msra.mxu0 %v2116
    %3476 = vmatprep.subr.bf16.mxu0 %v2125
    %3477 = vmatpush1.bf16.msra.mxu0 %v2124
    %3478 = vmatprep.mubr.bf16.mxu0 %v753
    %3479 = vmatmul.mubr.bf16.gmra.mrb[0].mxu0 %v752
    %v3480 = vpop.f32.mrb[0].mxu0
    %v3481 = vadd.f32 %v587, %v3480
    %v3482 = vpop.f32.mrb[0].mxu0
    %v3483 = vadd.f32 %v591, %v3482
    %v3484 = vpop.f32.mrb[0].mxu0
    %v3485 = vadd.f32 %v587, %v3484
    %v3486 = vpop.f32.mrb[0].mxu0
    %v3487 = vadd.f32 %v591, %v3486
    %3488 = vmatprep.mubr.bf16.mxu0 %v759
    %3489 = vmatmul.mubr.bf16.gmra.mrb[0].mxu0 %v758
    %v3490 = vpop.f32.mrb[0].mxu0
    %v3491 = vadd.f32 %v587, %v3490
    %v3492 = vpop.f32.mrb[0].mxu0
    %v3493 = vadd.f32 %v591, %v3492
    %v3494 = vpop.f32.mrb[0].mxu0
    %v3495 = vadd.f32 %v587, %v3494
    %v3496 = vpop.f32.mrb[0].mxu0
    %v3497 = vadd.f32 %v591, %v3496
    %3498 = vmatprep.mubr.bf16.mxu0 %v765
    %3499 = vmatmul.mubr.bf16.gmra.mrb[0].mxu0 %v764
    %v3500 = vpop.f32.mrb[0].mxu0
    %v3501 = vadd.f32 %v587, %v3500
    %v3502 = vpop.f32.mrb[0].mxu0
    %v3503 = vadd.f32 %v591, %v3502
    %v3504 = vpop.f32.mrb[0].mxu0
    %v3505 = vadd.f32 %v587, %v3504
    %v3506 = vpop.f32.mrb[0].mxu0
    %v3507 = vadd.f32 %v591, %v3506
    %3508 = vmatprep.mubr.bf16.mxu0 %v771
    %3509 = vmatmul.mubr.bf16.gmra.mrb[0].mxu0 %v770
    %v3510 = vpop.f32.mrb[0].mxu0
    %v3511 = vadd.f32 %v587, %v3510
    %v3512 = vpop.f32.mrb[0].mxu0
    %v3513 = vadd.f32 %v591, %v3512
    %v3514 = vpop.f32.mrb[0].mxu0
    %v3515 = vadd.f32 %v587, %v3514
    %v3516 = vpop.f32.mrb[0].mxu0
    %v3517 = vadd.f32 %v591, %v3516
    %3518 = vmatprep.mubr.bf16.mxu0 %v777
    %3519 = vmatmul.mubr.bf16.gmra.mrb[0].mxu0 %v776
    %v3520 = vpop.f32.mrb[0].mxu0
    %v3521 = vadd.f32 %v587, %v3520
    %v3522 = vpop.f32.mrb[0].mxu0
    %v3523 = vadd.f32 %v591, %v3522
    %v3524 = vpop.f32.mrb[0].mxu0
    %v3525 = vadd.f32 %v587, %v3524
    %v3526 = vpop.f32.mrb[0].mxu0
    %v3527 = vadd.f32 %v591, %v3526
    %3528 = vmatprep.mubr.bf16.mxu0 %v783
    %3529 = vmatmul.mubr.bf16.gmra.mrb[0].mxu0 %v782
    %v3530 = vpop.f32.mrb[0].mxu0
    %v3531 = vadd.f32 %v587, %v3530
    %v3532 = vpop.f32.mrb[0].mxu0
    %v3533 = vadd.f32 %v591, %v3532
    %v3534 = vpop.f32.mrb[0].mxu0
    %v3535 = vadd.f32 %v587, %v3534
    %v3536 = vpop.f32.mrb[0].mxu0
    %v3537 = vadd.f32 %v591, %v3536
    %3538 = vmatprep.mubr.bf16.mxu0 %v789
    %3539 = vmatmul.mubr.bf16.gmra.mrb[0].mxu0 %v788
    %v3540 = vpop.f32.mrb[0].mxu0
    %v3541 = vadd.f32 %v587, %v3540
    %v3542 = vpop.f32.mrb[0].mxu0
    %v3543 = vadd.f32 %v591, %v3542
    %v3544 = vpop.f32.mrb[0].mxu0
    %v3545 = vadd.f32 %v587, %v3544
    %v3546 = vpop.f32.mrb[0].mxu0
    %v3547 = vadd.f32 %v591, %v3546
    %3548 = vmatprep.mubr.bf16.mxu0 %v795
    %3549 = vmatmul.mubr.bf16.gmra.mrb[0].mxu0 %v794
    %v3550 = vpop.f32.mrb[0].mxu0
    %v3551 = vadd.f32 %v587, %v3550
    %v3552 = vpop.f32.mrb[0].mxu0
    %v3553 = vadd.f32 %v591, %v3552
    %v3554 = vpop.f32.mrb[0].mxu0
    %v3555 = vadd.f32 %v587, %v3554
    %v3556 = vpop.f32.mrb[0].mxu0
    %v3557 = vadd.f32 %v591, %v3556
    %3558 = vdwg.mxu0
    %3559 = vmatprep.subr.bf16.mxu0 %v2133
    %3560 = vmatpush1.bf16.msra.mxu0 %v2132
    %3561 = vmatprep.subr.bf16.mxu0 %v2141
    %3562 = vmatpush1.bf16.msra.mxu0 %v2140
    %3563 = vmatprep.subr.bf16.mxu0 %v2149
    %3564 = vmatpush1.bf16.msra.mxu0 %v2148
    %3565 = vmatprep.subr.bf16.mxu0 %v2157
    %3566 = vmatpush1.bf16.msra.mxu0 %v2156
    %3567 = vmatprep.subr.bf16.mxu0 %v2165
    %3568 = vmatpush1.bf16.msra.mxu0 %v2164
    %3569 = vmatprep.subr.bf16.mxu0 %v2173
    %3570 = vmatpush1.bf16.msra.mxu0 %v2172
    %3571 = vmatprep.subr.bf16.mxu0 %v2181
    %3572 = vmatpush1.bf16.msra.mxu0 %v2180
    %3573 = vmatprep.subr.bf16.mxu0 %v2189
    %3574 = vmatpush1.bf16.msra.mxu0 %v2188
    %3575 = vmatprep.subr.bf16.mxu0 %v2197
    %3576 = vmatpush1.bf16.msra.mxu0 %v2196
    %3577 = vmatprep.subr.bf16.mxu0 %v2205
    %3578 = vmatpush1.bf16.msra.mxu0 %v2204
    %3579 = vmatprep.subr.bf16.mxu0 %v2213
    %3580 = vmatpush1.bf16.msra.mxu0 %v2212
    %3581 = vmatprep.subr.bf16.mxu0 %v2221
    %3582 = vmatpush1.bf16.msra.mxu0 %v2220
    %3583 = vmatprep.subr.bf16.mxu0 %v2229
    %3584 = vmatpush1.bf16.msra.mxu0 %v2228
    %3585 = vmatprep.subr.bf16.mxu0 %v2237
    %3586 = vmatpush1.bf16.msra.mxu0 %v2236
    %3587 = vmatprep.subr.bf16.mxu0 %v2245
    %3588 = vmatpush1.bf16.msra.mxu0 %v2244
    %3589 = vmatprep.subr.bf16.mxu0 %v2253
    %3590 = vmatpush1.bf16.msra.mxu0 %v2252
    %3591 = vmatprep.mubr.bf16.mxu0 %v755
    %3592 = vmatmul.mubr.bf16.gmra.mrb[0].mxu0 %v754
    %v3593 = vpop.f32.mrb[0].mxu0
    %v3594 = vadd.f32 %v3481, %v3593
    %v3595 = vpop.f32.mrb[0].mxu0
    %v3596 = vadd.f32 %v3483, %v3595
    %v3597 = vpop.f32.mrb[0].mxu0
    %v3598 = vadd.f32 %v3485, %v3597
    %v3599 = vpop.f32.mrb[0].mxu0
    %v3600 = vadd.f32 %v3487, %v3599
    %3601 = vmatprep.mubr.bf16.mxu0 %v761
    %3602 = vmatmul.mubr.bf16.gmra.mrb[0].mxu0 %v760
    %v3603 = vpop.f32.mrb[0].mxu0
    %v3604 = vadd.f32 %v3491, %v3603
    %v3605 = vpop.f32.mrb[0].mxu0
    %v3606 = vadd.f32 %v3493, %v3605
    %v3607 = vpop.f32.mrb[0].mxu0
    %v3608 = vadd.f32 %v3495, %v3607
    %v3609 = vpop.f32.mrb[0].mxu0
    %v3610 = vadd.f32 %v3497, %v3609
    %3611 = vmatprep.mubr.bf16.mxu0 %v767
    %3612 = vmatmul.mubr.bf16.gmra.mrb[0].mxu0 %v766
    %v3613 = vpop.f32.mrb[0].mxu0
    %v3614 = vadd.f32 %v3501, %v3613
    %v3615 = vpop.f32.mrb[0].mxu0
    %v3616 = vadd.f32 %v3503, %v3615
    %v3617 = vpop.f32.mrb[0].mxu0
    %v3618 = vadd.f32 %v3505, %v3617
    %v3619 = vpop.f32.mrb[0].mxu0
    %v3620 = vadd.f32 %v3507, %v3619
    %3621 = vmatprep.mubr.bf16.mxu0 %v773
    %3622 = vmatmul.mubr.bf16.gmra.mrb[0].mxu0 %v772
    %v3623 = vpop.f32.mrb[0].mxu0
    %v3624 = vadd.f32 %v3511, %v3623
    %v3625 = vpop.f32.mrb[0].mxu0
    %v3626 = vadd.f32 %v3513, %v3625
    %v3627 = vpop.f32.mrb[0].mxu0
    %v3628 = vadd.f32 %v3515, %v3627
    %v3629 = vpop.f32.mrb[0].mxu0
    %v3630 = vadd.f32 %v3517, %v3629
    %3631 = vmatprep.mubr.bf16.mxu0 %v779
    %3632 = vmatmul.mubr.bf16.gmra.mrb[0].mxu0 %v778
    %v3633 = vpop.f32.mrb[0].mxu0
    %v3634 = vadd.f32 %v3521, %v3633
    %v3635 = vpop.f32.mrb[0].mxu0
    %v3636 = vadd.f32 %v3523, %v3635
    %v3637 = vpop.f32.mrb[0].mxu0
    %v3638 = vadd.f32 %v3525, %v3637
    %v3639 = vpop.f32.mrb[0].mxu0
    %v3640 = vadd.f32 %v3527, %v3639
    %3641 = vmatprep.mubr.bf16.mxu0 %v785
    %3642 = vmatmul.mubr.bf16.gmra.mrb[0].mxu0 %v784
    %v3643 = vpop.f32.mrb[0].mxu0
    %v3644 = vadd.f32 %v3531, %v3643
    %v3645 = vpop.f32.mrb[0].mxu0
    %v3646 = vadd.f32 %v3533, %v3645
    %v3647 = vpop.f32.mrb[0].mxu0
    %v3648 = vadd.f32 %v3535, %v3647
    %v3649 = vpop.f32.mrb[0].mxu0
    %v3650 = vadd.f32 %v3537, %v3649
    %3651 = vmatprep.mubr.bf16.mxu0 %v791
    %3652 = vmatmul.mubr.bf16.gmra.mrb[0].mxu0 %v790
    %v3653 = vpop.f32.mrb[0].mxu0
    %v3654 = vadd.f32 %v3541, %v3653
    %v3655 = vpop.f32.mrb[0].mxu0
    %v3656 = vadd.f32 %v3543, %v3655
    %v3657 = vpop.f32.mrb[0].mxu0
    %v3658 = vadd.f32 %v3545, %v3657
    %v3659 = vpop.f32.mrb[0].mxu0
    %v3660 = vadd.f32 %v3547, %v3659
    %3661 = vmatprep.mubr.bf16.mxu0 %v797
    %3662 = vmatmul.mubr.bf16.gmra.mrb[0].mxu0 %v796
    %v3663 = vpop.f32.mrb[0].mxu0
    %v3664 = vadd.f32 %v3551, %v3663
    %v3665 = vpop.f32.mrb[0].mxu0
    %v3666 = vadd.f32 %v3553, %v3665
    %v3667 = vpop.f32.mrb[0].mxu0
    %v3668 = vadd.f32 %v3555, %v3667
    %v3669 = vpop.f32.mrb[0].mxu0
    %v3670 = vadd.f32 %v3557, %v3669
    %3671 = vdwg.mxu0
    %3672 = vmatprep.subr.bf16.mxu0 %v2261
    %3673 = vmatpush1.bf16.msra.mxu0 %v2260
    %3674 = vmatprep.subr.bf16.mxu0 %v2269
    %3675 = vmatpush1.bf16.msra.mxu0 %v2268
    %3676 = vmatprep.subr.bf16.mxu0 %v2277
    %3677 = vmatpush1.bf16.msra.mxu0 %v2276
    %3678 = vmatprep.subr.bf16.mxu0 %v2285
    %3679 = vmatpush1.bf16.msra.mxu0 %v2284
    %3680 = vmatprep.subr.bf16.mxu0 %v2293
    %3681 = vmatpush1.bf16.msra.mxu0 %v2292
    %3682 = vmatprep.subr.bf16.mxu0 %v2301
    %3683 = vmatpush1.bf16.msra.mxu0 %v2300
    %3684 = vmatprep.subr.bf16.mxu0 %v2309
    %3685 = vmatpush1.bf16.msra.mxu0 %v2308
    %3686 = vmatprep.subr.bf16.mxu0 %v2317
    %3687 = vmatpush1.bf16.msra.mxu0 %v2316
    %3688 = vmatprep.subr.bf16.mxu0 %v2325
    %3689 = vmatpush1.bf16.msra.mxu0 %v2324
    %3690 = vmatprep.subr.bf16.mxu0 %v2333
    %3691 = vmatpush1.bf16.msra.mxu0 %v2332
    %3692 = vmatprep.subr.bf16.mxu0 %v2341
    %3693 = vmatpush1.bf16.msra.mxu0 %v2340
    %3694 = vmatprep.subr.bf16.mxu0 %v2349
    %3695 = vmatpush1.bf16.msra.mxu0 %v2348
    %3696 = vmatprep.subr.bf16.mxu0 %v2357
    %3697 = vmatpush1.bf16.msra.mxu0 %v2356
    %3698 = vmatprep.subr.bf16.mxu0 %v2365
    %3699 = vmatpush1.bf16.msra.mxu0 %v2364
    %3700 = vmatprep.subr.bf16.mxu0 %v2373
    %3701 = vmatpush1.bf16.msra.mxu0 %v2372
    %3702 = vmatprep.subr.bf16.mxu0 %v2381
    %3703 = vmatpush1.bf16.msra.mxu0 %v2380
    %3704 = vmatprep.mubr.bf16.mxu0 %v757
    %3705 = vmatmul.mubr.bf16.gmra.mrb[0].mxu0 %v756
    %v3706 = vpop.f32.mrb[0].mxu0
    %v3707 = vadd.f32 %v3594, %v3706
    %v3708 = vpop.f32.mrb[0].mxu0
    %v3709 = vadd.f32 %v3596, %v3708
    %v3710 = vpop.f32.mrb[0].mxu0
    %v3711 = vadd.f32 %v3598, %v3710
    %v3712 = vpop.f32.mrb[0].mxu0
    %v3713 = vadd.f32 %v3600, %v3712
    %3714 = vmatprep.mubr.bf16.mxu0 %v763
    %3715 = vmatmul.mubr.bf16.gmra.mrb[0].mxu0 %v762
    %v3716 = vpop.f32.mrb[0].mxu0
    %v3717 = vadd.f32 %v3604, %v3716
    %v3718 = vpop.f32.mrb[0].mxu0
    %v3719 = vadd.f32 %v3606, %v3718
    %v3720 = vpop.f32.mrb[0].mxu0
    %v3721 = vadd.f32 %v3608, %v3720
    %v3722 = vpop.f32.mrb[0].mxu0
    %v3723 = vadd.f32 %v3610, %v3722
    %3724 = vmatprep.mubr.bf16.mxu0 %v769
    %3725 = vmatmul.mubr.bf16.gmra.mrb[0].mxu0 %v768
    %v3726 = vpop.f32.mrb[0].mxu0
    %v3727 = vadd.f32 %v3614, %v3726
    %v3728 = vpop.f32.mrb[0].mxu0
    %v3729 = vadd.f32 %v3616, %v3728
    %v3730 = vpop.f32.mrb[0].mxu0
    %v3731 = vadd.f32 %v3618, %v3730
    %v3732 = vpop.f32.mrb[0].mxu0
    %v3733 = vadd.f32 %v3620, %v3732
    %3734 = vmatprep.mubr.bf16.mxu0 %v775
    %3735 = vmatmul.mubr.bf16.gmra.mrb[0].mxu0 %v774
    %v3736 = vpop.f32.mrb[0].mxu0
    %v3737 = vadd.f32 %v3624, %v3736
    %v3738 = vpop.f32.mrb[0].mxu0
    %v3739 = vadd.f32 %v3626, %v3738
    %v3740 = vpop.f32.mrb[0].mxu0
    %v3741 = vadd.f32 %v3628, %v3740
    %v3742 = vpop.f32.mrb[0].mxu0
    %v3743 = vadd.f32 %v3630, %v3742
    %3744 = vmatprep.mubr.bf16.mxu0 %v781
    %3745 = vmatmul.mubr.bf16.gmra.mrb[0].mxu0 %v780
    %v3746 = vpop.f32.mrb[0].mxu0
    %v3747 = vadd.f32 %v3634, %v3746
    %v3748 = vpop.f32.mrb[0].mxu0
    %v3749 = vadd.f32 %v3636, %v3748
    %v3750 = vpop.f32.mrb[0].mxu0
    %v3751 = vadd.f32 %v3638, %v3750
    %v3752 = vpop.f32.mrb[0].mxu0
    %v3753 = vadd.f32 %v3640, %v3752
    %3754 = vmatprep.mubr.bf16.mxu0 %v787
    %3755 = vmatmul.mubr.bf16.gmra.mrb[0].mxu0 %v786
    %v3756 = vpop.f32.mrb[0].mxu0
    %v3757 = vadd.f32 %v3644, %v3756
    %v3758 = vpop.f32.mrb[0].mxu0
    %v3759 = vadd.f32 %v3646, %v3758
    %v3760 = vpop.f32.mrb[0].mxu0
    %v3761 = vadd.f32 %v3648, %v3760
    %v3762 = vpop.f32.mrb[0].mxu0
    %v3763 = vadd.f32 %v3650, %v3762
    %3764 = vmatprep.mubr.bf16.mxu0 %v793
    %3765 = vmatmul.mubr.bf16.gmra.mrb[0].mxu0 %v792
    %v3766 = vpop.f32.mrb[0].mxu0
    %v3767 = vadd.f32 %v3654, %v3766
    %v3768 = vpop.f32.mrb[0].mxu0
    %v3769 = vadd.f32 %v3656, %v3768
    %v3770 = vpop.f32.mrb[0].mxu0
    %v3771 = vadd.f32 %v3658, %v3770
    %v3772 = vpop.f32.mrb[0].mxu0
    %v3773 = vadd.f32 %v3660, %v3772
    %3774 = vmatprep.mubr.bf16.mxu0 %v799
    %3775 = vmatmul.mubr.bf16.gmra.mrb[0].mxu0 %v798
    %v3776 = vpop.f32.mrb[0].mxu0
    %v3777 = vadd.f32 %v3664, %v3776
    %v3778 = vpop.f32.mrb[0].mxu0
    %v3779 = vadd.f32 %v3666, %v3778
    %v3780 = vpop.f32.mrb[0].mxu0
    %v3781 = vadd.f32 %v3668, %v3780
    %v3782 = vpop.f32.mrb[0].mxu0
    %v3783 = vadd.f32 %v3670, %v3782
    %3784 = vdwg.mxu0
    %3785 = vmatprep.subr.bf16.mxu0 %v2007
    %3786 = vmatpush1.bf16.msra.mxu0 %v2006
    %3787 = vmatprep.subr.bf16.mxu0 %v2015
    %3788 = vmatpush1.bf16.msra.mxu0 %v2014
    %3789 = vmatprep.subr.bf16.mxu0 %v2023
    %3790 = vmatpush1.bf16.msra.mxu0 %v2022
    %3791 = vmatprep.subr.bf16.mxu0 %v2031
    %3792 = vmatpush1.bf16.msra.mxu0 %v2030
    %3793 = vmatprep.subr.bf16.mxu0 %v2039
    %3794 = vmatpush1.bf16.msra.mxu0 %v2038
    %3795 = vmatprep.subr.bf16.mxu0 %v2047
    %3796 = vmatpush1.bf16.msra.mxu0 %v2046
    %3797 = vmatprep.subr.bf16.mxu0 %v2055
    %3798 = vmatpush1.bf16.msra.mxu0 %v2054
    %3799 = vmatprep.subr.bf16.mxu0 %v2063
    %3800 = vmatpush1.bf16.msra.mxu0 %v2062
    %3801 = vmatprep.subr.bf16.mxu0 %v2071
    %3802 = vmatpush1.bf16.msra.mxu0 %v2070
    %3803 = vmatprep.subr.bf16.mxu0 %v2079
    %3804 = vmatpush1.bf16.msra.mxu0 %v2078
    %3805 = vmatprep.subr.bf16.mxu0 %v2087
    %3806 = vmatpush1.bf16.msra.mxu0 %v2086
    %3807 = vmatprep.subr.bf16.mxu0 %v2095
    %3808 = vmatpush1.bf16.msra.mxu0 %v2094
    %3809 = vmatprep.subr.bf16.mxu0 %v2103
    %3810 = vmatpush1.bf16.msra.mxu0 %v2102
    %3811 = vmatprep.subr.bf16.mxu0 %v2111
    %3812 = vmatpush1.bf16.msra.mxu0 %v2110
    %3813 = vmatprep.subr.bf16.mxu0 %v2119
    %3814 = vmatpush1.bf16.msra.mxu0 %v2118
    %3815 = vmatprep.subr.bf16.mxu0 %v2127
    %3816 = vmatpush1.bf16.msra.mxu0 %v2126
    %3817 = vmatprep.mubr.bf16.mxu0 %v753
    %3818 = vmatmul.mubr.bf16.gmra.mrb[0].mxu0 %v752
    %v3819 = vpop.f32.mrb[0].mxu0
    %v3820 = vadd.f32 %v595, %v3819
    %v3821 = vpop.f32.mrb[0].mxu0
    %v3822 = vadd.f32 %v599, %v3821
    %v3823 = vpop.f32.mrb[0].mxu0
    %v3824 = vadd.f32 %v595, %v3823
    %v3825 = vpop.f32.mrb[0].mxu0
    %v3826 = vadd.f32 %v599, %v3825
    %3827 = vmatprep.mubr.bf16.mxu0 %v759
    %3828 = vmatmul.mubr.bf16.gmra.mrb[0].mxu0 %v758
    %v3829 = vpop.f32.mrb[0].mxu0
    %v3830 = vadd.f32 %v595, %v3829
    %v3831 = vpop.f32.mrb[0].mxu0
    %v3832 = vadd.f32 %v599, %v3831
    %v3833 = vpop.f32.mrb[0].mxu0
    %v3834 = vadd.f32 %v595, %v3833
    %v3835 = vpop.f32.mrb[0].mxu0
    %v3836 = vadd.f32 %v599, %v3835
    %3837 = vmatprep.mubr.bf16.mxu0 %v765
    %3838 = vmatmul.mubr.bf16.gmra.mrb[0].mxu0 %v764
    %v3839 = vpop.f32.mrb[0].mxu0
    %v3840 = vadd.f32 %v595, %v3839
    %v3841 = vpop.f32.mrb[0].mxu0
    %v3842 = vadd.f32 %v599, %v3841
    %v3843 = vpop.f32.mrb[0].mxu0
    %v3844 = vadd.f32 %v595, %v3843
    %v3845 = vpop.f32.mrb[0].mxu0
    %v3846 = vadd.f32 %v599, %v3845
    %3847 = vmatprep.mubr.bf16.mxu0 %v771
    %3848 = vmatmul.mubr.bf16.gmra.mrb[0].mxu0 %v770
    %v3849 = vpop.f32.mrb[0].mxu0
    %v3850 = vadd.f32 %v595, %v3849
    %v3851 = vpop.f32.mrb[0].mxu0
    %v3852 = vadd.f32 %v599, %v3851
    %v3853 = vpop.f32.mrb[0].mxu0
    %v3854 = vadd.f32 %v595, %v3853
    %v3855 = vpop.f32.mrb[0].mxu0
    %v3856 = vadd.f32 %v599, %v3855
    %3857 = vmatprep.mubr.bf16.mxu0 %v777
    %3858 = vmatmul.mubr.bf16.gmra.mrb[0].mxu0 %v776
    %v3859 = vpop.f32.mrb[0].mxu0
    %v3860 = vadd.f32 %v595, %v3859
    %v3861 = vpop.f32.mrb[0].mxu0
    %v3862 = vadd.f32 %v599, %v3861
    %v3863 = vpop.f32.mrb[0].mxu0
    %v3864 = vadd.f32 %v595, %v3863
    %v3865 = vpop.f32.mrb[0].mxu0
    %v3866 = vadd.f32 %v599, %v3865
    %3867 = vmatprep.mubr.bf16.mxu0 %v783
    %3868 = vmatmul.mubr.bf16.gmra.mrb[0].mxu0 %v782
    %v3869 = vpop.f32.mrb[0].mxu0
    %v3870 = vadd.f32 %v595, %v3869
    %v3871 = vpop.f32.mrb[0].mxu0
    %v3872 = vadd.f32 %v599, %v3871
    %v3873 = vpop.f32.mrb[0].mxu0
    %v3874 = vadd.f32 %v595, %v3873
    %v3875 = vpop.f32.mrb[0].mxu0
    %v3876 = vadd.f32 %v599, %v3875
    %3877 = vmatprep.mubr.bf16.mxu0 %v789
    %3878 = vmatmul.mubr.bf16.gmra.mrb[0].mxu0 %v788
    %v3879 = vpop.f32.mrb[0].mxu0
    %v3880 = vadd.f32 %v595, %v3879
    %v3881 = vpop.f32.mrb[0].mxu0
    %v3882 = vadd.f32 %v599, %v3881
    %v3883 = vpop.f32.mrb[0].mxu0
    %v3884 = vadd.f32 %v595, %v3883
    %v3885 = vpop.f32.mrb[0].mxu0
    %v3886 = vadd.f32 %v599, %v3885
    %3887 = vmatprep.mubr.bf16.mxu0 %v795
    %3888 = vmatmul.mubr.bf16.gmra.mrb[0].mxu0 %v794
    %v3889 = vpop.f32.mrb[0].mxu0
    %v3890 = vadd.f32 %v595, %v3889
    %v3891 = vpop.f32.mrb[0].mxu0
    %v3892 = vadd.f32 %v599, %v3891
    %v3893 = vpop.f32.mrb[0].mxu0
    %v3894 = vadd.f32 %v595, %v3893
    %v3895 = vpop.f32.mrb[0].mxu0
    %v3896 = vadd.f32 %v599, %v3895
    %3897 = vdwg.mxu0
    %3898 = vmatprep.subr.bf16.mxu0 %v2135
    %3899 = vmatpush1.bf16.msra.mxu0 %v2134
    %3900 = vmatprep.subr.bf16.mxu0 %v2143
    %3901 = vmatpush1.bf16.msra.mxu0 %v2142
    %3902 = vmatprep.subr.bf16.mxu0 %v2151
    %3903 = vmatpush1.bf16.msra.mxu0 %v2150
    %3904 = vmatprep.subr.bf16.mxu0 %v2159
    %3905 = vmatpush1.bf16.msra.mxu0 %v2158
    %3906 = vmatprep.subr.bf16.mxu0 %v2167
    %3907 = vmatpush1.bf16.msra.mxu0 %v2166
    %3908 = vmatprep.subr.bf16.mxu0 %v2175
    %3909 = vmatpush1.bf16.msra.mxu0 %v2174
    %3910 = vmatprep.subr.bf16.mxu0 %v2183
    %3911 = vmatpush1.bf16.msra.mxu0 %v2182
    %3912 = vmatprep.subr.bf16.mxu0 %v2191
    %3913 = vmatpush1.bf16.msra.mxu0 %v2190
    %3914 = vmatprep.subr.bf16.mxu0 %v2199
    %3915 = vmatpush1.bf16.msra.mxu0 %v2198
    %3916 = vmatprep.subr.bf16.mxu0 %v2207
    %3917 = vmatpush1.bf16.msra.mxu0 %v2206
    %3918 = vmatprep.subr.bf16.mxu0 %v2215
    %3919 = vmatpush1.bf16.msra.mxu0 %v2214
    %3920 = vmatprep.subr.bf16.mxu0 %v2223
    %3921 = vmatpush1.bf16.msra.mxu0 %v2222
    %3922 = vmatprep.subr.bf16.mxu0 %v2231
    %3923 = vmatpush1.bf16.msra.mxu0 %v2230
    %3924 = vmatprep.subr.bf16.mxu0 %v2239
    %3925 = vmatpush1.bf16.msra.mxu0 %v2238
    %3926 = vmatprep.subr.bf16.mxu0 %v2247
    %3927 = vmatpush1.bf16.msra.mxu0 %v2246
    %3928 = vmatprep.subr.bf16.mxu0 %v2255
    %3929 = vmatpush1.bf16.msra.mxu0 %v2254
    %3930 = vmatprep.mubr.bf16.mxu0 %v755
    %3931 = vmatmul.mubr.bf16.gmra.mrb[0].mxu0 %v754
    %v3932 = vpop.f32.mrb[0].mxu0
    %v3933 = vadd.f32 %v3820, %v3932
    %v3934 = vpop.f32.mrb[0].mxu0
    %v3935 = vadd.f32 %v3822, %v3934
    %v3936 = vpop.f32.mrb[0].mxu0
    %v3937 = vadd.f32 %v3824, %v3936
    %v3938 = vpop.f32.mrb[0].mxu0
    %v3939 = vadd.f32 %v3826, %v3938
    %3940 = vmatprep.mubr.bf16.mxu0 %v761
    %3941 = vmatmul.mubr.bf16.gmra.mrb[0].mxu0 %v760
    %v3942 = vpop.f32.mrb[0].mxu0
    %v3943 = vadd.f32 %v3830, %v3942
    %v3944 = vpop.f32.mrb[0].mxu0
    %v3945 = vadd.f32 %v3832, %v3944
    %v3946 = vpop.f32.mrb[0].mxu0
    %v3947 = vadd.f32 %v3834, %v3946
    %v3948 = vpop.f32.mrb[0].mxu0
    %v3949 = vadd.f32 %v3836, %v3948
    %3950 = vmatprep.mubr.bf16.mxu0 %v767
    %3951 = vmatmul.mubr.bf16.gmra.mrb[0].mxu0 %v766
    %v3952 = vpop.f32.mrb[0].mxu0
    %v3953 = vadd.f32 %v3840, %v3952
    %v3954 = vpop.f32.mrb[0].mxu0
    %v3955 = vadd.f32 %v3842, %v3954
    %v3956 = vpop.f32.mrb[0].mxu0
    %v3957 = vadd.f32 %v3844, %v3956
    %v3958 = vpop.f32.mrb[0].mxu0
    %v3959 = vadd.f32 %v3846, %v3958
    %3960 = vmatprep.mubr.bf16.mxu0 %v773
    %3961 = vmatmul.mubr.bf16.gmra.mrb[0].mxu0 %v772
    %v3962 = vpop.f32.mrb[0].mxu0
    %v3963 = vadd.f32 %v3850, %v3962
    %v3964 = vpop.f32.mrb[0].mxu0
    %v3965 = vadd.f32 %v3852, %v3964
    %v3966 = vpop.f32.mrb[0].mxu0
    %v3967 = vadd.f32 %v3854, %v3966
    %v3968 = vpop.f32.mrb[0].mxu0
    %v3969 = vadd.f32 %v3856, %v3968
    %3970 = vmatprep.mubr.bf16.mxu0 %v779
    %3971 = vmatmul.mubr.bf16.gmra.mrb[0].mxu0 %v778
    %v3972 = vpop.f32.mrb[0].mxu0
    %v3973 = vadd.f32 %v3860, %v3972
    %v3974 = vpop.f32.mrb[0].mxu0
    %v3975 = vadd.f32 %v3862, %v3974
    %v3976 = vpop.f32.mrb[0].mxu0
    %v3977 = vadd.f32 %v3864, %v3976
    %v3978 = vpop.f32.mrb[0].mxu0
    %v3979 = vadd.f32 %v3866, %v3978
    %3980 = vmatprep.mubr.bf16.mxu0 %v785
    %3981 = vmatmul.mubr.bf16.gmra.mrb[0].mxu0 %v784
    %v3982 = vpop.f32.mrb[0].mxu0
    %v3983 = vadd.f32 %v3870, %v3982
    %v3984 = vpop.f32.mrb[0].mxu0
    %v3985 = vadd.f32 %v3872, %v3984
    %v3986 = vpop.f32.mrb[0].mxu0
    %v3987 = vadd.f32 %v3874, %v3986
    %v3988 = vpop.f32.mrb[0].mxu0
    %v3989 = vadd.f32 %v3876, %v3988
    %3990 = vmatprep.mubr.bf16.mxu0 %v791
    %3991 = vmatmul.mubr.bf16.gmra.mrb[0].mxu0 %v790
    %v3992 = vpop.f32.mrb[0].mxu0
    %v3993 = vadd.f32 %v3880, %v3992
    %v3994 = vpop.f32.mrb[0].mxu0
    %v3995 = vadd.f32 %v3882, %v3994
    %v3996 = vpop.f32.mrb[0].mxu0
    %v3997 = vadd.f32 %v3884, %v3996
    %v3998 = vpop.f32.mrb[0].mxu0
    %v3999 = vadd.f32 %v3886, %v3998
    %4000 = vmatprep.mubr.bf16.mxu0 %v797
    %4001 = vmatmul.mubr.bf16.gmra.mrb[0].mxu0 %v796
    %v4002 = vpop.f32.mrb[0].mxu0
    %v4003 = vadd.f32 %v3890, %v4002
    %v4004 = vpop.f32.mrb[0].mxu0
    %v4005 = vadd.f32 %v3892, %v4004
    %v4006 = vpop.f32.mrb[0].mxu0
    %v4007 = vadd.f32 %v3894, %v4006
    %v4008 = vpop.f32.mrb[0].mxu0
    %v4009 = vadd.f32 %v3896, %v4008
    %4010 = vdwg.mxu0
    %4011 = vmatprep.subr.bf16.mxu0 %v2263
    %4012 = vmatpush1.bf16.msra.mxu0 %v2262
    %4013 = vmatprep.subr.bf16.mxu0 %v2271
    %4014 = vmatpush1.bf16.msra.mxu0 %v2270
    %4015 = vmatprep.subr.bf16.mxu0 %v2279
    %4016 = vmatpush1.bf16.msra.mxu0 %v2278
    %4017 = vmatprep.subr.bf16.mxu0 %v2287
    %4018 = vmatpush1.bf16.msra.mxu0 %v2286
    %4019 = vmatprep.subr.bf16.mxu0 %v2295
    %4020 = vmatpush1.bf16.msra.mxu0 %v2294
    %4021 = vmatprep.subr.bf16.mxu0 %v2303
    %4022 = vmatpush1.bf16.msra.mxu0 %v2302
    %4023 = vmatprep.subr.bf16.mxu0 %v2311
    %4024 = vmatpush1.bf16.msra.mxu0 %v2310
    %4025 = vmatprep.subr.bf16.mxu0 %v2319
    %4026 = vmatpush1.bf16.msra.mxu0 %v2318
    %4027 = vmatprep.subr.bf16.mxu0 %v2327
    %4028 = vmatpush1.bf16.msra.mxu0 %v2326
    %4029 = vmatprep.subr.bf16.mxu0 %v2335
    %4030 = vmatpush1.bf16.msra.mxu0 %v2334
    %4031 = vmatprep.subr.bf16.mxu0 %v2343
    %4032 = vmatpush1.bf16.msra.mxu0 %v2342
    %4033 = vmatprep.subr.bf16.mxu0 %v2351
    %4034 = vmatpush1.bf16.msra.mxu0 %v2350
    %4035 = vmatprep.subr.bf16.mxu0 %v2359
    %4036 = vmatpush1.bf16.msra.mxu0 %v2358
    %4037 = vmatprep.subr.bf16.mxu0 %v2367
    %4038 = vmatpush1.bf16.msra.mxu0 %v2366
    %4039 = vmatprep.subr.bf16.mxu0 %v2375
    %4040 = vmatpush1.bf16.msra.mxu0 %v2374
    %4041 = vmatprep.subr.bf16.mxu0 %v2383
    %4042 = vmatpush1.bf16.msra.mxu0 %v2382
    %4043 = vmatprep.mubr.bf16.mxu0 %v757
    %4044 = vmatmul.mubr.bf16.gmra.mrb[0].mxu0 %v756
    %v4045 = vpop.f32.mrb[0].mxu0
    %v4046 = vadd.f32 %v3933, %v4045
    %v4047 = vpop.f32.mrb[0].mxu0
    %v4048 = vadd.f32 %v3935, %v4047
    %v4049 = vpop.f32.mrb[0].mxu0
    %v4050 = vadd.f32 %v3937, %v4049
    %v4051 = vpop.f32.mrb[0].mxu0
    %v4052 = vadd.f32 %v3939, %v4051
    %4053 = vmatprep.mubr.bf16.mxu0 %v763
    %4054 = vmatmul.mubr.bf16.gmra.mrb[0].mxu0 %v762
    %v4055 = vpop.f32.mrb[0].mxu0
    %v4056 = vadd.f32 %v3943, %v4055
    %v4057 = vpop.f32.mrb[0].mxu0
    %v4058 = vadd.f32 %v3945, %v4057
    %v4059 = vpop.f32.mrb[0].mxu0
    %v4060 = vadd.f32 %v3947, %v4059
    %v4061 = vpop.f32.mrb[0].mxu0
    %v4062 = vadd.f32 %v3949, %v4061
    %4063 = vmatprep.mubr.bf16.mxu0 %v769
    %4064 = vmatmul.mubr.bf16.gmra.mrb[0].mxu0 %v768
    %v4065 = vpop.f32.mrb[0].mxu0
    %v4066 = vadd.f32 %v3953, %v4065
    %v4067 = vpop.f32.mrb[0].mxu0
    %v4068 = vadd.f32 %v3955, %v4067
    %v4069 = vpop.f32.mrb[0].mxu0
    %v4070 = vadd.f32 %v3957, %v4069
    %v4071 = vpop.f32.mrb[0].mxu0
    %v4072 = vadd.f32 %v3959, %v4071
    %4073 = vmatprep.mubr.bf16.mxu0 %v775
    %4074 = vmatmul.mubr.bf16.gmra.mrb[0].mxu0 %v774
    %v4075 = vpop.f32.mrb[0].mxu0
    %v4076 = vadd.f32 %v3963, %v4075
    %v4077 = vpop.f32.mrb[0].mxu0
    %v4078 = vadd.f32 %v3965, %v4077
    %v4079 = vpop.f32.mrb[0].mxu0
    %v4080 = vadd.f32 %v3967, %v4079
    %v4081 = vpop.f32.mrb[0].mxu0
    %v4082 = vadd.f32 %v3969, %v4081
    %4083 = vmatprep.mubr.bf16.mxu0 %v781
    %4084 = vmatmul.mubr.bf16.gmra.mrb[0].mxu0 %v780
    %v4085 = vpop.f32.mrb[0].mxu0
    %v4086 = vadd.f32 %v3973, %v4085
    %v4087 = vpop.f32.mrb[0].mxu0
    %v4088 = vadd.f32 %v3975, %v4087
    %v4089 = vpop.f32.mrb[0].mxu0
    %v4090 = vadd.f32 %v3977, %v4089
    %v4091 = vpop.f32.mrb[0].mxu0
    %v4092 = vadd.f32 %v3979, %v4091
    %4093 = vmatprep.mubr.bf16.mxu0 %v787
    %4094 = vmatmul.mubr.bf16.gmra.mrb[0].mxu0 %v786
    %v4095 = vpop.f32.mrb[0].mxu0
    %v4096 = vadd.f32 %v3983, %v4095
    %v4097 = vpop.f32.mrb[0].mxu0
    %v4098 = vadd.f32 %v3985, %v4097
    %v4099 = vpop.f32.mrb[0].mxu0
    %v4100 = vadd.f32 %v3987, %v4099
    %v4101 = vpop.f32.mrb[0].mxu0
    %v4102 = vadd.f32 %v3989, %v4101
    %4103 = vmatprep.mubr.bf16.mxu0 %v793
    %4104 = vmatmul.mubr.bf16.gmra.mrb[0].mxu0 %v792
    %v4105 = vpop.f32.mrb[0].mxu0
    %v4106 = vadd.f32 %v3993, %v4105
    %v4107 = vpop.f32.mrb[0].mxu0
    %v4108 = vadd.f32 %v3995, %v4107
    %v4109 = vpop.f32.mrb[0].mxu0
    %v4110 = vadd.f32 %v3997, %v4109
    %v4111 = vpop.f32.mrb[0].mxu0
    %v4112 = vadd.f32 %v3999, %v4111
    %4113 = vmatprep.mubr.bf16.mxu0 %v799
    %4114 = vmatmul.mubr.bf16.gmra.mrb[0].mxu0 %v798
    %v4115 = vpop.f32.mrb[0].mxu0
    %v4116 = vadd.f32 %v4003, %v4115
    %v4117 = vpop.f32.mrb[0].mxu0
    %v4118 = vadd.f32 %v4005, %v4117
    %v4119 = vpop.f32.mrb[0].mxu0
    %v4120 = vadd.f32 %v4007, %v4119
    %v4121 = vpop.f32.mrb[0].mxu0
    %v4122 = vadd.f32 %v4009, %v4121
    %4123 = vdwg.mxu0
    %v4124 = vmax.f32 %v3029, 0.0
    %v4125 = vmax.f32 %v3031, 0.0
    %v4126 = vmax.f32 %v3368, 0.0
    %v4127 = vmax.f32 %v3370, 0.0
    %v4128 = vmax.f32 %v3707, 0.0
    %v4129 = vmax.f32 %v3709, 0.0
    %v4130 = vmax.f32 %v4046, 0.0
    %v4131 = vmax.f32 %v4048, 0.0
    %v4132 = vmax.f32 %v3033, 0.0
    %v4133 = vmax.f32 %v3035, 0.0
    %v4134 = vmax.f32 %v3372, 0.0
    %v4135 = vmax.f32 %v3374, 0.0
    %v4136 = vmax.f32 %v3711, 0.0
    %v4137 = vmax.f32 %v3713, 0.0
    %v4138 = vmax.f32 %v4050, 0.0
    %v4139 = vmax.f32 %v4052, 0.0
    %v4140 = vmax.f32 %v3039, 0.0
    %v4141 = vmax.f32 %v3041, 0.0
    %v4142 = vmax.f32 %v3378, 0.0
    %v4143 = vmax.f32 %v3380, 0.0
    %v4144 = vmax.f32 %v3717, 0.0
    %v4145 = vmax.f32 %v3719, 0.0
    %v4146 = vmax.f32 %v4056, 0.0
    %v4147 = vmax.f32 %v4058, 0.0
    %v4148 = vmax.f32 %v3043, 0.0
    %v4149 = vmax.f32 %v3045, 0.0
    %v4150 = vmax.f32 %v3382, 0.0
    %v4151 = vmax.f32 %v3384, 0.0
    %v4152 = vmax.f32 %v3721, 0.0
    %v4153 = vmax.f32 %v3723, 0.0
    %v4154 = vmax.f32 %v4060, 0.0
    %v4155 = vmax.f32 %v4062, 0.0
    %v4156 = vmax.f32 %v3049, 0.0
    %v4157 = vmax.f32 %v3051, 0.0
    %v4158 = vmax.f32 %v3388, 0.0
    %v4159 = vmax.f32 %v3390, 0.0
    %v4160 = vmax.f32 %v3727, 0.0
    %v4161 = vmax.f32 %v3729, 0.0
    %v4162 = vmax.f32 %v4066, 0.0
    %v4163 = vmax.f32 %v4068, 0.0
    %v4164 = vmax.f32 %v3053, 0.0
    %v4165 = vmax.f32 %v3055, 0.0
    %v4166 = vmax.f32 %v3392, 0.0
    %v4167 = vmax.f32 %v3394, 0.0
    %v4168 = vmax.f32 %v3731, 0.0
    %v4169 = vmax.f32 %v3733, 0.0
    %v4170 = vmax.f32 %v4070, 0.0
    %v4171 = vmax.f32 %v4072, 0.0
    %v4172 = vmax.f32 %v3059, 0.0
    %v4173 = vmax.f32 %v3061, 0.0
    %v4174 = vmax.f32 %v3398, 0.0
    %v4175 = vmax.f32 %v3400, 0.0
    %v4176 = vmax.f32 %v3737, 0.0
    %v4177 = vmax.f32 %v3739, 0.0
    %v4178 = vmax.f32 %v4076, 0.0
    %v4179 = vmax.f32 %v4078, 0.0
    %v4180 = vmax.f32 %v3063, 0.0
    %v4181 = vmax.f32 %v3065, 0.0
    %v4182 = vmax.f32 %v3402, 0.0
    %v4183 = vmax.f32 %v3404, 0.0
    %v4184 = vmax.f32 %v3741, 0.0
    %v4185 = vmax.f32 %v3743, 0.0
    %v4186 = vmax.f32 %v4080, 0.0
    %v4187 = vmax.f32 %v4082, 0.0
    %v4188 = vmax.f32 %v3069, 0.0
    %v4189 = vmax.f32 %v3071, 0.0
    %v4190 = vmax.f32 %v3408, 0.0
    %v4191 = vmax.f32 %v3410, 0.0
    %v4192 = vmax.f32 %v3747, 0.0
    %v4193 = vmax.f32 %v3749, 0.0
    %v4194 = vmax.f32 %v4086, 0.0
    %v4195 = vmax.f32 %v4088, 0.0
    %v4196 = vmax.f32 %v3073, 0.0
    %v4197 = vmax.f32 %v3075, 0.0
    %v4198 = vmax.f32 %v3412, 0.0
    %v4199 = vmax.f32 %v3414, 0.0
    %v4200 = vmax.f32 %v3751, 0.0
    %v4201 = vmax.f32 %v3753, 0.0
    %v4202 = vmax.f32 %v4090, 0.0
    %v4203 = vmax.f32 %v4092, 0.0
    %v4204 = vmax.f32 %v3079, 0.0
    %v4205 = vmax.f32 %v3081, 0.0
    %v4206 = vmax.f32 %v3418, 0.0
    %v4207 = vmax.f32 %v3420, 0.0
    %v4208 = vmax.f32 %v3757, 0.0
    %v4209 = vmax.f32 %v3759, 0.0
    %v4210 = vmax.f32 %v4096, 0.0
    %v4211 = vmax.f32 %v4098, 0.0
    %v4212 = vmax.f32 %v3083, 0.0
    %v4213 = vmax.f32 %v3085, 0.0
    %v4214 = vmax.f32 %v3422, 0.0
    %v4215 = vmax.f32 %v3424, 0.0
    %v4216 = vmax.f32 %v3761, 0.0
    %v4217 = vmax.f32 %v3763, 0.0
    %v4218 = vmax.f32 %v4100, 0.0
    %v4219 = vmax.f32 %v4102, 0.0
    %v4220 = vmax.f32 %v3089, 0.0
    %v4221 = vmax.f32 %v3091, 0.0
    %v4222 = vmax.f32 %v3428, 0.0
    %v4223 = vmax.f32 %v3430, 0.0
    %v4224 = vmax.f32 %v3767, 0.0
    %v4225 = vmax.f32 %v3769, 0.0
    %v4226 = vmax.f32 %v4106, 0.0
    %v4227 = vmax.f32 %v4108, 0.0
    %v4228 = vmax.f32 %v3093, 0.0
    %v4229 = vmax.f32 %v3095, 0.0
    %v4230 = vmax.f32 %v3432, 0.0
    %v4231 = vmax.f32 %v3434, 0.0
    %v4232 = vmax.f32 %v3771, 0.0
    %v4233 = vmax.f32 %v3773, 0.0
    %v4234 = vmax.f32 %v4110, 0.0
    %v4235 = vmax.f32 %v4112, 0.0
    %v4236 = vmax.f32 %v3099, 0.0
    %v4237 = vmax.f32 %v3101, 0.0
    %v4238 = vmax.f32 %v3438, 0.0
    %v4239 = vmax.f32 %v3440, 0.0
    %v4240 = vmax.f32 %v3777, 0.0
    %v4241 = vmax.f32 %v3779, 0.0
    %v4242 = vmax.f32 %v4116, 0.0
    %v4243 = vmax.f32 %v4118, 0.0
    %v4244 = vmax.f32 %v3103, 0.0
    %v4245 = vmax.f32 %v3105, 0.0
    %v4246 = vmax.f32 %v3442, 0.0
    %v4247 = vmax.f32 %v3444, 0.0
    %v4248 = vmax.f32 %v3781, 0.0
    %v4249 = vmax.f32 %v3783, 0.0
    %v4250 = vmax.f32 %v4120, 0.0
    %v4251 = vmax.f32 %v4122, 0.0
    %v4252 = vmax.f32 %v4124, %v4126
    %v4253 = vmax.f32 %v4125, %v4127
    %v4254 = vmax.f32 %v4132, %v4134
    %v4255 = vmax.f32 %v4133, %v4135
    %v4256 = vmax.f32 %v4140, %v4142
    %v4257 = vmax.f32 %v4141, %v4143
    %v4258 = vmax.f32 %v4148, %v4150
    %v4259 = vmax.f32 %v4149, %v4151
    %v4260 = vmax.f32 %v4156, %v4158
    %v4261 = vmax.f32 %v4157, %v4159
    %v4262 = vmax.f32 %v4164, %v4166
    %v4263 = vmax.f32 %v4165, %v4167
    %v4264 = vmax.f32 %v4172, %v4174
    %v4265 = vmax.f32 %v4173, %v4175
    %v4266 = vmax.f32 %v4180, %v4182
    %v4267 = vmax.f32 %v4181, %v4183
    %v4268 = vmax.f32 %v4188, %v4190
    %v4269 = vmax.f32 %v4189, %v4191
    %v4270 = vmax.f32 %v4196, %v4198
    %v4271 = vmax.f32 %v4197, %v4199
    %v4272 = vmax.f32 %v4204, %v4206
    %v4273 = vmax.f32 %v4205, %v4207
    %v4274 = vmax.f32 %v4212, %v4214
    %v4275 = vmax.f32 %v4213, %v4215
    %v4276 = vmax.f32 %v4220, %v4222
    %v4277 = vmax.f32 %v4221, %v4223
    %v4278 = vmax.f32 %v4228, %v4230
    %v4279 = vmax.f32 %v4229, %v4231
    %v4280 = vmax.f32 %v4236, %v4238
    %v4281 = vmax.f32 %v4237, %v4239
    %v4282 = vmax.f32 %v4244, %v4246
    %v4283 = vmax.f32 %v4245, %v4247
    %v4284 = vmax.f32 %v4128, %v4130
    %v4285 = vmax.f32 %v4129, %v4131
    %v4286 = vmax.f32 %v4136, %v4138
    %v4287 = vmax.f32 %v4137, %v4139
    %v4288 = vmax.f32 %v4144, %v4146
    %v4289 = vmax.f32 %v4145, %v4147
    %v4290 = vmax.f32 %v4152, %v4154
    %v4291 = vmax.f32 %v4153, %v4155
    %v4292 = vmax.f32 %v4160, %v4162
    %v4293 = vmax.f32 %v4161, %v4163
    %v4294 = vmax.f32 %v4168, %v4170
    %v4295 = vmax.f32 %v4169, %v4171
    %v4296 = vmax.f32 %v4176, %v4178
    %v4297 = vmax.f32 %v4177, %v4179
    %v4298 = vmax.f32 %v4184, %v4186
    %v4299 = vmax.f32 %v4185, %v4187
    %v4300 = vmax.f32 %v4192, %v4194
    %v4301 = vmax.f32 %v4193, %v4195
    %v4302 = vmax.f32 %v4200, %v4202
    %v4303 = vmax.f32 %v4201, %v4203
    %v4304 = vmax.f32 %v4208, %v4210
    %v4305 = vmax.f32 %v4209, %v4211
    %v4306 = vmax.f32 %v4216, %v4218
    %v4307 = vmax.f32 %v4217, %v4219
    %v4308 = vmax.f32 %v4224, %v4226
    %v4309 = vmax.f32 %v4225, %v4227
    %v4310 = vmax.f32 %v4232, %v4234
    %v4311 = vmax.f32 %v4233, %v4235
    %v4312 = vmax.f32 %v4240, %v4242
    %v4313 = vmax.f32 %v4241, %v4243
    %v4314 = vmax.f32 %v4248, %v4250
    %v4315 = vmax.f32 %v4249, %v4251
    %v4316 = vmax.f32 %v4252, %v4284
    %v4317 = vmax.f32 %v4253, %v4285
    %v4318 = vmax.f32 %v4254, %v4286
    %v4319 = vmax.f32 %v4255, %v4287
    %v4320 = vmax.f32 %v4256, %v4288
    %v4321 = vmax.f32 %v4257, %v4289
    %v4322 = vmax.f32 %v4258, %v4290
    %v4323 = vmax.f32 %v4259, %v4291
    %v4324 = vmax.f32 %v4260, %v4292
    %v4325 = vmax.f32 %v4261, %v4293
    %v4326 = vmax.f32 %v4262, %v4294
    %v4327 = vmax.f32 %v4263, %v4295
    %v4328 = vmax.f32 %v4264, %v4296
    %v4329 = vmax.f32 %v4265, %v4297
    %v4330 = vmax.f32 %v4266, %v4298
    %v4331 = vmax.f32 %v4267, %v4299
    %v4332 = vmax.f32 %v4268, %v4300
    %v4333 = vmax.f32 %v4269, %v4301
    %v4334 = vmax.f32 %v4270, %v4302
    %v4335 = vmax.f32 %v4271, %v4303
    %v4336 = vmax.f32 %v4272, %v4304
    %v4337 = vmax.f32 %v4273, %v4305
    %v4338 = vmax.f32 %v4274, %v4306
    %v4339 = vmax.f32 %v4275, %v4307
    %v4340 = vmax.f32 %v4276, %v4308
    %v4341 = vmax.f32 %v4277, %v4309
    %v4342 = vmax.f32 %v4278, %v4310
    %v4343 = vmax.f32 %v4279, %v4311
    %v4344 = vmax.f32 %v4280, %v4312
    %v4345 = vmax.f32 %v4281, %v4313
    %v4346 = vmax.f32 %v4282, %v4314
    %v4347 = vmax.f32 %v4283, %v4315
    %v4348 = vpack.c.bf16 %v4318, %v4316
    %v4349 = vpack.c.bf16 %v4319, %v4317
    %v4350 = vpack.c.bf16 %v4322, %v4320
    %v4351 = vpack.c.bf16 %v4323, %v4321
    %v4352 = vpack.c.bf16 %v4326, %v4324
    %v4353 = vpack.c.bf16 %v4327, %v4325
    %v4354 = vpack.c.bf16 %v4330, %v4328
    %v4355 = vpack.c.bf16 %v4331, %v4329
    %v4356 = vpack.c.bf16 %v4334, %v4332
    %v4357 = vpack.c.bf16 %v4335, %v4333
    %v4358 = vpack.c.bf16 %v4338, %v4336
    %v4359 = vpack.c.bf16 %v4339, %v4337
    %v4360 = vpack.c.bf16 %v4342, %v4340
    %v4361 = vpack.c.bf16 %v4343, %v4341
    %v4362 = vpack.c.bf16 %v4346, %v4344
    %v4363 = vpack.c.bf16 %v4347, %v4345
    %v4364 = vld [vmem:[#allocation6] sm:$0xff]
    %v4365 = vld [vmem:[#allocation6 + $0x8] sm:$0xff]
    %v4366 = vld [vmem:[#allocation6 + $0x10] sm:$0xff]
    %v4367 = vld [vmem:[#allocation6 + $0x18] sm:$0xff]
    %v4368 = vld [vmem:[#allocation6 + $0x20] sm:$0xff]
    %v4369 = vld [vmem:[#allocation6 + $0x28] sm:$0xff]
    %v4370 = vld [vmem:[#allocation6 + $0x30] sm:$0xff]
    %v4371 = vld [vmem:[#allocation6 + $0x38] sm:$0xff]
    %v4372 = vld [vmem:[#allocation6 + $0x40] sm:$0xff]
    %v4373 = vld [vmem:[#allocation6 + $0x48] sm:$0xff]
    %v4374 = vld [vmem:[#allocation6 + $0x50] sm:$0xff]
    %v4375 = vld [vmem:[#allocation6 + $0x58] sm:$0xff]
    %v4376 = vld [vmem:[#allocation6 + $0x60] sm:$0xff]
    %v4377 = vld [vmem:[#allocation6 + $0x68] sm:$0xff]
    %v4378 = vld [vmem:[#allocation6 + $0x70] sm:$0xff]
    %v4379 = vld [vmem:[#allocation6 + $0x78] sm:$0xff]
    %v4380 = vld [vmem:[#allocation6 + $0x80] sm:$0xff]
    %v4381 = vld [vmem:[#allocation6 + $0x88] sm:$0xff]
    %v4382 = vld [vmem:[#allocation6 + $0x90] sm:$0xff]
    %v4383 = vld [vmem:[#allocation6 + $0x98] sm:$0xff]
    %v4384 = vld [vmem:[#allocation6 + $0xa0] sm:$0xff]
    %v4385 = vld [vmem:[#allocation6 + $0xa8] sm:$0xff]
    %v4386 = vld [vmem:[#allocation6 + $0xb0] sm:$0xff]
    %v4387 = vld [vmem:[#allocation6 + $0xb8] sm:$0xff]
    %v4388 = vld [vmem:[#allocation6 + $0xc0] sm:$0xff]
    %v4389 = vld [vmem:[#allocation6 + $0xc8] sm:$0xff]
    %v4390 = vld [vmem:[#allocation6 + $0xd0] sm:$0xff]
    %v4391 = vld [vmem:[#allocation6 + $0xd8] sm:$0xff]
    %v4392 = vld [vmem:[#allocation6 + $0xe0] sm:$0xff]
    %v4393 = vld [vmem:[#allocation6 + $0xe8] sm:$0xff]
    %v4394 = vld [vmem:[#allocation6 + $0xf0] sm:$0xff]
    %v4395 = vld [vmem:[#allocation6 + $0xf8] sm:$0xff]
    %v4396 = vld [vmem:[#allocation6 + $0x100] sm:$0xff]
    %v4397 = vld [vmem:[#allocation6 + $0x108] sm:$0xff]
    %v4398 = vld [vmem:[#allocation6 + $0x110] sm:$0xff]
    %v4399 = vld [vmem:[#allocation6 + $0x118] sm:$0xff]
    %v4400 = vld [vmem:[#allocation6 + $0x120] sm:$0xff]
    %v4401 = vld [vmem:[#allocation6 + $0x128] sm:$0xff]
    %v4402 = vld [vmem:[#allocation6 + $0x130] sm:$0xff]
    %v4403 = vld [vmem:[#allocation6 + $0x138] sm:$0xff]
    %v4404 = vld [vmem:[#allocation6 + $0x140] sm:$0xff]
    %v4405 = vld [vmem:[#allocation6 + $0x148] sm:$0xff]
    %v4406 = vld [vmem:[#allocation6 + $0x150] sm:$0xff]
    %v4407 = vld [vmem:[#allocation6 + $0x158] sm:$0xff]
    %v4408 = vld [vmem:[#allocation6 + $0x160] sm:$0xff]
    %v4409 = vld [vmem:[#allocation6 + $0x168] sm:$0xff]
    %v4410 = vld [vmem:[#allocation6 + $0x170] sm:$0xff]
    %v4411 = vld [vmem:[#allocation6 + $0x178] sm:$0xff]
    %v4412 = vld [vmem:[#allocation6 + $0x180] sm:$0xff]
    %v4413 = vld [vmem:[#allocation6 + $0x188] sm:$0xff]
    %v4414 = vld [vmem:[#allocation6 + $0x190] sm:$0xff]
    %v4415 = vld [vmem:[#allocation6 + $0x198] sm:$0xff]
    %v4416 = vld [vmem:[#allocation6 + $0x1a0] sm:$0xff]
    %v4417 = vld [vmem:[#allocation6 + $0x1a8] sm:$0xff]
    %v4418 = vld [vmem:[#allocation6 + $0x1b0] sm:$0xff]
    %v4419 = vld [vmem:[#allocation6 + $0x1b8] sm:$0xff]
    %v4420 = vld [vmem:[#allocation6 + $0x1c0] sm:$0xff]
    %v4421 = vld [vmem:[#allocation6 + $0x1c8] sm:$0xff]
    %v4422 = vld [vmem:[#allocation6 + $0x1d0] sm:$0xff]
    %v4423 = vld [vmem:[#allocation6 + $0x1d8] sm:$0xff]
    %v4424 = vld [vmem:[#allocation6 + $0x1e0] sm:$0xff]
    %v4425 = vld [vmem:[#allocation6 + $0x1e8] sm:$0xff]
    %v4426 = vld [vmem:[#allocation6 + $0x1f0] sm:$0xff]
    %v4427 = vld [vmem:[#allocation6 + $0x1f8] sm:$0xff]
    %v4428 = vld [vmem:[#allocation7] sm:$0xf]
    %v4430 = vlaneseq
    %v4431 = vshrl.u32 %v4430, 7
    %v4432 = vsub.s32 0, %v4431
    %v4433 = vrot.slane %v4428, %v4432
    %v4434 = vlaneseq
    %v4435 = vshrl.u32 %v4434, 7
    %v4436 = vsub.s32 1, %v4435
    %v4437 = vrot.slane %v4428, %v4436
    %v4438 = vlaneseq
    %v4439 = vshrl.u32 %v4438, 7
    %v4440 = vsub.s32 2, %v4439
    %v4441 = vrot.slane %v4428, %v4440
    %v4442 = vlaneseq
    %v4443 = vshrl.u32 %v4442, 7
    %v4444 = vsub.s32 3, %v4443
    %v4445 = vrot.slane %v4428, %v4444
    %v4514 = vunpack.c.l.b16 %v4364
    %v4515 = vunpack.c.h.b16 %v4364
    %v4516 = vunpack.c.l.b16 %v4365
    %v4517 = vunpack.c.h.b16 %v4365
    %v4518 = vunpack.c.l.b16 %v4366
    %v4519 = vunpack.c.h.b16 %v4366
    %v4520 = vunpack.c.l.b16 %v4367
    %v4521 = vunpack.c.h.b16 %v4367
    %v4522 = vunpack.c.l.b16 %v4368
    %v4523 = vunpack.c.h.b16 %v4368
    %v4524 = vunpack.c.l.b16 %v4369
    %v4525 = vunpack.c.h.b16 %v4369
    %v4526 = vunpack.c.l.b16 %v4370
    %v4527 = vunpack.c.h.b16 %v4370
    %v4528 = vunpack.c.l.b16 %v4371
    %v4529 = vunpack.c.h.b16 %v4371
    %v4530 = vunpack.c.l.b16 %v4372
    %v4531 = vunpack.c.h.b16 %v4372
    %v4532 = vunpack.c.l.b16 %v4373
    %v4533 = vunpack.c.h.b16 %v4373
    %v4534 = vunpack.c.l.b16 %v4374
    %v4535 = vunpack.c.h.b16 %v4374
    %v4536 = vunpack.c.l.b16 %v4375
    %v4537 = vunpack.c.h.b16 %v4375
    %v4538 = vunpack.c.l.b16 %v4376
    %v4539 = vunpack.c.h.b16 %v4376
    %v4540 = vunpack.c.l.b16 %v4377
    %v4541 = vunpack.c.h.b16 %v4377
    %v4542 = vunpack.c.l.b16 %v4378
    %v4543 = vunpack.c.h.b16 %v4378
    %v4544 = vunpack.c.l.b16 %v4379
    %v4545 = vunpack.c.h.b16 %v4379
    %v4546 = vunpack.c.l.b16 %v4380
    %v4547 = vunpack.c.h.b16 %v4380
    %v4548 = vunpack.c.l.b16 %v4381
    %v4549 = vunpack.c.h.b16 %v4381
    %v4550 = vunpack.c.l.b16 %v4382
    %v4551 = vunpack.c.h.b16 %v4382
    %v4552 = vunpack.c.l.b16 %v4383
    %v4553 = vunpack.c.h.b16 %v4383
    %v4554 = vunpack.c.l.b16 %v4384
    %v4555 = vunpack.c.h.b16 %v4384
    %v4556 = vunpack.c.l.b16 %v4385
    %v4557 = vunpack.c.h.b16 %v4385
    %v4558 = vunpack.c.l.b16 %v4386
    %v4559 = vunpack.c.h.b16 %v4386
    %v4560 = vunpack.c.l.b16 %v4387
    %v4561 = vunpack.c.h.b16 %v4387
    %v4562 = vunpack.c.l.b16 %v4388
    %v4563 = vunpack.c.h.b16 %v4388
    %v4564 = vunpack.c.l.b16 %v4389
    %v4565 = vunpack.c.h.b16 %v4389
    %v4566 = vunpack.c.l.b16 %v4390
    %v4567 = vunpack.c.h.b16 %v4390
    %v4568 = vunpack.c.l.b16 %v4391
    %v4569 = vunpack.c.h.b16 %v4391
    %v4570 = vunpack.c.l.b16 %v4392
    %v4571 = vunpack.c.h.b16 %v4392
    %v4572 = vunpack.c.l.b16 %v4393
    %v4573 = vunpack.c.h.b16 %v4393
    %v4574 = vunpack.c.l.b16 %v4394
    %v4575 = vunpack.c.h.b16 %v4394
    %v4576 = vunpack.c.l.b16 %v4395
    %v4577 = vunpack.c.h.b16 %v4395
    %v4578 = vunpack.c.l.b16 %v4396
    %v4579 = vunpack.c.h.b16 %v4396
    %v4580 = vunpack.c.l.b16 %v4397
    %v4581 = vunpack.c.h.b16 %v4397
    %v4582 = vunpack.c.l.b16 %v4398
    %v4583 = vunpack.c.h.b16 %v4398
    %v4584 = vunpack.c.l.b16 %v4399
    %v4585 = vunpack.c.h.b16 %v4399
    %v4586 = vunpack.c.l.b16 %v4400
    %v4587 = vunpack.c.h.b16 %v4400
    %v4588 = vunpack.c.l.b16 %v4401
    %v4589 = vunpack.c.h.b16 %v4401
    %v4590 = vunpack.c.l.b16 %v4402
    %v4591 = vunpack.c.h.b16 %v4402
    %v4592 = vunpack.c.l.b16 %v4403
    %v4593 = vunpack.c.h.b16 %v4403
    %v4594 = vunpack.c.l.b16 %v4404
    %v4595 = vunpack.c.h.b16 %v4404
    %v4596 = vunpack.c.l.b16 %v4405
    %v4597 = vunpack.c.h.b16 %v4405
    %v4598 = vunpack.c.l.b16 %v4406
    %v4599 = vunpack.c.h.b16 %v4406
    %v4600 = vunpack.c.l.b16 %v4407
    %v4601 = vunpack.c.h.b16 %v4407
    %v4602 = vunpack.c.l.b16 %v4408
    %v4603 = vunpack.c.h.b16 %v4408
    %v4604 = vunpack.c.l.b16 %v4409
    %v4605 = vunpack.c.h.b16 %v4409
    %v4606 = vunpack.c.l.b16 %v4410
    %v4607 = vunpack.c.h.b16 %v4410
    %v4608 = vunpack.c.l.b16 %v4411
    %v4609 = vunpack.c.h.b16 %v4411
    %v4610 = vunpack.c.l.b16 %v4412
    %v4611 = vunpack.c.h.b16 %v4412
    %v4612 = vunpack.c.l.b16 %v4413
    %v4613 = vunpack.c.h.b16 %v4413
    %v4614 = vunpack.c.l.b16 %v4414
    %v4615 = vunpack.c.h.b16 %v4414
    %v4616 = vunpack.c.l.b16 %v4415
    %v4617 = vunpack.c.h.b16 %v4415
    %v4618 = vunpack.c.l.b16 %v4416
    %v4619 = vunpack.c.h.b16 %v4416
    %v4620 = vunpack.c.l.b16 %v4417
    %v4621 = vunpack.c.h.b16 %v4417
    %v4622 = vunpack.c.l.b16 %v4418
    %v4623 = vunpack.c.h.b16 %v4418
    %v4624 = vunpack.c.l.b16 %v4419
    %v4625 = vunpack.c.h.b16 %v4419
    %v4626 = vunpack.c.l.b16 %v4420
    %v4627 = vunpack.c.h.b16 %v4420
    %v4628 = vunpack.c.l.b16 %v4421
    %v4629 = vunpack.c.h.b16 %v4421
    %v4630 = vunpack.c.l.b16 %v4422
    %v4631 = vunpack.c.h.b16 %v4422
    %v4632 = vunpack.c.l.b16 %v4423
    %v4633 = vunpack.c.h.b16 %v4423
    %v4634 = vunpack.c.l.b16 %v4424
    %v4635 = vunpack.c.h.b16 %v4424
    %v4636 = vunpack.c.l.b16 %v4425
    %v4637 = vunpack.c.h.b16 %v4425
    %v4638 = vunpack.c.l.b16 %v4426
    %v4639 = vunpack.c.h.b16 %v4426
    %v4640 = vunpack.c.l.b16 %v4427
    %v4641 = vunpack.c.h.b16 %v4427
    %v4642 = vpack.c.b16 %v4518, %v4514
    %v4643 = vpack.c.b16 %v4519, %v4515
    %v4644 = vpack.c.b16 %v4520, %v4516
    %v4645 = vpack.c.b16 %v4521, %v4517
    %v4646 = vpack.c.b16 %v4526, %v4522
    %v4647 = vpack.c.b16 %v4527, %v4523
    %v4648 = vpack.c.b16 %v4528, %v4524
    %v4649 = vpack.c.b16 %v4529, %v4525
    %v4650 = vpack.c.b16 %v4534, %v4530
    %v4651 = vpack.c.b16 %v4535, %v4531
    %v4652 = vpack.c.b16 %v4536, %v4532
    %v4653 = vpack.c.b16 %v4537, %v4533
    %v4654 = vpack.c.b16 %v4542, %v4538
    %v4655 = vpack.c.b16 %v4543, %v4539
    %v4656 = vpack.c.b16 %v4544, %v4540
    %v4657 = vpack.c.b16 %v4545, %v4541
    %v4658 = vpack.c.b16 %v4550, %v4546
    %v4659 = vpack.c.b16 %v4551, %v4547
    %v4660 = vpack.c.b16 %v4552, %v4548
    %v4661 = vpack.c.b16 %v4553, %v4549
    %v4662 = vpack.c.b16 %v4558, %v4554
    %v4663 = vpack.c.b16 %v4559, %v4555
    %v4664 = vpack.c.b16 %v4560, %v4556
    %v4665 = vpack.c.b16 %v4561, %v4557
    %v4666 = vpack.c.b16 %v4566, %v4562
    %v4667 = vpack.c.b16 %v4567, %v4563
    %v4668 = vpack.c.b16 %v4568, %v4564
    %v4669 = vpack.c.b16 %v4569, %v4565
    %v4670 = vpack.c.b16 %v4574, %v4570
    %v4671 = vpack.c.b16 %v4575, %v4571
    %v4672 = vpack.c.b16 %v4576, %v4572
    %v4673 = vpack.c.b16 %v4577, %v4573
    %v4674 = vpack.c.b16 %v4582, %v4578
    %v4675 = vpack.c.b16 %v4583, %v4579
    %v4676 = vpack.c.b16 %v4584, %v4580
    %v4677 = vpack.c.b16 %v4585, %v4581
    %v4678 = vpack.c.b16 %v4590, %v4586
    %v4679 = vpack.c.b16 %v4591, %v4587
    %v4680 = vpack.c.b16 %v4592, %v4588
    %v4681 = vpack.c.b16 %v4593, %v4589
    %v4682 = vpack.c.b16 %v4598, %v4594
    %v4683 = vpack.c.b16 %v4599, %v4595
    %v4684 = vpack.c.b16 %v4600, %v4596
    %v4685 = vpack.c.b16 %v4601, %v4597
    %v4686 = vpack.c.b16 %v4606, %v4602
    %v4687 = vpack.c.b16 %v4607, %v4603
    %v4688 = vpack.c.b16 %v4608, %v4604
    %v4689 = vpack.c.b16 %v4609, %v4605
    %v4690 = vpack.c.b16 %v4614, %v4610
    %v4691 = vpack.c.b16 %v4615, %v4611
    %v4692 = vpack.c.b16 %v4616, %v4612
    %v4693 = vpack.c.b16 %v4617, %v4613
    %v4694 = vpack.c.b16 %v4622, %v4618
    %v4695 = vpack.c.b16 %v4623, %v4619
    %v4696 = vpack.c.b16 %v4624, %v4620
    %v4697 = vpack.c.b16 %v4625, %v4621
    %v4698 = vpack.c.b16 %v4630, %v4626
    %v4699 = vpack.c.b16 %v4631, %v4627
    %v4700 = vpack.c.b16 %v4632, %v4628
    %v4701 = vpack.c.b16 %v4633, %v4629
    %v4702 = vpack.c.b16 %v4638, %v4634
    %v4703 = vpack.c.b16 %v4639, %v4635
    %v4704 = vpack.c.b16 %v4640, %v4636
    %v4705 = vpack.c.b16 %v4641, %v4637
    %4770 = vmatprep.subr.bf16.mxu0 %v4643
    %4771 = vmatpush1.bf16.msra.mxu0 %v4642
    %4772 = vmatprep.subr.bf16.mxu0 %v4647
    %4773 = vmatpush1.bf16.msra.mxu0 %v4646
    %4774 = vmatprep.subr.bf16.mxu0 %v4651
    %4775 = vmatpush1.bf16.msra.mxu0 %v4650
    %4776 = vmatprep.subr.bf16.mxu0 %v4655
    %4777 = vmatpush1.bf16.msra.mxu0 %v4654
    %4778 = vmatprep.subr.bf16.mxu0 %v4659
    %4779 = vmatpush1.bf16.msra.mxu0 %v4658
    %4780 = vmatprep.subr.bf16.mxu0 %v4663
    %4781 = vmatpush1.bf16.msra.mxu0 %v4662
    %4782 = vmatprep.subr.bf16.mxu0 %v4667
    %4783 = vmatpush1.bf16.msra.mxu0 %v4666
    %4784 = vmatprep.subr.bf16.mxu0 %v4671
    %4785 = vmatpush1.bf16.msra.mxu0 %v4670
    %4786 = vmatprep.subr.bf16.mxu0 %v4675
    %4787 = vmatpush1.bf16.msra.mxu0 %v4674
    %4788 = vmatprep.subr.bf16.mxu0 %v4679
    %4789 = vmatpush1.bf16.msra.mxu0 %v4678
    %4790 = vmatprep.subr.bf16.mxu0 %v4683
    %4791 = vmatpush1.bf16.msra.mxu0 %v4682
    %4792 = vmatprep.subr.bf16.mxu0 %v4687
    %4793 = vmatpush1.bf16.msra.mxu0 %v4686
    %4794 = vmatprep.subr.bf16.mxu0 %v4691
    %4795 = vmatpush1.bf16.msra.mxu0 %v4690
    %4796 = vmatprep.subr.bf16.mxu0 %v4695
    %4797 = vmatpush1.bf16.msra.mxu0 %v4694
    %4798 = vmatprep.subr.bf16.mxu0 %v4699
    %4799 = vmatpush1.bf16.msra.mxu0 %v4698
    %4800 = vmatprep.subr.bf16.mxu0 %v4703
    %4801 = vmatpush1.bf16.msra.mxu0 %v4702
    %4802 = vmatprep.mubr.bf16.mxu0 %v4349
    %4803 = vmatmul.mubr.bf16.gmra.mrb[0].mxu0 %v4348
    %v4804 = vpop.f32.mrb[0].mxu0
    %v4805 = vadd.f32 %v4433, %v4804
    %v4806 = vpop.f32.mrb[0].mxu0
    %v4807 = vadd.f32 %v4437, %v4806
    %v4808 = vpop.f32.mrb[0].mxu0
    %v4809 = vadd.f32 %v4433, %v4808
    %v4810 = vpop.f32.mrb[0].mxu0
    %v4811 = vadd.f32 %v4437, %v4810
    %4812 = vmatprep.mubr.bf16.mxu0 %v4351
    %4813 = vmatmul.mubr.bf16.gmra.mrb[0].mxu0 %v4350
    %v4814 = vpop.f32.mrb[0].mxu0
    %v4815 = vadd.f32 %v4433, %v4814
    %v4816 = vpop.f32.mrb[0].mxu0
    %v4817 = vadd.f32 %v4437, %v4816
    %v4818 = vpop.f32.mrb[0].mxu0
    %v4819 = vadd.f32 %v4433, %v4818
    %v4820 = vpop.f32.mrb[0].mxu0
    %v4821 = vadd.f32 %v4437, %v4820
    %4822 = vmatprep.mubr.bf16.mxu0 %v4353
    %4823 = vmatmul.mubr.bf16.gmra.mrb[0].mxu0 %v4352
    %v4824 = vpop.f32.mrb[0].mxu0
    %v4825 = vadd.f32 %v4433, %v4824
    %v4826 = vpop.f32.mrb[0].mxu0
    %v4827 = vadd.f32 %v4437, %v4826
    %v4828 = vpop.f32.mrb[0].mxu0
    %v4829 = vadd.f32 %v4433, %v4828
    %v4830 = vpop.f32.mrb[0].mxu0
    %v4831 = vadd.f32 %v4437, %v4830
    %4832 = vmatprep.mubr.bf16.mxu0 %v4355
    %4833 = vmatmul.mubr.bf16.gmra.mrb[0].mxu0 %v4354
    %v4834 = vpop.f32.mrb[0].mxu0
    %v4835 = vadd.f32 %v4433, %v4834
    %v4836 = vpop.f32.mrb[0].mxu0
    %v4837 = vadd.f32 %v4437, %v4836
    %v4838 = vpop.f32.mrb[0].mxu0
    %v4839 = vadd.f32 %v4433, %v4838
    %v4840 = vpop.f32.mrb[0].mxu0
    %v4841 = vadd.f32 %v4437, %v4840
    %4842 = vmatprep.mubr.bf16.mxu0 %v4357
    %4843 = vmatmul.mubr.bf16.gmra.mrb[0].mxu0 %v4356
    %v4844 = vpop.f32.mrb[0].mxu0
    %v4845 = vadd.f32 %v4433, %v4844
    %v4846 = vpop.f32.mrb[0].mxu0
    %v4847 = vadd.f32 %v4437, %v4846
    %v4848 = vpop.f32.mrb[0].mxu0
    %v4849 = vadd.f32 %v4433, %v4848
    %v4850 = vpop.f32.mrb[0].mxu0
    %v4851 = vadd.f32 %v4437, %v4850
    %4852 = vmatprep.mubr.bf16.mxu0 %v4359
    %4853 = vmatmul.mubr.bf16.gmra.mrb[0].mxu0 %v4358
    %v4854 = vpop.f32.mrb[0].mxu0
    %v4855 = vadd.f32 %v4433, %v4854
    %v4856 = vpop.f32.mrb[0].mxu0
    %v4857 = vadd.f32 %v4437, %v4856
    %v4858 = vpop.f32.mrb[0].mxu0
    %v4859 = vadd.f32 %v4433, %v4858
    %v4860 = vpop.f32.mrb[0].mxu0
    %v4861 = vadd.f32 %v4437, %v4860
    %4862 = vmatprep.mubr.bf16.mxu0 %v4361
    %4863 = vmatmul.mubr.bf16.gmra.mrb[0].mxu0 %v4360
    %v4864 = vpop.f32.mrb[0].mxu0
    %v4865 = vadd.f32 %v4433, %v4864
    %v4866 = vpop.f32.mrb[0].mxu0
    %v4867 = vadd.f32 %v4437, %v4866
    %v4868 = vpop.f32.mrb[0].mxu0
    %v4869 = vadd.f32 %v4433, %v4868
    %v4870 = vpop.f32.mrb[0].mxu0
    %v4871 = vadd.f32 %v4437, %v4870
    %4872 = vmatprep.mubr.bf16.mxu0 %v4363
    %4873 = vmatmul.mubr.bf16.gmra.mrb[0].mxu0 %v4362
    %v4874 = vpop.f32.mrb[0].mxu0
    %v4875 = vadd.f32 %v4433, %v4874
    %v4876 = vpop.f32.mrb[0].mxu0
    %v4877 = vadd.f32 %v4437, %v4876
    %v4878 = vpop.f32.mrb[0].mxu0
    %v4879 = vadd.f32 %v4433, %v4878
    %v4880 = vpop.f32.mrb[0].mxu0
    %v4881 = vadd.f32 %v4437, %v4880
    %4882 = vdwg.mxu0
    %4883 = vmatprep.subr.bf16.mxu0 %v4645
    %4884 = vmatpush1.bf16.msra.mxu0 %v4644
    %4885 = vmatprep.subr.bf16.mxu0 %v4649
    %4886 = vmatpush1.bf16.msra.mxu0 %v4648
    %4887 = vmatprep.subr.bf16.mxu0 %v4653
    %4888 = vmatpush1.bf16.msra.mxu0 %v4652
    %4889 = vmatprep.subr.bf16.mxu0 %v4657
    %4890 = vmatpush1.bf16.msra.mxu0 %v4656
    %4891 = vmatprep.subr.bf16.mxu0 %v4661
    %4892 = vmatpush1.bf16.msra.mxu0 %v4660
    %4893 = vmatprep.subr.bf16.mxu0 %v4665
    %4894 = vmatpush1.bf16.msra.mxu0 %v4664
    %4895 = vmatprep.subr.bf16.mxu0 %v4669
    %4896 = vmatpush1.bf16.msra.mxu0 %v4668
    %4897 = vmatprep.subr.bf16.mxu0 %v4673
    %4898 = vmatpush1.bf16.msra.mxu0 %v4672
    %4899 = vmatprep.subr.bf16.mxu0 %v4677
    %4900 = vmatpush1.bf16.msra.mxu0 %v4676
    %4901 = vmatprep.subr.bf16.mxu0 %v4681
    %4902 = vmatpush1.bf16.msra.mxu0 %v4680
    %4903 = vmatprep.subr.bf16.mxu0 %v4685
    %4904 = vmatpush1.bf16.msra.mxu0 %v4684
    %4905 = vmatprep.subr.bf16.mxu0 %v4689
    %4906 = vmatpush1.bf16.msra.mxu0 %v4688
    %4907 = vmatprep.subr.bf16.mxu0 %v4693
    %4908 = vmatpush1.bf16.msra.mxu0 %v4692
    %4909 = vmatprep.subr.bf16.mxu0 %v4697
    %4910 = vmatpush1.bf16.msra.mxu0 %v4696
    %4911 = vmatprep.subr.bf16.mxu0 %v4701
    %4912 = vmatpush1.bf16.msra.mxu0 %v4700
    %4913 = vmatprep.subr.bf16.mxu0 %v4705
    %4914 = vmatpush1.bf16.msra.mxu0 %v4704
    %4915 = vmatprep.mubr.bf16.mxu0 %v4349
    %4916 = vmatmul.mubr.bf16.gmra.mrb[0].mxu0 %v4348
    %v4917 = vpop.f32.mrb[0].mxu0
    %v4918 = vadd.f32 %v4441, %v4917
    %v4919 = vpop.f32.mrb[0].mxu0
    %v4920 = vadd.f32 %v4445, %v4919
    %v4921 = vpop.f32.mrb[0].mxu0
    %v4922 = vadd.f32 %v4441, %v4921
    %v4923 = vpop.f32.mrb[0].mxu0
    %v4924 = vadd.f32 %v4445, %v4923
    %4925 = vmatprep.mubr.bf16.mxu0 %v4351
    %4926 = vmatmul.mubr.bf16.gmra.mrb[0].mxu0 %v4350
    %v4927 = vpop.f32.mrb[0].mxu0
    %v4928 = vadd.f32 %v4441, %v4927
    %v4929 = vpop.f32.mrb[0].mxu0
    %v4930 = vadd.f32 %v4445, %v4929
    %v4931 = vpop.f32.mrb[0].mxu0
    %v4932 = vadd.f32 %v4441, %v4931
    %v4933 = vpop.f32.mrb[0].mxu0
    %v4934 = vadd.f32 %v4445, %v4933
    %4935 = vmatprep.mubr.bf16.mxu0 %v4353
    %4936 = vmatmul.mubr.bf16.gmra.mrb[0].mxu0 %v4352
    %v4937 = vpop.f32.mrb[0].mxu0
    %v4938 = vadd.f32 %v4441, %v4937
    %v4939 = vpop.f32.mrb[0].mxu0
    %v4940 = vadd.f32 %v4445, %v4939
    %v4941 = vpop.f32.mrb[0].mxu0
    %v4942 = vadd.f32 %v4441, %v4941
    %v4943 = vpop.f32.mrb[0].mxu0
    %v4944 = vadd.f32 %v4445, %v4943
    %4945 = vmatprep.mubr.bf16.mxu0 %v4355
    %4946 = vmatmul.mubr.bf16.gmra.mrb[0].mxu0 %v4354
    %v4947 = vpop.f32.mrb[0].mxu0
    %v4948 = vadd.f32 %v4441, %v4947
    %v4949 = vpop.f32.mrb[0].mxu0
    %v4950 = vadd.f32 %v4445, %v4949
    %v4951 = vpop.f32.mrb[0].mxu0
    %v4952 = vadd.f32 %v4441, %v4951
    %v4953 = vpop.f32.mrb[0].mxu0
    %v4954 = vadd.f32 %v4445, %v4953
    %4955 = vmatprep.mubr.bf16.mxu0 %v4357
    %4956 = vmatmul.mubr.bf16.gmra.mrb[0].mxu0 %v4356
    %v4957 = vpop.f32.mrb[0].mxu0
    %v4958 = vadd.f32 %v4441, %v4957
    %v4959 = vpop.f32.mrb[0].mxu0
    %v4960 = vadd.f32 %v4445, %v4959
    %v4961 = vpop.f32.mrb[0].mxu0
    %v4962 = vadd.f32 %v4441, %v4961
    %v4963 = vpop.f32.mrb[0].mxu0
    %v4964 = vadd.f32 %v4445, %v4963
    %4965 = vmatprep.mubr.bf16.mxu0 %v4359
    %4966 = vmatmul.mubr.bf16.gmra.mrb[0].mxu0 %v4358
    %v4967 = vpop.f32.mrb[0].mxu0
    %v4968 = vadd.f32 %v4441, %v4967
    %v4969 = vpop.f32.mrb[0].mxu0
    %v4970 = vadd.f32 %v4445, %v4969
    %v4971 = vpop.f32.mrb[0].mxu0
    %v4972 = vadd.f32 %v4441, %v4971
    %v4973 = vpop.f32.mrb[0].mxu0
    %v4974 = vadd.f32 %v4445, %v4973
    %4975 = vmatprep.mubr.bf16.mxu0 %v4361
    %4976 = vmatmul.mubr.bf16.gmra.mrb[0].mxu0 %v4360
    %v4977 = vpop.f32.mrb[0].mxu0
    %v4978 = vadd.f32 %v4441, %v4977
    %v4979 = vpop.f32.mrb[0].mxu0
    %v4980 = vadd.f32 %v4445, %v4979
    %v4981 = vpop.f32.mrb[0].mxu0
    %v4982 = vadd.f32 %v4441, %v4981
    %v4983 = vpop.f32.mrb[0].mxu0
    %v4984 = vadd.f32 %v4445, %v4983
    %4985 = vmatprep.mubr.bf16.mxu0 %v4363
    %4986 = vmatmul.mubr.bf16.gmra.mrb[0].mxu0 %v4362
    %v4987 = vpop.f32.mrb[0].mxu0
    %v4988 = vadd.f32 %v4441, %v4987
    %v4989 = vpop.f32.mrb[0].mxu0
    %v4990 = vadd.f32 %v4445, %v4989
    %v4991 = vpop.f32.mrb[0].mxu0
    %v4992 = vadd.f32 %v4441, %v4991
    %v4993 = vpop.f32.mrb[0].mxu0
    %v4994 = vadd.f32 %v4445, %v4993
    %4995 = vdwg.mxu0
    %v4996 = vmax.f32 %v4805, 0.0
    %v4997 = vmax.f32 %v4807, 0.0
    %v4998 = vmax.f32 %v4918, 0.0
    %v4999 = vmax.f32 %v4920, 0.0
    %v5000 = vmax.f32 %v4809, 0.0
    %v5001 = vmax.f32 %v4811, 0.0
    %v5002 = vmax.f32 %v4922, 0.0
    %v5003 = vmax.f32 %v4924, 0.0
    %v5004 = vmax.f32 %v4815, 0.0
    %v5005 = vmax.f32 %v4817, 0.0
    %v5006 = vmax.f32 %v4928, 0.0
    %v5007 = vmax.f32 %v4930, 0.0
    %v5008 = vmax.f32 %v4819, 0.0
    %v5009 = vmax.f32 %v4821, 0.0
    %v5010 = vmax.f32 %v4932, 0.0
    %v5011 = vmax.f32 %v4934, 0.0
    %v5012 = vmax.f32 %v4825, 0.0
    %v5013 = vmax.f32 %v4827, 0.0
    %v5014 = vmax.f32 %v4938, 0.0
    %v5015 = vmax.f32 %v4940, 0.0
    %v5016 = vmax.f32 %v4829, 0.0
    %v5017 = vmax.f32 %v4831, 0.0
    %v5018 = vmax.f32 %v4942, 0.0
    %v5019 = vmax.f32 %v4944, 0.0
    %v5020 = vmax.f32 %v4835, 0.0
    %v5021 = vmax.f32 %v4837, 0.0
    %v5022 = vmax.f32 %v4948, 0.0
    %v5023 = vmax.f32 %v4950, 0.0
    %v5024 = vmax.f32 %v4839, 0.0
    %v5025 = vmax.f32 %v4841, 0.0
    %v5026 = vmax.f32 %v4952, 0.0
    %v5027 = vmax.f32 %v4954, 0.0
    %v5028 = vmax.f32 %v4845, 0.0
    %v5029 = vmax.f32 %v4847, 0.0
    %v5030 = vmax.f32 %v4958, 0.0
    %v5031 = vmax.f32 %v4960, 0.0
    %v5032 = vmax.f32 %v4849, 0.0
    %v5033 = vmax.f32 %v4851, 0.0
    %v5034 = vmax.f32 %v4962, 0.0
    %v5035 = vmax.f32 %v4964, 0.0
    %v5036 = vmax.f32 %v4855, 0.0
    %v5037 = vmax.f32 %v4857, 0.0
    %v5038 = vmax.f32 %v4968, 0.0
    %v5039 = vmax.f32 %v4970, 0.0
    %v5040 = vmax.f32 %v4859, 0.0
    %v5041 = vmax.f32 %v4861, 0.0
    %v5042 = vmax.f32 %v4972, 0.0
    %v5043 = vmax.f32 %v4974, 0.0
    %v5044 = vmax.f32 %v4865, 0.0
    %v5045 = vmax.f32 %v4867, 0.0
    %v5046 = vmax.f32 %v4978, 0.0
    %v5047 = vmax.f32 %v4980, 0.0
    %v5048 = vmax.f32 %v4869, 0.0
    %v5049 = vmax.f32 %v4871, 0.0
    %v5050 = vmax.f32 %v4982, 0.0
    %v5051 = vmax.f32 %v4984, 0.0
    %v5052 = vmax.f32 %v4875, 0.0
    %v5053 = vmax.f32 %v4877, 0.0
    %v5054 = vmax.f32 %v4988, 0.0
    %v5055 = vmax.f32 %v4990, 0.0
    %v5056 = vmax.f32 %v4879, 0.0
    %v5057 = vmax.f32 %v4881, 0.0
    %v5058 = vmax.f32 %v4992, 0.0
    %v5059 = vmax.f32 %v4994, 0.0
    %v5060 = vmax.f32 %v4996, %v4997
    %v5061 = vmax.f32 %v5000, %v5001
    %v5062 = vmax.f32 %v5004, %v5005
    %v5063 = vmax.f32 %v5008, %v5009
    %v5064 = vmax.f32 %v5012, %v5013
    %v5065 = vmax.f32 %v5016, %v5017
    %v5066 = vmax.f32 %v5020, %v5021
    %v5067 = vmax.f32 %v5024, %v5025
    %v5068 = vmax.f32 %v5028, %v5029
    %v5069 = vmax.f32 %v5032, %v5033
    %v5070 = vmax.f32 %v5036, %v5037
    %v5071 = vmax.f32 %v5040, %v5041
    %v5072 = vmax.f32 %v5044, %v5045
    %v5073 = vmax.f32 %v5048, %v5049
    %v5074 = vmax.f32 %v5052, %v5053
    %v5075 = vmax.f32 %v5056, %v5057
    %v5076 = vmax.f32 %v4998, %v4999
    %v5077 = vmax.f32 %v5002, %v5003
    %v5078 = vmax.f32 %v5006, %v5007
    %v5079 = vmax.f32 %v5010, %v5011
    %v5080 = vmax.f32 %v5014, %v5015
    %v5081 = vmax.f32 %v5018, %v5019
    %v5082 = vmax.f32 %v5022, %v5023
    %v5083 = vmax.f32 %v5026, %v5027
    %v5084 = vmax.f32 %v5030, %v5031
    %v5085 = vmax.f32 %v5034, %v5035
    %v5086 = vmax.f32 %v5038, %v5039
    %v5087 = vmax.f32 %v5042, %v5043
    %v5088 = vmax.f32 %v5046, %v5047
    %v5089 = vmax.f32 %v5050, %v5051
    %v5090 = vmax.f32 %v5054, %v5055
    %v5091 = vmax.f32 %v5058, %v5059
    %v5092 = vmax.f32 %v5060, %v5076
    %v5093 = vmax.f32 %v5061, %v5077
    %v5094 = vmax.f32 %v5062, %v5078
    %v5095 = vmax.f32 %v5063, %v5079
    %v5096 = vmax.f32 %v5064, %v5080
    %v5097 = vmax.f32 %v5065, %v5081
    %v5098 = vmax.f32 %v5066, %v5082
    %v5099 = vmax.f32 %v5067, %v5083
    %v5100 = vmax.f32 %v5068, %v5084
    %v5101 = vmax.f32 %v5069, %v5085
    %v5102 = vmax.f32 %v5070, %v5086
    %v5103 = vmax.f32 %v5071, %v5087
    %v5104 = vmax.f32 %v5072, %v5088
    %v5105 = vmax.f32 %v5073, %v5089
    %v5106 = vmax.f32 %v5074, %v5090
    %v5107 = vmax.f32 %v5075, %v5091
    %v5108 = vpack.c.bf16 %v5093, %v5092
    %v5109 = vpack.c.bf16 %v5095, %v5094
    %v5110 = vpack.c.bf16 %v5097, %v5096
    %v5111 = vpack.c.bf16 %v5099, %v5098
    %v5112 = vpack.c.bf16 %v5101, %v5100
    %v5113 = vpack.c.bf16 %v5103, %v5102
    %v5114 = vpack.c.bf16 %v5105, %v5104
    %v5115 = vpack.c.bf16 %v5107, %v5106
    %v5116 = vld [vmem:[#allocation9] sm:$0xff]
    %v5117 = vld [vmem:[#allocation9 + $0x8] sm:$0xff]
    %v5118 = vld [vmem:[#allocation9 + $0x10] sm:$0xff]
    %v5119 = vld [vmem:[#allocation9 + $0x18] sm:$0xff]
    %v5120 = vld [vmem:[#allocation9 + $0x20] sm:$0xff]
    %v5121 = vld [vmem:[#allocation9 + $0x28] sm:$0xff]
    %v5122 = vld [vmem:[#allocation9 + $0x30] sm:$0xff]
    %v5123 = vld [vmem:[#allocation9 + $0x38] sm:$0xff]
    %v5124 = vld [vmem:[#allocation9 + $0x40] sm:$0xff]
    %v5125 = vld [vmem:[#allocation9 + $0x48] sm:$0xff]
    %v5126 = vld [vmem:[#allocation9 + $0x50] sm:$0xff]
    %v5127 = vld [vmem:[#allocation9 + $0x58] sm:$0xff]
    %v5128 = vld [vmem:[#allocation9 + $0x60] sm:$0xff]
    %v5129 = vld [vmem:[#allocation9 + $0x68] sm:$0xff]
    %v5130 = vld [vmem:[#allocation9 + $0x70] sm:$0xff]
    %v5131 = vld [vmem:[#allocation9 + $0x78] sm:$0xff]
    %v5132 = vld [vmem:[#allocation9 + $0x80] sm:$0xff]
    %v5133 = vld [vmem:[#allocation9 + $0x88] sm:$0xff]
    %v5134 = vld [vmem:[#allocation9 + $0x90] sm:$0xff]
    %v5135 = vld [vmem:[#allocation9 + $0x98] sm:$0xff]
    %v5136 = vld [vmem:[#allocation9 + $0xa0] sm:$0xff]
    %v5137 = vld [vmem:[#allocation9 + $0xa8] sm:$0xff]
    %v5138 = vld [vmem:[#allocation9 + $0xb0] sm:$0xff]
    %v5139 = vld [vmem:[#allocation9 + $0xb8] sm:$0xff]
    %v5140 = vld [vmem:[#allocation9 + $0xc0] sm:$0xff]
    %v5141 = vld [vmem:[#allocation9 + $0xc8] sm:$0xff]
    %v5142 = vld [vmem:[#allocation9 + $0xd0] sm:$0xff]
    %v5143 = vld [vmem:[#allocation9 + $0xd8] sm:$0xff]
    %v5144 = vld [vmem:[#allocation9 + $0xe0] sm:$0xff]
    %v5145 = vld [vmem:[#allocation9 + $0xe8] sm:$0xff]
    %v5146 = vld [vmem:[#allocation9 + $0xf0] sm:$0xff]
    %v5147 = vld [vmem:[#allocation9 + $0xf8] sm:$0xff]
    %v5148 = vld [vmem:[#allocation10] sm:$0xf]
    %v5150 = vlaneseq
    %v5151 = vshrl.u32 %v5150, 7
    %v5152 = vsub.s32 0, %v5151
    %v5153 = vrot.slane %v5148, %v5152
    %v5154 = vlaneseq
    %v5155 = vshrl.u32 %v5154, 7
    %v5156 = vsub.s32 1, %v5155
    %v5157 = vrot.slane %v5148, %v5156
    %v5158 = vlaneseq
    %v5159 = vshrl.u32 %v5158, 7
    %v5160 = vsub.s32 2, %v5159
    %v5161 = vrot.slane %v5148, %v5160
    %v5162 = vlaneseq
    %v5163 = vshrl.u32 %v5162, 7
    %v5164 = vsub.s32 3, %v5163
    %v5165 = vrot.slane %v5148, %v5164
    %v5202 = vunpack.c.l.b16 %v5116
    %v5203 = vunpack.c.h.b16 %v5116
    %v5204 = vunpack.c.l.b16 %v5117
    %v5205 = vunpack.c.h.b16 %v5117
    %v5206 = vunpack.c.l.b16 %v5118
    %v5207 = vunpack.c.h.b16 %v5118
    %v5208 = vunpack.c.l.b16 %v5119
    %v5209 = vunpack.c.h.b16 %v5119
    %v5210 = vunpack.c.l.b16 %v5120
    %v5211 = vunpack.c.h.b16 %v5120
    %v5212 = vunpack.c.l.b16 %v5121
    %v5213 = vunpack.c.h.b16 %v5121
    %v5214 = vunpack.c.l.b16 %v5122
    %v5215 = vunpack.c.h.b16 %v5122
    %v5216 = vunpack.c.l.b16 %v5123
    %v5217 = vunpack.c.h.b16 %v5123
    %v5218 = vunpack.c.l.b16 %v5124
    %v5219 = vunpack.c.h.b16 %v5124
    %v5220 = vunpack.c.l.b16 %v5125
    %v5221 = vunpack.c.h.b16 %v5125
    %v5222 = vunpack.c.l.b16 %v5126
    %v5223 = vunpack.c.h.b16 %v5126
    %v5224 = vunpack.c.l.b16 %v5127
    %v5225 = vunpack.c.h.b16 %v5127
    %v5226 = vunpack.c.l.b16 %v5128
    %v5227 = vunpack.c.h.b16 %v5128
    %v5228 = vunpack.c.l.b16 %v5129
    %v5229 = vunpack.c.h.b16 %v5129
    %v5230 = vunpack.c.l.b16 %v5130
    %v5231 = vunpack.c.h.b16 %v5130
    %v5232 = vunpack.c.l.b16 %v5131
    %v5233 = vunpack.c.h.b16 %v5131
    %v5234 = vunpack.c.l.b16 %v5132
    %v5235 = vunpack.c.h.b16 %v5132
    %v5236 = vunpack.c.l.b16 %v5133
    %v5237 = vunpack.c.h.b16 %v5133
    %v5238 = vunpack.c.l.b16 %v5134
    %v5239 = vunpack.c.h.b16 %v5134
    %v5240 = vunpack.c.l.b16 %v5135
    %v5241 = vunpack.c.h.b16 %v5135
    %v5242 = vunpack.c.l.b16 %v5136
    %v5243 = vunpack.c.h.b16 %v5136
    %v5244 = vunpack.c.l.b16 %v5137
    %v5245 = vunpack.c.h.b16 %v5137
    %v5246 = vunpack.c.l.b16 %v5138
    %v5247 = vunpack.c.h.b16 %v5138
    %v5248 = vunpack.c.l.b16 %v5139
    %v5249 = vunpack.c.h.b16 %v5139
    %v5250 = vunpack.c.l.b16 %v5140
    %v5251 = vunpack.c.h.b16 %v5140
    %v5252 = vunpack.c.l.b16 %v5141
    %v5253 = vunpack.c.h.b16 %v5141
    %v5254 = vunpack.c.l.b16 %v5142
    %v5255 = vunpack.c.h.b16 %v5142
    %v5256 = vunpack.c.l.b16 %v5143
    %v5257 = vunpack.c.h.b16 %v5143
    %v5258 = vunpack.c.l.b16 %v5144
    %v5259 = vunpack.c.h.b16 %v5144
    %v5260 = vunpack.c.l.b16 %v5145
    %v5261 = vunpack.c.h.b16 %v5145
    %v5262 = vunpack.c.l.b16 %v5146
    %v5263 = vunpack.c.h.b16 %v5146
    %v5264 = vunpack.c.l.b16 %v5147
    %v5265 = vunpack.c.h.b16 %v5147
    %v5266 = vpack.c.b16 %v5206, %v5202
    %v5267 = vpack.c.b16 %v5207, %v5203
    %v5268 = vpack.c.b16 %v5208, %v5204
    %v5269 = vpack.c.b16 %v5209, %v5205
    %v5270 = vpack.c.b16 %v5214, %v5210
    %v5271 = vpack.c.b16 %v5215, %v5211
    %v5272 = vpack.c.b16 %v5216, %v5212
    %v5273 = vpack.c.b16 %v5217, %v5213
    %v5274 = vpack.c.b16 %v5222, %v5218
    %v5275 = vpack.c.b16 %v5223, %v5219
    %v5276 = vpack.c.b16 %v5224, %v5220
    %v5277 = vpack.c.b16 %v5225, %v5221
    %v5278 = vpack.c.b16 %v5230, %v5226
    %v5279 = vpack.c.b16 %v5231, %v5227
    %v5280 = vpack.c.b16 %v5232, %v5228
    %v5281 = vpack.c.b16 %v5233, %v5229
    %v5282 = vpack.c.b16 %v5238, %v5234
    %v5283 = vpack.c.b16 %v5239, %v5235
    %v5284 = vpack.c.b16 %v5240, %v5236
    %v5285 = vpack.c.b16 %v5241, %v5237
    %v5286 = vpack.c.b16 %v5246, %v5242
    %v5287 = vpack.c.b16 %v5247, %v5243
    %v5288 = vpack.c.b16 %v5248, %v5244
    %v5289 = vpack.c.b16 %v5249, %v5245
    %v5290 = vpack.c.b16 %v5254, %v5250
    %v5291 = vpack.c.b16 %v5255, %v5251
    %v5292 = vpack.c.b16 %v5256, %v5252
    %v5293 = vpack.c.b16 %v5257, %v5253
    %v5294 = vpack.c.b16 %v5262, %v5258
    %v5295 = vpack.c.b16 %v5263, %v5259
    %v5296 = vpack.c.b16 %v5264, %v5260
    %v5297 = vpack.c.b16 %v5265, %v5261
    %5330 = vmatprep.subr.bf16.mxu0 %v5267
    %5331 = vmatpush1.bf16.msra.mxu0 %v5266
    %5332 = vmatprep.subr.bf16.mxu0 %v5271
    %5333 = vmatpush1.bf16.msra.mxu0 %v5270
    %5334 = vmatprep.subr.bf16.mxu0 %v5275
    %5335 = vmatpush1.bf16.msra.mxu0 %v5274
    %5336 = vmatprep.subr.bf16.mxu0 %v5279
    %5337 = vmatpush1.bf16.msra.mxu0 %v5278
    %5338 = vmatprep.subr.bf16.mxu0 %v5283
    %5339 = vmatpush1.bf16.msra.mxu0 %v5282
    %5340 = vmatprep.subr.bf16.mxu0 %v5287
    %5341 = vmatpush1.bf16.msra.mxu0 %v5286
    %5342 = vmatprep.subr.bf16.mxu0 %v5291
    %5343 = vmatpush1.bf16.msra.mxu0 %v5290
    %5344 = vmatprep.subr.bf16.mxu0 %v5295
    %5345 = vmatpush1.bf16.msra.mxu0 %v5294
    %5346 = vmatprep.subr.bf16.mxu0 0
    %5347 = vmatpush1.bf16.msra.mxu0 0
    %5348 = vmatprep.subr.bf16.mxu0 0
    %5349 = vmatpush1.bf16.msra.mxu0 0
    %5350 = vmatprep.subr.bf16.mxu0 0
    %5351 = vmatpush1.bf16.msra.mxu0 0
    %5352 = vmatprep.subr.bf16.mxu0 0
    %5353 = vmatpush1.bf16.msra.mxu0 0
    %5354 = vmatprep.subr.bf16.mxu0 0
    %5355 = vmatpush1.bf16.msra.mxu0 0
    %5356 = vmatprep.subr.bf16.mxu0 0
    %5357 = vmatpush1.bf16.msra.mxu0 0
    %5358 = vmatprep.subr.bf16.mxu0 0
    %5359 = vmatpush1.bf16.msra.mxu0 0
    %5360 = vmatprep.subr.bf16.mxu0 0
    %5361 = vmatpush1.bf16.msra.mxu0 0
    %5362 = vmatprep.mubr.bf16.mxu0 0
    %5363 = vmatmul.mubr.bf16.gmra.mrb[0].mxu0 %v5108
    %v5364 = vpop.f32.mrb[0].mxu0
    %v5365 = vadd.f32 %v5153, %v5364
    %v5366 = vpop.f32.mrb[0].mxu0
    %v5367 = vadd.f32 %v5157, %v5366
    %v5368 = vpop.f32.mrb[0].mxu0
    %v5369 = vadd.f32 %v5153, %v5368
    %v5370 = vpop.f32.mrb[0].mxu0
    %v5371 = vadd.f32 %v5157, %v5370
    %5372 = vmatprep.mubr.bf16.mxu0 0
    %5373 = vmatmul.mubr.bf16.gmra.mrb[0].mxu0 %v5109
    %v5374 = vpop.f32.mrb[0].mxu0
    %v5375 = vadd.f32 %v5153, %v5374
    %v5376 = vpop.f32.mrb[0].mxu0
    %v5377 = vadd.f32 %v5157, %v5376
    %v5378 = vpop.f32.mrb[0].mxu0
    %v5379 = vadd.f32 %v5153, %v5378
    %v5380 = vpop.f32.mrb[0].mxu0
    %v5381 = vadd.f32 %v5157, %v5380
    %5382 = vmatprep.mubr.bf16.mxu0 0
    %5383 = vmatmul.mubr.bf16.gmra.mrb[0].mxu0 %v5110
    %v5384 = vpop.f32.mrb[0].mxu0
    %v5385 = vadd.f32 %v5153, %v5384
    %v5386 = vpop.f32.mrb[0].mxu0
    %v5387 = vadd.f32 %v5157, %v5386
    %v5388 = vpop.f32.mrb[0].mxu0
    %v5389 = vadd.f32 %v5153, %v5388
    %v5390 = vpop.f32.mrb[0].mxu0
    %v5391 = vadd.f32 %v5157, %v5390
    %5392 = vmatprep.mubr.bf16.mxu0 0
    %5393 = vmatmul.mubr.bf16.gmra.mrb[0].mxu0 %v5111
    %v5394 = vpop.f32.mrb[0].mxu0
    %v5395 = vadd.f32 %v5153, %v5394
    %v5396 = vpop.f32.mrb[0].mxu0
    %v5397 = vadd.f32 %v5157, %v5396
    %v5398 = vpop.f32.mrb[0].mxu0
    %v5399 = vadd.f32 %v5153, %v5398
    %v5400 = vpop.f32.mrb[0].mxu0
    %v5401 = vadd.f32 %v5157, %v5400
    %5402 = vmatprep.mubr.bf16.mxu0 0
    %5403 = vmatmul.mubr.bf16.gmra.mrb[0].mxu0 %v5112
    %v5404 = vpop.f32.mrb[0].mxu0
    %v5405 = vadd.f32 %v5153, %v5404
    %v5406 = vpop.f32.mrb[0].mxu0
    %v5407 = vadd.f32 %v5157, %v5406
    %v5408 = vpop.f32.mrb[0].mxu0
    %v5409 = vadd.f32 %v5153, %v5408
    %v5410 = vpop.f32.mrb[0].mxu0
    %v5411 = vadd.f32 %v5157, %v5410
    %5412 = vmatprep.mubr.bf16.mxu0 0
    %5413 = vmatmul.mubr.bf16.gmra.mrb[0].mxu0 %v5113
    %v5414 = vpop.f32.mrb[0].mxu0
    %v5415 = vadd.f32 %v5153, %v5414
    %v5416 = vpop.f32.mrb[0].mxu0
    %v5417 = vadd.f32 %v5157, %v5416
    %v5418 = vpop.f32.mrb[0].mxu0
    %v5419 = vadd.f32 %v5153, %v5418
    %v5420 = vpop.f32.mrb[0].mxu0
    %v5421 = vadd.f32 %v5157, %v5420
    %5422 = vmatprep.mubr.bf16.mxu0 0
    %5423 = vmatmul.mubr.bf16.gmra.mrb[0].mxu0 %v5114
    %v5424 = vpop.f32.mrb[0].mxu0
    %v5425 = vadd.f32 %v5153, %v5424
    %v5426 = vpop.f32.mrb[0].mxu0
    %v5427 = vadd.f32 %v5157, %v5426
    %v5428 = vpop.f32.mrb[0].mxu0
    %v5429 = vadd.f32 %v5153, %v5428
    %v5430 = vpop.f32.mrb[0].mxu0
    %v5431 = vadd.f32 %v5157, %v5430
    %5432 = vmatprep.mubr.bf16.mxu0 0
    %5433 = vmatmul.mubr.bf16.gmra.mrb[0].mxu0 %v5115
    %v5434 = vpop.f32.mrb[0].mxu0
    %v5435 = vadd.f32 %v5153, %v5434
    %v5436 = vpop.f32.mrb[0].mxu0
    %v5437 = vadd.f32 %v5157, %v5436
    %v5438 = vpop.f32.mrb[0].mxu0
    %v5439 = vadd.f32 %v5153, %v5438
    %v5440 = vpop.f32.mrb[0].mxu0
    %v5441 = vadd.f32 %v5157, %v5440
    %5442 = vdwg.mxu0
    %5443 = vmatprep.subr.bf16.mxu0 %v5269
    %5444 = vmatpush1.bf16.msra.mxu0 %v5268
    %5445 = vmatprep.subr.bf16.mxu0 %v5273
    %5446 = vmatpush1.bf16.msra.mxu0 %v5272
    %5447 = vmatprep.subr.bf16.mxu0 %v5277
    %5448 = vmatpush1.bf16.msra.mxu0 %v5276
    %5449 = vmatprep.subr.bf16.mxu0 %v5281
    %5450 = vmatpush1.bf16.msra.mxu0 %v5280
    %5451 = vmatprep.subr.bf16.mxu0 %v5285
    %5452 = vmatpush1.bf16.msra.mxu0 %v5284
    %5453 = vmatprep.subr.bf16.mxu0 %v5289
    %5454 = vmatpush1.bf16.msra.mxu0 %v5288
    %5455 = vmatprep.subr.bf16.mxu0 %v5293
    %5456 = vmatpush1.bf16.msra.mxu0 %v5292
    %5457 = vmatprep.subr.bf16.mxu0 %v5297
    %5458 = vmatpush1.bf16.msra.mxu0 %v5296
    %5459 = vmatprep.subr.bf16.mxu0 0
    %5460 = vmatpush1.bf16.msra.mxu0 0
    %5461 = vmatprep.subr.bf16.mxu0 0
    %5462 = vmatpush1.bf16.msra.mxu0 0
    %5463 = vmatprep.subr.bf16.mxu0 0
    %5464 = vmatpush1.bf16.msra.mxu0 0
    %5465 = vmatprep.subr.bf16.mxu0 0
    %5466 = vmatpush1.bf16.msra.mxu0 0
    %5467 = vmatprep.subr.bf16.mxu0 0
    %5468 = vmatpush1.bf16.msra.mxu0 0
    %5469 = vmatprep.subr.bf16.mxu0 0
    %5470 = vmatpush1.bf16.msra.mxu0 0
    %5471 = vmatprep.subr.bf16.mxu0 0
    %5472 = vmatpush1.bf16.msra.mxu0 0
    %5473 = vmatprep.subr.bf16.mxu0 0
    %5474 = vmatpush1.bf16.msra.mxu0 0
    %5475 = vmatprep.mubr.bf16.mxu0 0
    %5476 = vmatmul.mubr.bf16.gmra.mrb[0].mxu0 %v5108
    %v5477 = vpop.f32.mrb[0].mxu0
    %v5478 = vadd.f32 %v5161, %v5477
    %v5479 = vpop.f32.mrb[0].mxu0
    %v5480 = vadd.f32 %v5165, %v5479
    %v5481 = vpop.f32.mrb[0].mxu0
    %v5482 = vadd.f32 %v5161, %v5481
    %v5483 = vpop.f32.mrb[0].mxu0
    %v5484 = vadd.f32 %v5165, %v5483
    %5485 = vmatprep.mubr.bf16.mxu0 0
    %5486 = vmatmul.mubr.bf16.gmra.mrb[0].mxu0 %v5109
    %v5487 = vpop.f32.mrb[0].mxu0
    %v5488 = vadd.f32 %v5161, %v5487
    %v5489 = vpop.f32.mrb[0].mxu0
    %v5490 = vadd.f32 %v5165, %v5489
    %v5491 = vpop.f32.mrb[0].mxu0
    %v5492 = vadd.f32 %v5161, %v5491
    %v5493 = vpop.f32.mrb[0].mxu0
    %v5494 = vadd.f32 %v5165, %v5493
    %5495 = vmatprep.mubr.bf16.mxu0 0
    %5496 = vmatmul.mubr.bf16.gmra.mrb[0].mxu0 %v5110
    %v5497 = vpop.f32.mrb[0].mxu0
    %v5498 = vadd.f32 %v5161, %v5497
    %v5499 = vpop.f32.mrb[0].mxu0
    %v5500 = vadd.f32 %v5165, %v5499
    %v5501 = vpop.f32.mrb[0].mxu0
    %v5502 = vadd.f32 %v5161, %v5501
    %v5503 = vpop.f32.mrb[0].mxu0
    %v5504 = vadd.f32 %v5165, %v5503
    %5505 = vmatprep.mubr.bf16.mxu0 0
    %5506 = vmatmul.mubr.bf16.gmra.mrb[0].mxu0 %v5111
    %v5507 = vpop.f32.mrb[0].mxu0
    %v5508 = vadd.f32 %v5161, %v5507
    %v5509 = vpop.f32.mrb[0].mxu0
    %v5510 = vadd.f32 %v5165, %v5509
    %v5511 = vpop.f32.mrb[0].mxu0
    %v5512 = vadd.f32 %v5161, %v5511
    %v5513 = vpop.f32.mrb[0].mxu0
    %v5514 = vadd.f32 %v5165, %v5513
    %5515 = vmatprep.mubr.bf16.mxu0 0
    %5516 = vmatmul.mubr.bf16.gmra.mrb[0].mxu0 %v5112
    %v5517 = vpop.f32.mrb[0].mxu0
    %v5518 = vadd.f32 %v5161, %v5517
    %v5519 = vpop.f32.mrb[0].mxu0
    %v5520 = vadd.f32 %v5165, %v5519
    %v5521 = vpop.f32.mrb[0].mxu0
    %v5522 = vadd.f32 %v5161, %v5521
    %v5523 = vpop.f32.mrb[0].mxu0
    %v5524 = vadd.f32 %v5165, %v5523
    %5525 = vmatprep.mubr.bf16.mxu0 0
    %5526 = vmatmul.mubr.bf16.gmra.mrb[0].mxu0 %v5113
    %v5527 = vpop.f32.mrb[0].mxu0
    %v5528 = vadd.f32 %v5161, %v5527
    %v5529 = vpop.f32.mrb[0].mxu0
    %v5530 = vadd.f32 %v5165, %v5529
    %v5531 = vpop.f32.mrb[0].mxu0
    %v5532 = vadd.f32 %v5161, %v5531
    %v5533 = vpop.f32.mrb[0].mxu0
    %v5534 = vadd.f32 %v5165, %v5533
    %5535 = vmatprep.mubr.bf16.mxu0 0
    %5536 = vmatmul.mubr.bf16.gmra.mrb[0].mxu0 %v5114
    %v5537 = vpop.f32.mrb[0].mxu0
    %v5538 = vadd.f32 %v5161, %v5537
    %v5539 = vpop.f32.mrb[0].mxu0
    %v5540 = vadd.f32 %v5165, %v5539
    %v5541 = vpop.f32.mrb[0].mxu0
    %v5542 = vadd.f32 %v5161, %v5541
    %v5543 = vpop.f32.mrb[0].mxu0
    %v5544 = vadd.f32 %v5165, %v5543
    %5545 = vmatprep.mubr.bf16.mxu0 0
    %5546 = vmatmul.mubr.bf16.gmra.mrb[0].mxu0 %v5115
    %v5547 = vpop.f32.mrb[0].mxu0
    %v5548 = vadd.f32 %v5161, %v5547
    %v5549 = vpop.f32.mrb[0].mxu0
    %v5550 = vadd.f32 %v5165, %v5549
    %v5551 = vpop.f32.mrb[0].mxu0
    %v5552 = vadd.f32 %v5161, %v5551
    %v5553 = vpop.f32.mrb[0].mxu0
    %v5554 = vadd.f32 %v5165, %v5553
    %5555 = vdwg.mxu0
    %v5556 = vmax.f32 %v5365, 0.0
    %v5557 = vmax.f32 %v5367, 0.0
    %v5558 = vmax.f32 %v5478, 0.0
    %v5559 = vmax.f32 %v5480, 0.0
    %v5560 = vmax.f32 %v5369, 0.0
    %v5561 = vmax.f32 %v5371, 0.0
    %v5562 = vmax.f32 %v5482, 0.0
    %v5563 = vmax.f32 %v5484, 0.0
    %v5564 = vmax.f32 %v5375, 0.0
    %v5565 = vmax.f32 %v5377, 0.0
    %v5566 = vmax.f32 %v5488, 0.0
    %v5567 = vmax.f32 %v5490, 0.0
    %v5568 = vmax.f32 %v5379, 0.0
    %v5569 = vmax.f32 %v5381, 0.0
    %v5570 = vmax.f32 %v5492, 0.0
    %v5571 = vmax.f32 %v5494, 0.0
    %v5572 = vmax.f32 %v5385, 0.0
    %v5573 = vmax.f32 %v5387, 0.0
    %v5574 = vmax.f32 %v5498, 0.0
    %v5575 = vmax.f32 %v5500, 0.0
    %v5576 = vmax.f32 %v5389, 0.0
    %v5577 = vmax.f32 %v5391, 0.0
    %v5578 = vmax.f32 %v5502, 0.0
    %v5579 = vmax.f32 %v5504, 0.0
    %v5580 = vmax.f32 %v5395, 0.0
    %v5581 = vmax.f32 %v5397, 0.0
    %v5582 = vmax.f32 %v5508, 0.0
    %v5583 = vmax.f32 %v5510, 0.0
    %v5584 = vmax.f32 %v5399, 0.0
    %v5585 = vmax.f32 %v5401, 0.0
    %v5586 = vmax.f32 %v5512, 0.0
    %v5587 = vmax.f32 %v5514, 0.0
    %v5588 = vmax.f32 %v5405, 0.0
    %v5589 = vmax.f32 %v5407, 0.0
    %v5590 = vmax.f32 %v5518, 0.0
    %v5591 = vmax.f32 %v5520, 0.0
    %v5592 = vmax.f32 %v5409, 0.0
    %v5593 = vmax.f32 %v5411, 0.0
    %v5594 = vmax.f32 %v5522, 0.0
    %v5595 = vmax.f32 %v5524, 0.0
    %v5596 = vmax.f32 %v5415, 0.0
    %v5597 = vmax.f32 %v5417, 0.0
    %v5598 = vmax.f32 %v5528, 0.0
    %v5599 = vmax.f32 %v5530, 0.0
    %v5600 = vmax.f32 %v5419, 0.0
    %v5601 = vmax.f32 %v5421, 0.0
    %v5602 = vmax.f32 %v5532, 0.0
    %v5603 = vmax.f32 %v5534, 0.0
    %v5604 = vmax.f32 %v5425, 0.0
    %v5605 = vmax.f32 %v5427, 0.0
    %v5606 = vmax.f32 %v5538, 0.0
    %v5607 = vmax.f32 %v5540, 0.0
    %v5608 = vmax.f32 %v5429, 0.0
    %v5609 = vmax.f32 %v5431, 0.0
    %v5610 = vmax.f32 %v5542, 0.0
    %v5611 = vmax.f32 %v5544, 0.0
    %v5612 = vmax.f32 %v5435, 0.0
    %v5613 = vmax.f32 %v5437, 0.0
    %v5614 = vmax.f32 %v5548, 0.0
    %v5615 = vmax.f32 %v5550, 0.0
    %v5616 = vmax.f32 %v5439, 0.0
    %v5617 = vmax.f32 %v5441, 0.0
    %v5618 = vmax.f32 %v5552, 0.0
    %v5619 = vmax.f32 %v5554, 0.0
    %v5620 = vpack.c.bf16 %v5560, %v5556
    %v5621 = vpack.c.bf16 %v5561, %v5557
    %v5622 = vpack.c.bf16 %v5562, %v5558
    %v5623 = vpack.c.bf16 %v5563, %v5559
    %v5624 = vpack.c.bf16 %v5568, %v5564
    %v5625 = vpack.c.bf16 %v5569, %v5565
    %v5626 = vpack.c.bf16 %v5570, %v5566
    %v5627 = vpack.c.bf16 %v5571, %v5567
    %v5628 = vpack.c.bf16 %v5576, %v5572
    %v5629 = vpack.c.bf16 %v5577, %v5573
    %v5630 = vpack.c.bf16 %v5578, %v5574
    %v5631 = vpack.c.bf16 %v5579, %v5575
    %v5632 = vpack.c.bf16 %v5584, %v5580
    %v5633 = vpack.c.bf16 %v5585, %v5581
    %v5634 = vpack.c.bf16 %v5586, %v5582
    %v5635 = vpack.c.bf16 %v5587, %v5583
    %v5636 = vpack.c.bf16 %v5592, %v5588
    %v5637 = vpack.c.bf16 %v5593, %v5589
    %v5638 = vpack.c.bf16 %v5594, %v5590
    %v5639 = vpack.c.bf16 %v5595, %v5591
    %v5640 = vpack.c.bf16 %v5600, %v5596
    %v5641 = vpack.c.bf16 %v5601, %v5597
    %v5642 = vpack.c.bf16 %v5602, %v5598
    %v5643 = vpack.c.bf16 %v5603, %v5599
    %v5644 = vpack.c.bf16 %v5608, %v5604
    %v5645 = vpack.c.bf16 %v5609, %v5605
    %v5646 = vpack.c.bf16 %v5610, %v5606
    %v5647 = vpack.c.bf16 %v5611, %v5607
    %v5648 = vpack.c.bf16 %v5616, %v5612
    %v5649 = vpack.c.bf16 %v5617, %v5613
    %v5650 = vpack.c.bf16 %v5618, %v5614
    %v5651 = vpack.c.bf16 %v5619, %v5615
    %v5652 = vld [vmem:[#allocation12] sm:$0xf]
    %v5653 = vld [vmem:[#allocation12 + $0x4] sm:$0xf]
    %v5654 = vld [vmem:[#allocation12 + $0x8] sm:$0xf]
    %v5655 = vld [vmem:[#allocation12 + $0xc] sm:$0xf]
    %v5656 = vld [vmem:[#allocation12 + $0x10] sm:$0xf]
    %v5657 = vld [vmem:[#allocation12 + $0x14] sm:$0xf]
    %v5658 = vld [vmem:[#allocation12 + $0x18] sm:$0xf]
    %v5659 = vld [vmem:[#allocation12 + $0x1c] sm:$0xf]
    %v5660 = vld [vmem:[#allocation12 + $0x20] sm:$0xf]
    %v5661 = vld [vmem:[#allocation12 + $0x24] sm:$0xf]
    %v5662 = vld [vmem:[#allocation12 + $0x28] sm:$0xf]
    %v5663 = vld [vmem:[#allocation12 + $0x2c] sm:$0xf]
    %v5664 = vld [vmem:[#allocation12 + $0x30] sm:$0xf]
    %v5665 = vld [vmem:[#allocation12 + $0x34] sm:$0xf]
    %v5666 = vld [vmem:[#allocation12 + $0x38] sm:$0xf]
    %v5667 = vld [vmem:[#allocation12 + $0x3c] sm:$0xf]
    %v5668 = vld [vmem:[#allocation12 + $0x40] sm:$0xf]
    %v5669 = vld [vmem:[#allocation12 + $0x44] sm:$0xf]
    %v5670 = vld [vmem:[#allocation12 + $0x48] sm:$0xf]
    %v5671 = vld [vmem:[#allocation12 + $0x4c] sm:$0xf]
    %v5672 = vld [vmem:[#allocation12 + $0x50] sm:$0xf]
    %v5673 = vld [vmem:[#allocation12 + $0x54] sm:$0xf]
    %v5674 = vld [vmem:[#allocation12 + $0x58] sm:$0xf]
    %v5675 = vld [vmem:[#allocation12 + $0x5c] sm:$0xf]
    %v5676 = vld [vmem:[#allocation12 + $0x60] sm:$0xf]
    %v5677 = vld [vmem:[#allocation12 + $0x64] sm:$0xf]
    %v5678 = vld [vmem:[#allocation12 + $0x68] sm:$0xf]
    %v5679 = vld [vmem:[#allocation12 + $0x6c] sm:$0xf]
    %v5680 = vld [vmem:[#allocation12 + $0x70] sm:$0xf]
    %v5681 = vld [vmem:[#allocation12 + $0x74] sm:$0xf]
    %v5682 = vld [vmem:[#allocation12 + $0x78] sm:$0xf]
    %v5683 = vld [vmem:[#allocation12 + $0x7c] sm:$0xf]
    %v5684 = vld [vmem:[#allocation12 + $0x80] sm:$0xf]
    %v5685 = vld [vmem:[#allocation12 + $0x84] sm:$0xf]
    %v5686 = vld [vmem:[#allocation12 + $0x88] sm:$0xf]
    %v5687 = vld [vmem:[#allocation12 + $0x8c] sm:$0xf]
    %v5688 = vld [vmem:[#allocation12 + $0x90] sm:$0xf]
    %v5689 = vld [vmem:[#allocation12 + $0x94] sm:$0xf]
    %v5690 = vld [vmem:[#allocation12 + $0x98] sm:$0xf]
    %v5691 = vld [vmem:[#allocation12 + $0x9c] sm:$0xf]
    %v5692 = vld [vmem:[#allocation12 + $0xa0] sm:$0xf]
    %v5693 = vld [vmem:[#allocation12 + $0xa4] sm:$0xf]
    %v5694 = vld [vmem:[#allocation12 + $0xa8] sm:$0xf]
    %v5695 = vld [vmem:[#allocation12 + $0xac] sm:$0xf]
    %v5696 = vld [vmem:[#allocation12 + $0xb0] sm:$0xf]
    %v5697 = vld [vmem:[#allocation12 + $0xb4] sm:$0xf]
    %v5698 = vld [vmem:[#allocation12 + $0xb8] sm:$0xf]
    %v5699 = vld [vmem:[#allocation12 + $0xbc] sm:$0xf]
    %v5700 = vld [vmem:[#allocation12 + $0xc0] sm:$0xf]
    %v5701 = vld [vmem:[#allocation12 + $0xc4] sm:$0xf]
    %v5702 = vld [vmem:[#allocation12 + $0xc8] sm:$0xf]
    %v5703 = vld [vmem:[#allocation12 + $0xcc] sm:$0xf]
    %v5704 = vld [vmem:[#allocation12 + $0xd0] sm:$0xf]
    %v5705 = vld [vmem:[#allocation12 + $0xd4] sm:$0xf]
    %v5706 = vld [vmem:[#allocation12 + $0xd8] sm:$0xf]
    %v5707 = vld [vmem:[#allocation12 + $0xdc] sm:$0xf]
    %v5708 = vld [vmem:[#allocation12 + $0xe0] sm:$0xf]
    %v5709 = vld [vmem:[#allocation12 + $0xe4] sm:$0xf]
    %v5710 = vld [vmem:[#allocation12 + $0xe8] sm:$0xf]
    %v5711 = vld [vmem:[#allocation12 + $0xec] sm:$0xf]
    %v5712 = vld [vmem:[#allocation12 + $0xf0] sm:$0xf]
    %v5713 = vld [vmem:[#allocation12 + $0xf4] sm:$0xf]
    %v5714 = vld [vmem:[#allocation12 + $0xf8] sm:$0xf]
    %v5715 = vld [vmem:[#allocation12 + $0xfc] sm:$0xf]
    %v5716 = vld [vmem:[#allocation13] sm:$0x1]
    %v5718 = vlaneseq
    %v5719 = vshrl.u32 %v5718, 7
    %v5720 = vsub.s32 0, %v5719
    %v5721 = vrot.slane %v5716, %v5720
    %v5787 = vunpack.c.l.b16 %v5652
    %v5788 = vunpack.c.l.b16 %v5653
    %v5789 = vunpack.c.l.b16 %v5654
    %v5790 = vunpack.c.l.b16 %v5655
    %v5791 = vunpack.c.l.b16 %v5656
    %v5792 = vunpack.c.l.b16 %v5657
    %v5793 = vunpack.c.l.b16 %v5658
    %v5794 = vunpack.c.l.b16 %v5659
    %v5795 = vunpack.c.l.b16 %v5660
    %v5796 = vunpack.c.l.b16 %v5661
    %v5797 = vunpack.c.l.b16 %v5662
    %v5798 = vunpack.c.l.b16 %v5663
    %v5799 = vunpack.c.l.b16 %v5664
    %v5800 = vunpack.c.l.b16 %v5665
    %v5801 = vunpack.c.l.b16 %v5666
    %v5802 = vunpack.c.l.b16 %v5667
    %v5803 = vunpack.c.l.b16 %v5668
    %v5804 = vunpack.c.l.b16 %v5669
    %v5805 = vunpack.c.l.b16 %v5670
    %v5806 = vunpack.c.l.b16 %v5671
    %v5807 = vunpack.c.l.b16 %v5672
    %v5808 = vunpack.c.l.b16 %v5673
    %v5809 = vunpack.c.l.b16 %v5674
    %v5810 = vunpack.c.l.b16 %v5675
    %v5811 = vunpack.c.l.b16 %v5676
    %v5812 = vunpack.c.l.b16 %v5677
    %v5813 = vunpack.c.l.b16 %v5678
    %v5814 = vunpack.c.l.b16 %v5679
    %v5815 = vunpack.c.l.b16 %v5680
    %v5816 = vunpack.c.l.b16 %v5681
    %v5817 = vunpack.c.l.b16 %v5682
    %v5818 = vunpack.c.l.b16 %v5683
    %v5819 = vunpack.c.l.b16 %v5684
    %v5820 = vunpack.c.l.b16 %v5685
    %v5821 = vunpack.c.l.b16 %v5686
    %v5822 = vunpack.c.l.b16 %v5687
    %v5823 = vunpack.c.l.b16 %v5688
    %v5824 = vunpack.c.l.b16 %v5689
    %v5825 = vunpack.c.l.b16 %v5690
    %v5826 = vunpack.c.l.b16 %v5691
    %v5827 = vunpack.c.l.b16 %v5692
    %v5828 = vunpack.c.l.b16 %v5693
    %v5829 = vunpack.c.l.b16 %v5694
    %v5830 = vunpack.c.l.b16 %v5695
    %v5831 = vunpack.c.l.b16 %v5696
    %v5832 = vunpack.c.l.b16 %v5697
    %v5833 = vunpack.c.l.b16 %v5698
    %v5834 = vunpack.c.l.b16 %v5699
    %v5835 = vunpack.c.l.b16 %v5700
    %v5836 = vunpack.c.l.b16 %v5701
    %v5837 = vunpack.c.l.b16 %v5702
    %v5838 = vunpack.c.l.b16 %v5703
    %v5839 = vunpack.c.l.b16 %v5704
    %v5840 = vunpack.c.l.b16 %v5705
    %v5841 = vunpack.c.l.b16 %v5706
    %v5842 = vunpack.c.l.b16 %v5707
    %v5843 = vunpack.c.l.b16 %v5708
    %v5844 = vunpack.c.l.b16 %v5709
    %v5845 = vunpack.c.l.b16 %v5710
    %v5846 = vunpack.c.l.b16 %v5711
    %v5847 = vunpack.c.l.b16 %v5712
    %v5848 = vunpack.c.l.b16 %v5713
    %v5849 = vunpack.c.l.b16 %v5714
    %v5850 = vunpack.c.l.b16 %v5715
    %v5851 = vpack.c.b16 %v5788, %v5787
    %v5852 = vpack.c.b16 %v5790, %v5789
    %v5853 = vpack.c.b16 %v5792, %v5791
    %v5854 = vpack.c.b16 %v5794, %v5793
    %v5855 = vpack.c.b16 %v5796, %v5795
    %v5856 = vpack.c.b16 %v5798, %v5797
    %v5857 = vpack.c.b16 %v5800, %v5799
    %v5858 = vpack.c.b16 %v5802, %v5801
    %v5859 = vpack.c.b16 %v5804, %v5803
    %v5860 = vpack.c.b16 %v5806, %v5805
    %v5861 = vpack.c.b16 %v5808, %v5807
    %v5862 = vpack.c.b16 %v5810, %v5809
    %v5863 = vpack.c.b16 %v5812, %v5811
    %v5864 = vpack.c.b16 %v5814, %v5813
    %v5865 = vpack.c.b16 %v5816, %v5815
    %v5866 = vpack.c.b16 %v5818, %v5817
    %v5867 = vpack.c.b16 %v5820, %v5819
    %v5868 = vpack.c.b16 %v5822, %v5821
    %v5869 = vpack.c.b16 %v5824, %v5823
    %v5870 = vpack.c.b16 %v5826, %v5825
    %v5871 = vpack.c.b16 %v5828, %v5827
    %v5872 = vpack.c.b16 %v5830, %v5829
    %v5873 = vpack.c.b16 %v5832, %v5831
    %v5874 = vpack.c.b16 %v5834, %v5833
    %v5875 = vpack.c.b16 %v5836, %v5835
    %v5876 = vpack.c.b16 %v5838, %v5837
    %v5877 = vpack.c.b16 %v5840, %v5839
    %v5878 = vpack.c.b16 %v5842, %v5841
    %v5879 = vpack.c.b16 %v5844, %v5843
    %v5880 = vpack.c.b16 %v5846, %v5845
    %v5881 = vpack.c.b16 %v5848, %v5847
    %v5882 = vpack.c.b16 %v5850, %v5849
    %5915 = vmatprep.subr.bf16.mxu0 0
    %5916 = vmatpush1.bf16.msra.mxu0 %v5851
    %5917 = vmatprep.subr.bf16.mxu0 0
    %5918 = vmatpush1.bf16.msra.mxu0 %v5852
    %5919 = vmatprep.subr.bf16.mxu0 0
    %5920 = vmatpush1.bf16.msra.mxu0 %v5853
    %5921 = vmatprep.subr.bf16.mxu0 0
    %5922 = vmatpush1.bf16.msra.mxu0 %v5854
    %5923 = vmatprep.subr.bf16.mxu0 0
    %5924 = vmatpush1.bf16.msra.mxu0 %v5855
    %5925 = vmatprep.subr.bf16.mxu0 0
    %5926 = vmatpush1.bf16.msra.mxu0 %v5856
    %5927 = vmatprep.subr.bf16.mxu0 0
    %5928 = vmatpush1.bf16.msra.mxu0 %v5857
    %5929 = vmatprep.subr.bf16.mxu0 0
    %5930 = vmatpush1.bf16.msra.mxu0 %v5858
    %5931 = vmatprep.subr.bf16.mxu0 0
    %5932 = vmatpush1.bf16.msra.mxu0 %v5859
    %5933 = vmatprep.subr.bf16.mxu0 0
    %5934 = vmatpush1.bf16.msra.mxu0 %v5860
    %5935 = vmatprep.subr.bf16.mxu0 0
    %5936 = vmatpush1.bf16.msra.mxu0 %v5861
    %5937 = vmatprep.subr.bf16.mxu0 0
    %5938 = vmatpush1.bf16.msra.mxu0 %v5862
    %5939 = vmatprep.subr.bf16.mxu0 0
    %5940 = vmatpush1.bf16.msra.mxu0 %v5863
    %5941 = vmatprep.subr.bf16.mxu0 0
    %5942 = vmatpush1.bf16.msra.mxu0 %v5864
    %5943 = vmatprep.subr.bf16.mxu0 0
    %5944 = vmatpush1.bf16.msra.mxu0 %v5865
    %5945 = vmatprep.subr.bf16.mxu0 0
    %5946 = vmatpush1.bf16.msra.mxu0 %v5866
    %5947 = vmatprep.mubr.bf16.mxu0 %v5621
    %5948 = vmatmul.mubr.bf16.gmra.mrb[0].mxu0 %v5620
    %v5949 = vpop.f32.mrb[0].mxu0
    %v5950 = vadd.f32 %v5721, %v5949
    %v5951 = vpop.f32.mrb[0].mxu0
    %v5952 = vpop.f32.mrb[0].mxu0
    %v5953 = vadd.f32 %v5721, %v5952
    %v5954 = vpop.f32.mrb[0].mxu0
    %5955 = vmatprep.mubr.bf16.mxu0 %v5625
    %5956 = vmatmul.mubr.bf16.gmra.mrb[0].mxu0 %v5624
    %v5957 = vpop.f32.mrb[0].mxu0
    %v5958 = vadd.f32 %v5721, %v5957
    %v5959 = vpop.f32.mrb[0].mxu0
    %v5960 = vpop.f32.mrb[0].mxu0
    %v5961 = vadd.f32 %v5721, %v5960
    %v5962 = vpop.f32.mrb[0].mxu0
    %5963 = vmatprep.mubr.bf16.mxu0 %v5629
    %5964 = vmatmul.mubr.bf16.gmra.mrb[0].mxu0 %v5628
    %v5965 = vpop.f32.mrb[0].mxu0
    %v5966 = vadd.f32 %v5721, %v5965
    %v5967 = vpop.f32.mrb[0].mxu0
    %v5968 = vpop.f32.mrb[0].mxu0
    %v5969 = vadd.f32 %v5721, %v5968
    %v5970 = vpop.f32.mrb[0].mxu0
    %5971 = vmatprep.mubr.bf16.mxu0 %v5633
    %5972 = vmatmul.mubr.bf16.gmra.mrb[0].mxu0 %v5632
    %v5973 = vpop.f32.mrb[0].mxu0
    %v5974 = vadd.f32 %v5721, %v5973
    %v5975 = vpop.f32.mrb[0].mxu0
    %v5976 = vpop.f32.mrb[0].mxu0
    %v5977 = vadd.f32 %v5721, %v5976
    %v5978 = vpop.f32.mrb[0].mxu0
    %5979 = vmatprep.mubr.bf16.mxu0 %v5637
    %5980 = vmatmul.mubr.bf16.gmra.mrb[0].mxu0 %v5636
    %v5981 = vpop.f32.mrb[0].mxu0
    %v5982 = vadd.f32 %v5721, %v5981
    %v5983 = vpop.f32.mrb[0].mxu0
    %v5984 = vpop.f32.mrb[0].mxu0
    %v5985 = vadd.f32 %v5721, %v5984
    %v5986 = vpop.f32.mrb[0].mxu0
    %5987 = vmatprep.mubr.bf16.mxu0 %v5641
    %5988 = vmatmul.mubr.bf16.gmra.mrb[0].mxu0 %v5640
    %v5989 = vpop.f32.mrb[0].mxu0
    %v5990 = vadd.f32 %v5721, %v5989
    %v5991 = vpop.f32.mrb[0].mxu0
    %v5992 = vpop.f32.mrb[0].mxu0
    %v5993 = vadd.f32 %v5721, %v5992
    %v5994 = vpop.f32.mrb[0].mxu0
    %5995 = vmatprep.mubr.bf16.mxu0 %v5645
    %5996 = vmatmul.mubr.bf16.gmra.mrb[0].mxu0 %v5644
    %v5997 = vpop.f32.mrb[0].mxu0
    %v5998 = vadd.f32 %v5721, %v5997
    %v5999 = vpop.f32.mrb[0].mxu0
    %v6000 = vpop.f32.mrb[0].mxu0
    %v6001 = vadd.f32 %v5721, %v6000
    %v6002 = vpop.f32.mrb[0].mxu0
    %6003 = vmatprep.mubr.bf16.mxu0 %v5649
    %6004 = vmatmul.mubr.bf16.gmra.mrb[0].mxu0 %v5648
    %v6005 = vpop.f32.mrb[0].mxu0
    %v6006 = vadd.f32 %v5721, %v6005
    %v6007 = vpop.f32.mrb[0].mxu0
    %v6008 = vpop.f32.mrb[0].mxu0
    %v6009 = vadd.f32 %v5721, %v6008
    %v6010 = vpop.f32.mrb[0].mxu0
    %6011 = vdwg.mxu0
    %6012 = vmatprep.subr.bf16.mxu0 0
    %6013 = vmatpush1.bf16.msra.mxu0 %v5867
    %6014 = vmatprep.subr.bf16.mxu0 0
    %6015 = vmatpush1.bf16.msra.mxu0 %v5868
    %6016 = vmatprep.subr.bf16.mxu0 0
    %6017 = vmatpush1.bf16.msra.mxu0 %v5869
    %6018 = vmatprep.subr.bf16.mxu0 0
    %6019 = vmatpush1.bf16.msra.mxu0 %v5870
    %6020 = vmatprep.subr.bf16.mxu0 0
    %6021 = vmatpush1.bf16.msra.mxu0 %v5871
    %6022 = vmatprep.subr.bf16.mxu0 0
    %6023 = vmatpush1.bf16.msra.mxu0 %v5872
    %6024 = vmatprep.subr.bf16.mxu0 0
    %6025 = vmatpush1.bf16.msra.mxu0 %v5873
    %6026 = vmatprep.subr.bf16.mxu0 0
    %6027 = vmatpush1.bf16.msra.mxu0 %v5874
    %6028 = vmatprep.subr.bf16.mxu0 0
    %6029 = vmatpush1.bf16.msra.mxu0 %v5875
    %6030 = vmatprep.subr.bf16.mxu0 0
    %6031 = vmatpush1.bf16.msra.mxu0 %v5876
    %6032 = vmatprep.subr.bf16.mxu0 0
    %6033 = vmatpush1.bf16.msra.mxu0 %v5877
    %6034 = vmatprep.subr.bf16.mxu0 0
    %6035 = vmatpush1.bf16.msra.mxu0 %v5878
    %6036 = vmatprep.subr.bf16.mxu0 0
    %6037 = vmatpush1.bf16.msra.mxu0 %v5879
    %6038 = vmatprep.subr.bf16.mxu0 0
    %6039 = vmatpush1.bf16.msra.mxu0 %v5880
    %6040 = vmatprep.subr.bf16.mxu0 0
    %6041 = vmatpush1.bf16.msra.mxu0 %v5881
    %6042 = vmatprep.subr.bf16.mxu0 0
    %6043 = vmatpush1.bf16.msra.mxu0 %v5882
    %6044 = vmatprep.mubr.bf16.mxu0 %v5623
    %6045 = vmatmul.mubr.bf16.gmra.mrb[0].mxu0 %v5622
    %v6046 = vpop.f32.mrb[0].mxu0
    %v6047 = vadd.f32 %v5950, %v6046
    %v6048 = vpop.f32.mrb[0].mxu0
    %v6049 = vpop.f32.mrb[0].mxu0
    %v6050 = vadd.f32 %v5953, %v6049
    %v6051 = vpop.f32.mrb[0].mxu0
    %6052 = vmatprep.mubr.bf16.mxu0 %v5627
    %6053 = vmatmul.mubr.bf16.gmra.mrb[0].mxu0 %v5626
    %v6054 = vpop.f32.mrb[0].mxu0
    %v6055 = vadd.f32 %v5958, %v6054
    %v6056 = vpop.f32.mrb[0].mxu0
    %v6057 = vpop.f32.mrb[0].mxu0
    %v6058 = vadd.f32 %v5961, %v6057
    %v6059 = vpop.f32.mrb[0].mxu0
    %6060 = vmatprep.mubr.bf16.mxu0 %v5631
    %6061 = vmatmul.mubr.bf16.gmra.mrb[0].mxu0 %v5630
    %v6062 = vpop.f32.mrb[0].mxu0
    %v6063 = vadd.f32 %v5966, %v6062
    %v6064 = vpop.f32.mrb[0].mxu0
    %v6065 = vpop.f32.mrb[0].mxu0
    %v6066 = vadd.f32 %v5969, %v6065
    %v6067 = vpop.f32.mrb[0].mxu0
    %6068 = vmatprep.mubr.bf16.mxu0 %v5635
    %6069 = vmatmul.mubr.bf16.gmra.mrb[0].mxu0 %v5634
    %v6070 = vpop.f32.mrb[0].mxu0
    %v6071 = vadd.f32 %v5974, %v6070
    %v6072 = vpop.f32.mrb[0].mxu0
    %v6073 = vpop.f32.mrb[0].mxu0
    %v6074 = vadd.f32 %v5977, %v6073
    %v6075 = vpop.f32.mrb[0].mxu0
    %6076 = vmatprep.mubr.bf16.mxu0 %v5639
    %6077 = vmatmul.mubr.bf16.gmra.mrb[0].mxu0 %v5638
    %v6078 = vpop.f32.mrb[0].mxu0
    %v6079 = vadd.f32 %v5982, %v6078
    %v6080 = vpop.f32.mrb[0].mxu0
    %v6081 = vpop.f32.mrb[0].mxu0
    %v6082 = vadd.f32 %v5985, %v6081
    %v6083 = vpop.f32.mrb[0].mxu0
    %6084 = vmatprep.mubr.bf16.mxu0 %v5643
    %6085 = vmatmul.mubr.bf16.gmra.mrb[0].mxu0 %v5642
    %v6086 = vpop.f32.mrb[0].mxu0
    %v6087 = vadd.f32 %v5990, %v6086
    %v6088 = vpop.f32.mrb[0].mxu0
    %v6089 = vpop.f32.mrb[0].mxu0
    %v6090 = vadd.f32 %v5993, %v6089
    %v6091 = vpop.f32.mrb[0].mxu0
    %6092 = vmatprep.mubr.bf16.mxu0 %v5647
    %6093 = vmatmul.mubr.bf16.gmra.mrb[0].mxu0 %v5646
    %v6094 = vpop.f32.mrb[0].mxu0
    %v6095 = vadd.f32 %v5998, %v6094
    %v6096 = vpop.f32.mrb[0].mxu0
    %v6097 = vpop.f32.mrb[0].mxu0
    %v6098 = vadd.f32 %v6001, %v6097
    %v6099 = vpop.f32.mrb[0].mxu0
    %6100 = vmatprep.mubr.bf16.mxu0 %v5651
    %6101 = vmatmul.mubr.bf16.gmra.mrb[0].mxu0 %v5650
    %v6102 = vpop.f32.mrb[0].mxu0
    %v6103 = vadd.f32 %v6006, %v6102
    %v6104 = vpop.f32.mrb[0].mxu0
    %v6105 = vpop.f32.mrb[0].mxu0
    %v6106 = vadd.f32 %v6009, %v6105
    %v6107 = vpop.f32.mrb[0].mxu0
    %6108 = vdwg.mxu0
    %6109 = vmax.xlane.f32.xlu0 %v6047
    %v6110 = vpop.xlane.xlu0 %6109
    %6111 = vmax.xlane.f32.xlu0 %v6050
    %v6112 = vpop.xlane.xlu0 %6111
    %6113 = vmax.xlane.f32.xlu0 %v6055
    %v6114 = vpop.xlane.xlu0 %6113
    %6115 = vmax.xlane.f32.xlu0 %v6058
    %v6116 = vpop.xlane.xlu0 %6115
    %6117 = vmax.xlane.f32.xlu0 %v6063
    %v6118 = vpop.xlane.xlu0 %6117
    %6119 = vmax.xlane.f32.xlu0 %v6066
    %v6120 = vpop.xlane.xlu0 %6119
    %6121 = vmax.xlane.f32.xlu0 %v6071
    %v6122 = vpop.xlane.xlu0 %6121
    %6123 = vmax.xlane.f32.xlu0 %v6074
    %v6124 = vpop.xlane.xlu0 %6123
    %6125 = vmax.xlane.f32.xlu0 %v6079
    %v6126 = vpop.xlane.xlu0 %6125
    %6127 = vmax.xlane.f32.xlu0 %v6082
    %v6128 = vpop.xlane.xlu0 %6127
    %6129 = vmax.xlane.f32.xlu0 %v6087
    %v6130 = vpop.xlane.xlu0 %6129
    %6131 = vmax.xlane.f32.xlu0 %v6090
    %v6132 = vpop.xlane.xlu0 %6131
    %6133 = vmax.xlane.f32.xlu0 %v6095
    %v6134 = vpop.xlane.xlu0 %6133
    %6135 = vmax.xlane.f32.xlu0 %v6098
    %v6136 = vpop.xlane.xlu0 %6135
    %6137 = vmax.xlane.f32.xlu0 %v6103
    %v6138 = vpop.xlane.xlu0 %6137
    %6139 = vmax.xlane.f32.xlu0 %v6106
    %v6140 = vpop.xlane.xlu0 %6139
    %v6141 = vsub.f32 %v6047, %v6110
    %v6142 = vsub.f32 %v6050, %v6112
    %v6143 = vsub.f32 %v6055, %v6114
    %v6144 = vsub.f32 %v6058, %v6116
    %v6145 = vsub.f32 %v6063, %v6118
    %v6146 = vsub.f32 %v6066, %v6120
    %v6147 = vsub.f32 %v6071, %v6122
    %v6148 = vsub.f32 %v6074, %v6124
    %v6149 = vsub.f32 %v6079, %v6126
    %v6150 = vsub.f32 %v6082, %v6128
    %v6151 = vsub.f32 %v6087, %v6130
    %v6152 = vsub.f32 %v6090, %v6132
    %v6153 = vsub.f32 %v6095, %v6134
    %v6154 = vsub.f32 %v6098, %v6136
    %v6155 = vsub.f32 %v6103, %v6138
    %v6156 = vsub.f32 %v6106, %v6140
    %v6157 = vmul.f32 %v6141, 1.442695
    %v6158 = vpow.pop %v6157
    %v6159 = vmul.f32 %v6142, 1.442695
    %v6160 = vpow.pop %v6159
    %v6161 = vmul.f32 %v6143, 1.442695
    %v6162 = vpow.pop %v6161
    %v6163 = vmul.f32 %v6144, 1.442695
    %v6164 = vpow.pop %v6163
    %v6165 = vmul.f32 %v6145, 1.442695
    %v6166 = vpow.pop %v6165
    %v6167 = vmul.f32 %v6146, 1.442695
    %v6168 = vpow.pop %v6167
    %v6169 = vmul.f32 %v6147, 1.442695
    %v6170 = vpow.pop %v6169
    %v6171 = vmul.f32 %v6148, 1.442695
    %v6172 = vpow.pop %v6171
    %v6173 = vmul.f32 %v6149, 1.442695
    %v6174 = vpow.pop %v6173
    %v6175 = vmul.f32 %v6150, 1.442695
    %v6176 = vpow.pop %v6175
    %v6177 = vmul.f32 %v6151, 1.442695
    %v6178 = vpow.pop %v6177
    %v6179 = vmul.f32 %v6152, 1.442695
    %v6180 = vpow.pop %v6179
    %v6181 = vmul.f32 %v6153, 1.442695
    %v6182 = vpow.pop %v6181
    %v6183 = vmul.f32 %v6154, 1.442695
    %v6184 = vpow.pop %v6183
    %v6185 = vmul.f32 %v6155, 1.442695
    %v6186 = vpow.pop %v6185
    %v6187 = vmul.f32 %v6156, 1.442695
    %v6188 = vpow.pop %v6187
    %6189 = vadd.xlane.f32.xlu0 %v6158
    %v6190 = vpop.xlane.xlu0 %6189
    %6191 = vadd.xlane.f32.xlu0 %v6160
    %v6192 = vpop.xlane.xlu0 %6191
    %6193 = vadd.xlane.f32.xlu0 %v6162
    %v6194 = vpop.xlane.xlu0 %6193
    %6195 = vadd.xlane.f32.xlu0 %v6164
    %v6196 = vpop.xlane.xlu0 %6195
    %6197 = vadd.xlane.f32.xlu0 %v6166
    %v6198 = vpop.xlane.xlu0 %6197
    %6199 = vadd.xlane.f32.xlu0 %v6168
    %v6200 = vpop.xlane.xlu0 %6199
    %6201 = vadd.xlane.f32.xlu0 %v6170
    %v6202 = vpop.xlane.xlu0 %6201
    %6203 = vadd.xlane.f32.xlu0 %v6172
    %v6204 = vpop.xlane.xlu0 %6203
    %6205 = vadd.xlane.f32.xlu0 %v6174
    %v6206 = vpop.xlane.xlu0 %6205
    %6207 = vadd.xlane.f32.xlu0 %v6176
    %v6208 = vpop.xlane.xlu0 %6207
    %6209 = vadd.xlane.f32.xlu0 %v6178
    %v6210 = vpop.xlane.xlu0 %6209
    %6211 = vadd.xlane.f32.xlu0 %v6180
    %v6212 = vpop.xlane.xlu0 %6211
    %6213 = vadd.xlane.f32.xlu0 %v6182
    %v6214 = vpop.xlane.xlu0 %6213
    %6215 = vadd.xlane.f32.xlu0 %v6184
    %v6216 = vpop.xlane.xlu0 %6215
    %6217 = vadd.xlane.f32.xlu0 %v6186
    %v6218 = vpop.xlane.xlu0 %6217
    %6219 = vadd.xlane.f32.xlu0 %v6188
    %v6220 = vpop.xlane.xlu0 %6219
    %v6221 = vlog2.pop %v6190
    %v6222 = vmul.f32 %v6221, 0.6931472
    %v6223 = vlog2.pop %v6192
    %v6224 = vmul.f32 %v6223, 0.6931472
    %v6225 = vlog2.pop %v6194
    %v6226 = vmul.f32 %v6225, 0.6931472
    %v6227 = vlog2.pop %v6196
    %v6228 = vmul.f32 %v6227, 0.6931472
    %v6229 = vlog2.pop %v6198
    %v6230 = vmul.f32 %v6229, 0.6931472
    %v6231 = vlog2.pop %v6200
    %v6232 = vmul.f32 %v6231, 0.6931472
    %v6233 = vlog2.pop %v6202
    %v6234 = vmul.f32 %v6233, 0.6931472
    %v6235 = vlog2.pop %v6204
    %v6236 = vmul.f32 %v6235, 0.6931472
    %v6237 = vlog2.pop %v6206
    %v6238 = vmul.f32 %v6237, 0.6931472
    %v6239 = vlog2.pop %v6208
    %v6240 = vmul.f32 %v6239, 0.6931472
    %v6241 = vlog2.pop %v6210
    %v6242 = vmul.f32 %v6241, 0.6931472
    %v6243 = vlog2.pop %v6212
    %v6244 = vmul.f32 %v6243, 0.6931472
    %v6245 = vlog2.pop %v6214
    %v6246 = vmul.f32 %v6245, 0.6931472
    %v6247 = vlog2.pop %v6216
    %v6248 = vmul.f32 %v6247, 0.6931472
    %v6249 = vlog2.pop %v6218
    %v6250 = vmul.f32 %v6249, 0.6931472
    %v6251 = vlog2.pop %v6220
    %v6252 = vmul.f32 %v6251, 0.6931472
    %v6253 = vsub.f32 %v6141, %v6222
    %v6254 = vsub.f32 %v6142, %v6224
    %v6255 = vsub.f32 %v6143, %v6226
    %v6256 = vsub.f32 %v6144, %v6228
    %v6257 = vsub.f32 %v6145, %v6230
    %v6258 = vsub.f32 %v6146, %v6232
    %v6259 = vsub.f32 %v6147, %v6234
    %v6260 = vsub.f32 %v6148, %v6236
    %v6261 = vsub.f32 %v6149, %v6238
    %v6262 = vsub.f32 %v6150, %v6240
    %v6263 = vsub.f32 %v6151, %v6242
    %v6264 = vsub.f32 %v6152, %v6244
    %v6265 = vsub.f32 %v6153, %v6246
    %v6266 = vsub.f32 %v6154, %v6248
    %v6267 = vsub.f32 %v6155, %v6250
    %v6268 = vsub.f32 %v6156, %v6252
    %6269 = vst [vmem:[%s9] sm:$0xff] %v6253
    %6270 = vst [vmem:[%s9 + $0x8] sm:$0xff] %v6254
    %6271 = vst [vmem:[%s9 + $0x10] sm:$0xff] %v6255
    %6272 = vst [vmem:[%s9 + $0x18] sm:$0xff] %v6256
    %6273 = vst [vmem:[%s9 + $0x20] sm:$0xff] %v6257
    %6274 = vst [vmem:[%s9 + $0x28] sm:$0xff] %v6258
    %6275 = vst [vmem:[%s9 + $0x30] sm:$0xff] %v6259
    %6276 = vst [vmem:[%s9 + $0x38] sm:$0xff] %v6260
    %6277 = vst [vmem:[%s9 + $0x40] sm:$0xff] %v6261
    %6278 = vst [vmem:[%s9 + $0x48] sm:$0xff] %v6262
    %6279 = vst [vmem:[%s9 + $0x50] sm:$0xff] %v6263
    %6280 = vst [vmem:[%s9 + $0x58] sm:$0xff] %v6264
    %6281 = vst [vmem:[%s9 + $0x60] sm:$0xff] %v6265
    %6282 = vst [vmem:[%s9 + $0x68] sm:$0xff] %v6266
    %6283 = vst [vmem:[%s9 + $0x70] sm:$0xff] %v6267
    %6284 = vst [vmem:[%s9 + $0x78] sm:$0xff] %v6268
    // Predicated region
    $region70: #{convnet_forward.1} parent=1 // pred_check
      _
    $region71: #{convnet_forward.1} parent=1 // pred_check_branch
      %6286 = sbr.rel (0) target = $region73
    $region72: #{convnet_forward.1} parent=1 // pred_region
      _
    $region73: #{convnet_forward.1} parent=1 // pred_fallthru
      _
    // Predicated region
    $region74: #{convnet_forward.1} parent=1 // pred_check
      _
    $region75: #{convnet_forward.1} parent=1 // pred_check_branch
      %6288 = sbr.rel (0) target = $region77
    $region76: #{convnet_forward.1} parent=1 // pred_region
      _
    $region77: #{convnet_forward.1} parent=1 // pred_fallthru
      _
    %6289 = vsyncpa [#allocation3], 1
    %6290 = vsyncpa [#allocation5], 1
    %6291 = vsyncpa [#allocation8], 1
    %6292 = vsyncpa [#allocation11], 1
    %6293 = vsyncpa [#allocation14], 1

</llo_original>
